<compile_context>
chip_gen: v7x
topology: tpu7x:2x2x1
jax: 0.10.0
libtpu: 0.0.40
codegen_flags: <defaults>
</compile_context>

<pallas_src>
import functools

import jax
import jax.numpy as jnp
from jax.experimental import pallas as pl
from jax.experimental.pallas import tpu as pltpu


BN_EPS = 1e-5
_LANE = 128
_SUBLANE = 8


def _round_up(x, m):
    return (x + m - 1) // m * m


def _conv_rows(x_ref, w_ref, row0, rows, *, kk_offsets, wp):
    """k*k shifted matmuls for `rows` output rows starting at output row `row0`.

    x_ref: (1, Cin, L_img) bf16 -- one padded image, rows flattened (row stride = wp).
    w_ref: (k*k, Cout_pad, Cin) bf16 -- per-tap weight matrices, tap t = kh*k + kw.
    Returns the f32 "virtual padded-width" conv block of shape (Cout_pad, rows*wp);
    lane j = ho_local*wp + wo_padded, columns with wo_padded < W_out are valid.
    """
    lv = rows * wp
    acc = None
    for t, off in enumerate(kk_offsets):          # static python loop (k*k taps)
        slab = x_ref[0, :, pl.ds(row0 * wp + off, lv)]          # (Cin, lv) bf16
        term = jnp.dot(w_ref[t], slab, preferred_element_type=jnp.float32)
        acc = term if acc is None else acc + term
    return acc                                                   # (Cout_pad, lv) f32


def _conv_stats_kernel(x_ref, w_ref, mask_ref, stats_ref, *, kk_offsets, wp, row_block):
    """Pass 1: per-image masked sum / sum-of-squares of the conv output (per channel)."""
    h_out = mask_ref.shape[1] // wp
    c_pad = stats_ref.shape[1]
    s1 = jnp.zeros((c_pad, 1), jnp.float32)
    s2 = jnp.zeros((c_pad, 1), jnp.float32)
    for row0 in range(0, h_out, row_block):        # static row blocking (bounds vregs)
        rows = min(row_block, h_out - row0)
        v = _conv_rows(x_ref, w_ref, row0, rows, kk_offsets=kk_offsets, wp=wp)
        m = mask_ref[:, pl.ds(row0 * wp, rows * wp)]             # (1, rows*wp) 0/1
        vm = v * m
        s1 = s1 + jnp.sum(vm, axis=1, keepdims=True)
        s2 = s2 + jnp.sum(vm * vm, axis=1, keepdims=True)
    stats_ref[0, :, 0:1] = s1
    stats_ref[0, :, 1:2] = s2


def _conv_apply_kernel(x_ref, w_ref, scale_ref, shift_ref, out_ref, *, kk_offsets, wp, row_block):
    """Pass 2: recompute conv, apply folded BN scale/shift, write NCHW block directly."""
    _, c_out, h_out, w_out = out_ref.shape
    a = scale_ref[...]                              # (Cout_pad, 1) f32
    b = shift_ref[...]                              # (Cout_pad, 1) f32
    for row0 in range(0, h_out, row_block):
        rows = min(row_block, h_out - row0)
        v = _conv_rows(x_ref, w_ref, row0, rows, kk_offsets=kk_offsets, wp=wp)
        y = (v * a + b).astype(out_ref.dtype)       # folded BN: 2 ops / element
        for hh in range(rows):                      # strip pad columns while storing
            out_ref[0, :, row0 + hh, :] = y[:c_out, hh * wp: hh * wp + w_out]


@functools.partial(jax.jit, static_argnames=("k_size", "padding"))
def conv2d_batchnorm(x_nchw, weight, bias, gamma, beta, *, k_size, padding):
    """Forward of conv2DBatchNorm (Conv2d + training-mode BatchNorm2d).

    x_nchw: (N, Cin, H, W) f32, weight: (Cout, Cin, k, k), bias/gamma/beta: (Cout,)
    returns (N, Cout, Hout, Wout) f32
    """
    del bias  # Conv bias cancels exactly under training-mode BN (mean subtraction).

    n, c_in, h, w = x_nchw.shape
    c_out = weight.shape[0]
    k, p = k_size, padding
    hp, wp = h + 2 * p, w + 2 * p
    h_out, w_out = hp - k + 1, wp - k + 1
    lv = h_out * wp
    c_pad = _round_up(c_out, _SUBLANE)
    l_img = _round_up(hp * wp + k - 1, _LANE)        # tail pad so shifted slabs stay in-bounds
    row_block = max(1, min(h_out, 256 // wp))        # ~256 lanes/f32-accumulator block
    kk_offsets = tuple(kh * wp + kw for kh in range(k) for kw in range(k))

    # ---- wrapper prep: pad + flatten input (single cheap XLA pass, no k^2 inflation) ----
    x_pad = jnp.pad(x_nchw, ((0, 0), (0, 0), (p, p), (p, p)))
    x_flat = jnp.pad(x_pad.reshape(n, c_in, hp * wp),
                     ((0, 0), (0, 0), (0, l_img - hp * wp))).astype(jnp.bfloat16)

    # Per-tap weight matrices (tap t = kh*k + kw), Cout padded to a sublane multiple.
    wk = jnp.transpose(weight, (2, 3, 0, 1)).reshape(k * k, c_out, c_in)
    wk = jnp.pad(wk, ((0, 0), (0, c_pad - c_out), (0, 0))).astype(jnp.bfloat16)

    # Validity mask over the padded-width lane axis: lane j valid iff (j % wp) < w_out.
    mask = (jnp.arange(lv, dtype=jnp.int32) % wp < w_out).astype(jnp.float32).reshape(1, lv)

    x_spec = pl.BlockSpec((1, c_in, l_img), lambda i: (i, 0, 0))
    w_spec = pl.BlockSpec((k * k, c_pad, c_in), lambda i: (0, 0, 0))

    # ---- pass 1: conv tiles -> per-image (sum, sumsq) per channel ----
    stats = pl.pallas_call(
        functools.partial(_conv_stats_kernel, kk_offsets=kk_offsets, wp=wp,
                          row_block=row_block),
        out_shape=jax.ShapeDtypeStruct((n, c_pad, 2), jnp.float32),
        grid=(n,),
        in_specs=[x_spec, w_spec, pl.BlockSpec((1, lv), lambda i: (0, 0))],
        out_specs=pl.BlockSpec((1, c_pad, 2), lambda i: (i, 0, 0)),
        compiler_params=pltpu.CompilerParams(dimension_semantics=("parallel",)),
    )(x_flat, wk, mask)

    # ---- tiny per-channel fold in f32 (BatchNorm over N*Hout*Wout, biased variance) ----
    count = jnp.float32(n * h_out * w_out)
    s1 = jnp.sum(stats[:, :c_out, 0], axis=0)
    s2 = jnp.sum(stats[:, :c_out, 1], axis=0)
    mean = s1 / count
    var = jnp.maximum(s2 / count - mean * mean, 0.0)
    scale = gamma.astype(jnp.float32) * jax.lax.rsqrt(var + BN_EPS)
    shift = beta.astype(jnp.float32) - mean * scale
    scale_col = jnp.pad(scale, (0, c_pad - c_out)).reshape(c_pad, 1)
    shift_col = jnp.pad(shift, (0, c_pad - c_out)).reshape(c_pad, 1)

    # ---- pass 2: recompute conv, apply folded scale/shift, emit NCHW directly ----
    out = pl.pallas_call(
        functools.partial(_conv_apply_kernel, kk_offsets=kk_offsets, wp=wp,
                          row_block=row_block),
        out_shape=jax.ShapeDtypeStruct((n, c_out, h_out, w_out), x_nchw.dtype),
        grid=(n,),
        in_specs=[x_spec, w_spec,
                  pl.BlockSpec((c_pad, 1), lambda i: (0, 0)),
                  pl.BlockSpec((c_pad, 1), lambda i: (0, 0))],
        out_specs=pl.BlockSpec((1, c_out, h_out, w_out), lambda i: (i, 0, 0, 0)),
        compiler_params=pltpu.CompilerParams(dimension_semantics=("parallel",)),
    )(x_flat, wk, scale_col, shift_col)
    return out


def _reference(x, weight, bias, gamma, beta, padding):
    """Pure-JAX reference: conv2d (with bias) + training-mode BatchNorm2d."""
    conv = jax.lax.conv_general_dilated(
        x, weight, window_strides=(1, 1),
        padding=[(padding, padding), (padding, padding)],
        dimension_numbers=("NCHW", "OIHW", "NCHW"),
    ) + bias.reshape(1, -1, 1, 1)
    mean = jnp.mean(conv, axis=(0, 2, 3), keepdims=True)
    var = jnp.mean((conv - mean) ** 2, axis=(0, 2, 3), keepdims=True)
    norm = (conv - mean) * jax.lax.rsqrt(var + BN_EPS)
    return gamma.reshape(1, -1, 1, 1) * norm + beta.reshape(1, -1, 1, 1)


if __name__ == "__main__":
    # conv2DBatchNorm(in_channels=4, k_size=3, n_filters=8, padding=1)
    N, C_IN, H, W = 2, 4, 16, 16
    K_SIZE, C_OUT, PAD = 3, 8, 1

    key = jax.random.PRNGKey(0)
    kx, kw, kb, kg, kbe = jax.random.split(key, 5)

    x = jax.random.normal(kx, (N, C_IN, H, W), dtype=jnp.float32)
    weight = jax.random.normal(kw, (C_OUT, C_IN, K_SIZE, K_SIZE), dtype=jnp.float32) * 0.1
    bias = jax.random.normal(kb, (C_OUT,), dtype=jnp.float32) * 0.1
    gamma = 1.0 + 0.1 * jax.random.normal(kg, (C_OUT,), dtype=jnp.float32)
    beta = 0.1 * jax.random.normal(kbe, (C_OUT,), dtype=jnp.float32)

    out = conv2d_batchnorm(x, weight, bias, gamma, beta, k_size=K_SIZE, padding=PAD)
    out = jax.block_until_ready(out)

    ref = _reference(x, weight, bias, gamma, beta, PAD)
    assert out.shape == (N, C_OUT, H, W), out.shape
    # bf16 matmul inputs (f32 accumulation, f32 BN stats/epilogue) -> loosened tolerance.
    err = float(jnp.max(jnp.abs(out - ref)))
    assert err < 5e-2, err

    print("KERNEL_OK")
</pallas_src>

<mosaic_0001>
module attributes {stable_mosaic.version = 11 : i64} {
  func.func @_conv_stats_kernel(%arg0: i32, %arg1: memref<1x4x384xbf16, #tpu.memory_space<vmem>>, %arg2: memref<9x8x4xbf16, #tpu.memory_space<vmem>>, %arg3: memref<1x288xf32, #tpu.memory_space<vmem>>, %arg4: memref<1x8x2xf32, #tpu.memory_space<vmem>>) attributes {dimension_semantics = [#tpu.dimension_semantics<parallel>], iteration_bounds = array<i64: 2>, scalar_prefetch = 0 : i64, scratch_operands = 0 : i64, tpu.core_type = #tpu.core_type<tc>, window_params = [{transform_indices = @transform_0, window_bounds = array<i64: 1, 4, 384>}, {pipeline_mode = #tpu.pipeline_mode<synchronous>, transform_indices = @transform_1, window_bounds = array<i64: 9, 8, 4>}, {pipeline_mode = #tpu.pipeline_mode<synchronous>, transform_indices = @transform_2, window_bounds = array<i64: 1, 288>}, {transform_indices = @transform_3, window_bounds = array<i64: 1, 8, 2>}]} {
    %cst = arith.constant 0.000000e+00 : f32
    %0 = vector.broadcast %cst : f32 to vector<8x1xf32>
    %cst_0 = arith.constant 0.000000e+00 : f32
    %1 = vector.broadcast %cst_0 : f32 to vector<8x1xf32>
    %c0 = arith.constant 0 : index
    %c0_1 = arith.constant 0 : index
    %c0_2 = arith.constant 0 : index
    %2 = vector.load %arg1[%c0, %c0_1, %c0_2] : memref<1x4x384xbf16, #tpu.memory_space<vmem>>, vector<1x4x252xbf16>
    %3 = vector.shape_cast %2 : vector<1x4x252xbf16> to vector<4x252xbf16>
    %c0_3 = arith.constant 0 : index
    %c0_4 = arith.constant 0 : index
    %c0_5 = arith.constant 0 : index
    %4 = vector.load %arg2[%c0_3, %c0_4, %c0_5] : memref<9x8x4xbf16, #tpu.memory_space<vmem>>, vector<1x8x4xbf16>
    %5 = vector.shape_cast %4 : vector<1x8x4xbf16> to vector<8x4xbf16>
    %cst_6 = arith.constant dense<0.000000e+00> : vector<8x252xf32>
    %6 = tpu.matmul %5, %3, %cst_6 {dimension_numbers = #tpu.dot_dimension_numbers<[1], [0], [0], [1], [0, 0, 1, 1], [], []>} : vector<8x4xbf16>, vector<4x252xbf16>, vector<8x252xf32> -> vector<8x252xf32>
    %c0_7 = arith.constant 0 : index
    %c0_8 = arith.constant 0 : index
    %c1 = arith.constant 1 : index
    %7 = vector.load %arg1[%c0_7, %c0_8, %c1] : memref<1x4x384xbf16, #tpu.memory_space<vmem>>, vector<1x4x252xbf16>
    %8 = vector.shape_cast %7 : vector<1x4x252xbf16> to vector<4x252xbf16>
    %c1_9 = arith.constant 1 : index
    %c0_10 = arith.constant 0 : index
    %c0_11 = arith.constant 0 : index
    %9 = vector.load %arg2[%c1_9, %c0_10, %c0_11] : memref<9x8x4xbf16, #tpu.memory_space<vmem>>, vector<1x8x4xbf16>
    %10 = vector.shape_cast %9 : vector<1x8x4xbf16> to vector<8x4xbf16>
    %cst_12 = arith.constant dense<0.000000e+00> : vector<8x252xf32>
    %11 = tpu.matmul %10, %8, %cst_12 {dimension_numbers = #tpu.dot_dimension_numbers<[1], [0], [0], [1], [0, 0, 1, 1], [], []>} : vector<8x4xbf16>, vector<4x252xbf16>, vector<8x252xf32> -> vector<8x252xf32>
    %12 = arith.addf %6, %11 : vector<8x252xf32>
    %c0_13 = arith.constant 0 : index
    %c0_14 = arith.constant 0 : index
    %c2 = arith.constant 2 : index
    %13 = vector.load %arg1[%c0_13, %c0_14, %c2] : memref<1x4x384xbf16, #tpu.memory_space<vmem>>, vector<1x4x252xbf16>
    %14 = vector.shape_cast %13 : vector<1x4x252xbf16> to vector<4x252xbf16>
    %c2_15 = arith.constant 2 : index
    %c0_16 = arith.constant 0 : index
    %c0_17 = arith.constant 0 : index
    %15 = vector.load %arg2[%c2_15, %c0_16, %c0_17] : memref<9x8x4xbf16, #tpu.memory_space<vmem>>, vector<1x8x4xbf16>
    %16 = vector.shape_cast %15 : vector<1x8x4xbf16> to vector<8x4xbf16>
    %cst_18 = arith.constant dense<0.000000e+00> : vector<8x252xf32>
    %17 = tpu.matmul %16, %14, %cst_18 {dimension_numbers = #tpu.dot_dimension_numbers<[1], [0], [0], [1], [0, 0, 1, 1], [], []>} : vector<8x4xbf16>, vector<4x252xbf16>, vector<8x252xf32> -> vector<8x252xf32>
    %18 = arith.addf %12, %17 : vector<8x252xf32>
    %c0_19 = arith.constant 0 : index
    %c0_20 = arith.constant 0 : index
    %c18 = arith.constant 18 : index
    %19 = vector.load %arg1[%c0_19, %c0_20, %c18] : memref<1x4x384xbf16, #tpu.memory_space<vmem>>, vector<1x4x252xbf16>
    %20 = vector.shape_cast %19 : vector<1x4x252xbf16> to vector<4x252xbf16>
    %c3 = arith.constant 3 : index
    %c0_21 = arith.constant 0 : index
    %c0_22 = arith.constant 0 : index
    %21 = vector.load %arg2[%c3, %c0_21, %c0_22] : memref<9x8x4xbf16, #tpu.memory_space<vmem>>, vector<1x8x4xbf16>
    %22 = vector.shape_cast %21 : vector<1x8x4xbf16> to vector<8x4xbf16>
    %cst_23 = arith.constant dense<0.000000e+00> : vector<8x252xf32>
    %23 = tpu.matmul %22, %20, %cst_23 {dimension_numbers = #tpu.dot_dimension_numbers<[1], [0], [0], [1], [0, 0, 1, 1], [], []>} : vector<8x4xbf16>, vector<4x252xbf16>, vector<8x252xf32> -> vector<8x252xf32>
    %24 = arith.addf %18, %23 : vector<8x252xf32>
    %c0_24 = arith.constant 0 : index
    %c0_25 = arith.constant 0 : index
    %c19 = arith.constant 19 : index
    %25 = vector.load %arg1[%c0_24, %c0_25, %c19] : memref<1x4x384xbf16, #tpu.memory_space<vmem>>, vector<1x4x252xbf16>
    %26 = vector.shape_cast %25 : vector<1x4x252xbf16> to vector<4x252xbf16>
    %c4 = arith.constant 4 : index
    %c0_26 = arith.constant 0 : index
    %c0_27 = arith.constant 0 : index
    %27 = vector.load %arg2[%c4, %c0_26, %c0_27] : memref<9x8x4xbf16, #tpu.memory_space<vmem>>, vector<1x8x4xbf16>
    %28 = vector.shape_cast %27 : vector<1x8x4xbf16> to vector<8x4xbf16>
    %cst_28 = arith.constant dense<0.000000e+00> : vector<8x252xf32>
    %29 = tpu.matmul %28, %26, %cst_28 {dimension_numbers = #tpu.dot_dimension_numbers<[1], [0], [0], [1], [0, 0, 1, 1], [], []>} : vector<8x4xbf16>, vector<4x252xbf16>, vector<8x252xf32> -> vector<8x252xf32>
    %30 = arith.addf %24, %29 : vector<8x252xf32>
    %c0_29 = arith.constant 0 : index
    %c0_30 = arith.constant 0 : index
    %c20 = arith.constant 20 : index
    %31 = vector.load %arg1[%c0_29, %c0_30, %c20] : memref<1x4x384xbf16, #tpu.memory_space<vmem>>, vector<1x4x252xbf16>
    %32 = vector.shape_cast %31 : vector<1x4x252xbf16> to vector<4x252xbf16>
    %c5 = arith.constant 5 : index
    %c0_31 = arith.constant 0 : index
    %c0_32 = arith.constant 0 : index
    %33 = vector.load %arg2[%c5, %c0_31, %c0_32] : memref<9x8x4xbf16, #tpu.memory_space<vmem>>, vector<1x8x4xbf16>
    %34 = vector.shape_cast %33 : vector<1x8x4xbf16> to vector<8x4xbf16>
    %cst_33 = arith.constant dense<0.000000e+00> : vector<8x252xf32>
    %35 = tpu.matmul %34, %32, %cst_33 {dimension_numbers = #tpu.dot_dimension_numbers<[1], [0], [0], [1], [0, 0, 1, 1], [], []>} : vector<8x4xbf16>, vector<4x252xbf16>, vector<8x252xf32> -> vector<8x252xf32>
    %36 = arith.addf %30, %35 : vector<8x252xf32>
    %c0_34 = arith.constant 0 : index
    %c0_35 = arith.constant 0 : index
    %c36 = arith.constant 36 : index
    %37 = vector.load %arg1[%c0_34, %c0_35, %c36] : memref<1x4x384xbf16, #tpu.memory_space<vmem>>, vector<1x4x252xbf16>
    %38 = vector.shape_cast %37 : vector<1x4x252xbf16> to vector<4x252xbf16>
    %c6 = arith.constant 6 : index
    %c0_36 = arith.constant 0 : index
    %c0_37 = arith.constant 0 : index
    %39 = vector.load %arg2[%c6, %c0_36, %c0_37] : memref<9x8x4xbf16, #tpu.memory_space<vmem>>, vector<1x8x4xbf16>
    %40 = vector.shape_cast %39 : vector<1x8x4xbf16> to vector<8x4xbf16>
    %cst_38 = arith.constant dense<0.000000e+00> : vector<8x252xf32>
    %41 = tpu.matmul %40, %38, %cst_38 {dimension_numbers = #tpu.dot_dimension_numbers<[1], [0], [0], [1], [0, 0, 1, 1], [], []>} : vector<8x4xbf16>, vector<4x252xbf16>, vector<8x252xf32> -> vector<8x252xf32>
    %42 = arith.addf %36, %41 : vector<8x252xf32>
    %c0_39 = arith.constant 0 : index
    %c0_40 = arith.constant 0 : index
    %c37 = arith.constant 37 : index
    %43 = vector.load %arg1[%c0_39, %c0_40, %c37] : memref<1x4x384xbf16, #tpu.memory_space<vmem>>, vector<1x4x252xbf16>
    %44 = vector.shape_cast %43 : vector<1x4x252xbf16> to vector<4x252xbf16>
    %c7 = arith.constant 7 : index
    %c0_41 = arith.constant 0 : index
    %c0_42 = arith.constant 0 : index
    %45 = vector.load %arg2[%c7, %c0_41, %c0_42] : memref<9x8x4xbf16, #tpu.memory_space<vmem>>, vector<1x8x4xbf16>
    %46 = vector.shape_cast %45 : vector<1x8x4xbf16> to vector<8x4xbf16>
    %cst_43 = arith.constant dense<0.000000e+00> : vector<8x252xf32>
    %47 = tpu.matmul %46, %44, %cst_43 {dimension_numbers = #tpu.dot_dimension_numbers<[1], [0], [0], [1], [0, 0, 1, 1], [], []>} : vector<8x4xbf16>, vector<4x252xbf16>, vector<8x252xf32> -> vector<8x252xf32>
    %48 = arith.addf %42, %47 : vector<8x252xf32>
    %c0_44 = arith.constant 0 : index
    %c0_45 = arith.constant 0 : index
    %c38 = arith.constant 38 : index
    %49 = vector.load %arg1[%c0_44, %c0_45, %c38] : memref<1x4x384xbf16, #tpu.memory_space<vmem>>, vector<1x4x252xbf16>
    %50 = vector.shape_cast %49 : vector<1x4x252xbf16> to vector<4x252xbf16>
    %c8 = arith.constant 8 : index
    %c0_46 = arith.constant 0 : index
    %c0_47 = arith.constant 0 : index
    %51 = vector.load %arg2[%c8, %c0_46, %c0_47] : memref<9x8x4xbf16, #tpu.memory_space<vmem>>, vector<1x8x4xbf16>
    %52 = vector.shape_cast %51 : vector<1x8x4xbf16> to vector<8x4xbf16>
    %cst_48 = arith.constant dense<0.000000e+00> : vector<8x252xf32>
    %53 = tpu.matmul %52, %50, %cst_48 {dimension_numbers = #tpu.dot_dimension_numbers<[1], [0], [0], [1], [0, 0, 1, 1], [], []>} : vector<8x4xbf16>, vector<4x252xbf16>, vector<8x252xf32> -> vector<8x252xf32>
    %54 = arith.addf %48, %53 : vector<8x252xf32>
    %c0_49 = arith.constant 0 : index
    %c0_50 = arith.constant 0 : index
    %55 = vector.load %arg3[%c0_49, %c0_50] : memref<1x288xf32, #tpu.memory_space<vmem>>, vector<1x252xf32>
    %56 = vector.broadcast %55 : vector<1x252xf32> to vector<8x252xf32>
    %57 = arith.mulf %54, %56 : vector<8x252xf32>
    %cst_51 = arith.constant dense<0.000000e+00> : vector<8xf32>
    %58 = vector.multi_reduction <add>, %57, %cst_51 [1] : vector<8x252xf32> to vector<8xf32>
    %59 = vector.shape_cast %58 : vector<8xf32> to vector<8x1xf32>
    %60 = arith.addf %0, %59 : vector<8x1xf32>
    %61 = arith.mulf %57, %57 : vector<8x252xf32>
    %cst_52 = arith.constant dense<0.000000e+00> : vector<8xf32>
    %62 = vector.multi_reduction <add>, %61, %cst_52 [1] : vector<8x252xf32> to vector<8xf32>
    %63 = vector.shape_cast %62 : vector<8xf32> to vector<8x1xf32>
    %64 = arith.addf %1, %63 : vector<8x1xf32>
    %c0_53 = arith.constant 0 : index
    %c0_54 = arith.constant 0 : index
    %c252 = arith.constant 252 : index
    %65 = vector.load %arg1[%c0_53, %c0_54, %c252] : memref<1x4x384xbf16, #tpu.memory_space<vmem>>, vector<1x4x36xbf16>
    %66 = vector.shape_cast %65 : vector<1x4x36xbf16> to vector<4x36xbf16>
    %c0_55 = arith.constant 0 : index
    %c0_56 = arith.constant 0 : index
    %c0_57 = arith.constant 0 : index
    %67 = vector.load %arg2[%c0_55, %c0_56, %c0_57] : memref<9x8x4xbf16, #tpu.memory_space<vmem>>, vector<1x8x4xbf16>
    %68 = vector.shape_cast %67 : vector<1x8x4xbf16> to vector<8x4xbf16>
    %cst_58 = arith.constant dense<0.000000e+00> : vector<8x36xf32>
    %69 = tpu.matmul %68, %66, %cst_58 {dimension_numbers = #tpu.dot_dimension_numbers<[1], [0], [0], [1], [0, 0, 1, 1], [], []>} : vector<8x4xbf16>, vector<4x36xbf16>, vector<8x36xf32> -> vector<8x36xf32>
    %c0_59 = arith.constant 0 : index
    %c0_60 = arith.constant 0 : index
    %c253 = arith.constant 253 : index
    %70 = vector.load %arg1[%c0_59, %c0_60, %c253] : memref<1x4x384xbf16, #tpu.memory_space<vmem>>, vector<1x4x36xbf16>
    %71 = vector.shape_cast %70 : vector<1x4x36xbf16> to vector<4x36xbf16>
    %c1_61 = arith.constant 1 : index
    %c0_62 = arith.constant 0 : index
    %c0_63 = arith.constant 0 : index
    %72 = vector.load %arg2[%c1_61, %c0_62, %c0_63] : memref<9x8x4xbf16, #tpu.memory_space<vmem>>, vector<1x8x4xbf16>
    %73 = vector.shape_cast %72 : vector<1x8x4xbf16> to vector<8x4xbf16>
    %cst_64 = arith.constant dense<0.000000e+00> : vector<8x36xf32>
    %74 = tpu.matmul %73, %71, %cst_64 {dimension_numbers = #tpu.dot_dimension_numbers<[1], [0], [0], [1], [0, 0, 1, 1], [], []>} : vector<8x4xbf16>, vector<4x36xbf16>, vector<8x36xf32> -> vector<8x36xf32>
    %75 = arith.addf %69, %74 : vector<8x36xf32>
    %c0_65 = arith.constant 0 : index
    %c0_66 = arith.constant 0 : index
    %c254 = arith.constant 254 : index
    %76 = vector.load %arg1[%c0_65, %c0_66, %c254] : memref<1x4x384xbf16, #tpu.memory_space<vmem>>, vector<1x4x36xbf16>
    %77 = vector.shape_cast %76 : vector<1x4x36xbf16> to vector<4x36xbf16>
    %c2_67 = arith.constant 2 : index
    %c0_68 = arith.constant 0 : index
    %c0_69 = arith.constant 0 : index
    %78 = vector.load %arg2[%c2_67, %c0_68, %c0_69] : memref<9x8x4xbf16, #tpu.memory_space<vmem>>, vector<1x8x4xbf16>
    %79 = vector.shape_cast %78 : vector<1x8x4xbf16> to vector<8x4xbf16>
    %cst_70 = arith.constant dense<0.000000e+00> : vector<8x36xf32>
    %80 = tpu.matmul %79, %77, %cst_70 {dimension_numbers = #tpu.dot_dimension_numbers<[1], [0], [0], [1], [0, 0, 1, 1], [], []>} : vector<8x4xbf16>, vector<4x36xbf16>, vector<8x36xf32> -> vector<8x36xf32>
    %81 = arith.addf %75, %80 : vector<8x36xf32>
    %c0_71 = arith.constant 0 : index
    %c0_72 = arith.constant 0 : index
    %c270 = arith.constant 270 : index
    %82 = vector.load %arg1[%c0_71, %c0_72, %c270] : memref<1x4x384xbf16, #tpu.memory_space<vmem>>, vector<1x4x36xbf16>
    %83 = vector.shape_cast %82 : vector<1x4x36xbf16> to vector<4x36xbf16>
    %c3_73 = arith.constant 3 : index
    %c0_74 = arith.constant 0 : index
    %c0_75 = arith.constant 0 : index
    %84 = vector.load %arg2[%c3_73, %c0_74, %c0_75] : memref<9x8x4xbf16, #tpu.memory_space<vmem>>, vector<1x8x4xbf16>
    %85 = vector.shape_cast %84 : vector<1x8x4xbf16> to vector<8x4xbf16>
    %cst_76 = arith.constant dense<0.000000e+00> : vector<8x36xf32>
    %86 = tpu.matmul %85, %83, %cst_76 {dimension_numbers = #tpu.dot_dimension_numbers<[1], [0], [0], [1], [0, 0, 1, 1], [], []>} : vector<8x4xbf16>, vector<4x36xbf16>, vector<8x36xf32> -> vector<8x36xf32>
    %87 = arith.addf %81, %86 : vector<8x36xf32>
    %c0_77 = arith.constant 0 : index
    %c0_78 = arith.constant 0 : index
    %c271 = arith.constant 271 : index
    %88 = vector.load %arg1[%c0_77, %c0_78, %c271] : memref<1x4x384xbf16, #tpu.memory_space<vmem>>, vector<1x4x36xbf16>
    %89 = vector.shape_cast %88 : vector<1x4x36xbf16> to vector<4x36xbf16>
    %c4_79 = arith.constant 4 : index
    %c0_80 = arith.constant 0 : index
    %c0_81 = arith.constant 0 : index
    %90 = vector.load %arg2[%c4_79, %c0_80, %c0_81] : memref<9x8x4xbf16, #tpu.memory_space<vmem>>, vector<1x8x4xbf16>
    %91 = vector.shape_cast %90 : vector<1x8x4xbf16> to vector<8x4xbf16>
    %cst_82 = arith.constant dense<0.000000e+00> : vector<8x36xf32>
    %92 = tpu.matmul %91, %89, %cst_82 {dimension_numbers = #tpu.dot_dimension_numbers<[1], [0], [0], [1], [0, 0, 1, 1], [], []>} : vector<8x4xbf16>, vector<4x36xbf16>, vector<8x36xf32> -> vector<8x36xf32>
    %93 = arith.addf %87, %92 : vector<8x36xf32>
    %c0_83 = arith.constant 0 : index
    %c0_84 = arith.constant 0 : index
    %c272 = arith.constant 272 : index
    %94 = vector.load %arg1[%c0_83, %c0_84, %c272] : memref<1x4x384xbf16, #tpu.memory_space<vmem>>, vector<1x4x36xbf16>
    %95 = vector.shape_cast %94 : vector<1x4x36xbf16> to vector<4x36xbf16>
    %c5_85 = arith.constant 5 : index
    %c0_86 = arith.constant 0 : index
    %c0_87 = arith.constant 0 : index
    %96 = vector.load %arg2[%c5_85, %c0_86, %c0_87] : memref<9x8x4xbf16, #tpu.memory_space<vmem>>, vector<1x8x4xbf16>
    %97 = vector.shape_cast %96 : vector<1x8x4xbf16> to vector<8x4xbf16>
    %cst_88 = arith.constant dense<0.000000e+00> : vector<8x36xf32>
    %98 = tpu.matmul %97, %95, %cst_88 {dimension_numbers = #tpu.dot_dimension_numbers<[1], [0], [0], [1], [0, 0, 1, 1], [], []>} : vector<8x4xbf16>, vector<4x36xbf16>, vector<8x36xf32> -> vector<8x36xf32>
    %99 = arith.addf %93, %98 : vector<8x36xf32>
    %c0_89 = arith.constant 0 : index
    %c0_90 = arith.constant 0 : index
    %c288 = arith.constant 288 : index
    %100 = vector.load %arg1[%c0_89, %c0_90, %c288] : memref<1x4x384xbf16, #tpu.memory_space<vmem>>, vector<1x4x36xbf16>
    %101 = vector.shape_cast %100 : vector<1x4x36xbf16> to vector<4x36xbf16>
    %c6_91 = arith.constant 6 : index
    %c0_92 = arith.constant 0 : index
    %c0_93 = arith.constant 0 : index
    %102 = vector.load %arg2[%c6_91, %c0_92, %c0_93] : memref<9x8x4xbf16, #tpu.memory_space<vmem>>, vector<1x8x4xbf16>
    %103 = vector.shape_cast %102 : vector<1x8x4xbf16> to vector<8x4xbf16>
    %cst_94 = arith.constant dense<0.000000e+00> : vector<8x36xf32>
    %104 = tpu.matmul %103, %101, %cst_94 {dimension_numbers = #tpu.dot_dimension_numbers<[1], [0], [0], [1], [0, 0, 1, 1], [], []>} : vector<8x4xbf16>, vector<4x36xbf16>, vector<8x36xf32> -> vector<8x36xf32>
    %105 = arith.addf %99, %104 : vector<8x36xf32>
    %c0_95 = arith.constant 0 : index
    %c0_96 = arith.constant 0 : index
    %c289 = arith.constant 289 : index
    %106 = vector.load %arg1[%c0_95, %c0_96, %c289] : memref<1x4x384xbf16, #tpu.memory_space<vmem>>, vector<1x4x36xbf16>
    %107 = vector.shape_cast %106 : vector<1x4x36xbf16> to vector<4x36xbf16>
    %c7_97 = arith.constant 7 : index
    %c0_98 = arith.constant 0 : index
    %c0_99 = arith.constant 0 : index
    %108 = vector.load %arg2[%c7_97, %c0_98, %c0_99] : memref<9x8x4xbf16, #tpu.memory_space<vmem>>, vector<1x8x4xbf16>
    %109 = vector.shape_cast %108 : vector<1x8x4xbf16> to vector<8x4xbf16>
    %cst_100 = arith.constant dense<0.000000e+00> : vector<8x36xf32>
    %110 = tpu.matmul %109, %107, %cst_100 {dimension_numbers = #tpu.dot_dimension_numbers<[1], [0], [0], [1], [0, 0, 1, 1], [], []>} : vector<8x4xbf16>, vector<4x36xbf16>, vector<8x36xf32> -> vector<8x36xf32>
    %111 = arith.addf %105, %110 : vector<8x36xf32>
    %c0_101 = arith.constant 0 : index
    %c0_102 = arith.constant 0 : index
    %c290 = arith.constant 290 : index
    %112 = vector.load %arg1[%c0_101, %c0_102, %c290] : memref<1x4x384xbf16, #tpu.memory_space<vmem>>, vector<1x4x36xbf16>
    %113 = vector.shape_cast %112 : vector<1x4x36xbf16> to vector<4x36xbf16>
    %c8_103 = arith.constant 8 : index
    %c0_104 = arith.constant 0 : index
    %c0_105 = arith.constant 0 : index
    %114 = vector.load %arg2[%c8_103, %c0_104, %c0_105] : memref<9x8x4xbf16, #tpu.memory_space<vmem>>, vector<1x8x4xbf16>
    %115 = vector.shape_cast %114 : vector<1x8x4xbf16> to vector<8x4xbf16>
    %cst_106 = arith.constant dense<0.000000e+00> : vector<8x36xf32>
    %116 = tpu.matmul %115, %113, %cst_106 {dimension_numbers = #tpu.dot_dimension_numbers<[1], [0], [0], [1], [0, 0, 1, 1], [], []>} : vector<8x4xbf16>, vector<4x36xbf16>, vector<8x36xf32> -> vector<8x36xf32>
    %117 = arith.addf %111, %116 : vector<8x36xf32>
    %c0_107 = arith.constant 0 : index
    %c252_108 = arith.constant 252 : index
    %118 = vector.load %arg3[%c0_107, %c252_108] : memref<1x288xf32, #tpu.memory_space<vmem>>, vector<1x36xf32>
    %119 = vector.broadcast %118 : vector<1x36xf32> to vector<8x36xf32>
    %120 = arith.mulf %117, %119 : vector<8x36xf32>
    %cst_109 = arith.constant dense<0.000000e+00> : vector<8xf32>
    %121 = vector.multi_reduction <add>, %120, %cst_109 [1] : vector<8x36xf32> to vector<8xf32>
    %122 = vector.shape_cast %121 : vector<8xf32> to vector<8x1xf32>
    %123 = arith.addf %60, %122 : vector<8x1xf32>
    %124 = arith.mulf %120, %120 : vector<8x36xf32>
    %cst_110 = arith.constant dense<0.000000e+00> : vector<8xf32>
    %125 = vector.multi_reduction <add>, %124, %cst_110 [1] : vector<8x36xf32> to vector<8xf32>
    %126 = vector.shape_cast %125 : vector<8xf32> to vector<8x1xf32>
    %127 = arith.addf %64, %126 : vector<8x1xf32>
    %c0_111 = arith.constant 0 : index
    %c0_112 = arith.constant 0 : index
    %c0_113 = arith.constant 0 : index
    %128 = vector.load %arg4[%c0_111, %c0_112, %c0_113] : memref<1x8x2xf32, #tpu.memory_space<vmem>>, vector<1x8x1xf32>
    %129 = vector.shape_cast %128 : vector<1x8x1xf32> to vector<8x1xf32>
    %130 = vector.shape_cast %123 : vector<8x1xf32> to vector<1x8x1xf32>
    tpu.vector_store %arg4[%c0_111, %c0_112, %c0_113], %130 {strides = array<i32>} : memref<1x8x2xf32, #tpu.memory_space<vmem>>, vector<1x8x1xf32>,
    %c0_114 = arith.constant 0 : index
    %c0_115 = arith.constant 0 : index
    %c1_116 = arith.constant 1 : index
    %131 = vector.load %arg4[%c0_114, %c0_115, %c1_116] : memref<1x8x2xf32, #tpu.memory_space<vmem>>, vector<1x8x1xf32>
    %132 = vector.shape_cast %131 : vector<1x8x1xf32> to vector<8x1xf32>
    %133 = vector.shape_cast %127 : vector<8x1xf32> to vector<1x8x1xf32>
    tpu.vector_store %arg4[%c0_114, %c0_115, %c1_116], %133 {strides = array<i32>} : memref<1x8x2xf32, #tpu.memory_space<vmem>>, vector<1x8x1xf32>,
    return
  }
  func.func @transform_0(%arg0: i32) -> (i32, i32, i32) {
    %c0_i32 = arith.constant 0 : i32
    %c0_i32_0 = arith.constant 0 : i32
    %c0_i32_1 = arith.constant 0 : i32
    return %arg0, %c0_i32, %c0_i32_0 : i32, i32, i32
  }
  func.func @transform_1(%arg0: i32) -> (i32, i32, i32) {
    %c0_i32 = arith.constant 0 : i32
    %c0_i32_0 = arith.constant 0 : i32
    %c0_i32_1 = arith.constant 0 : i32
    %c0_i32_2 = arith.constant 0 : i32
    return %c0_i32, %c0_i32_0, %c0_i32_1 : i32, i32, i32
  }
  func.func @transform_2(%arg0: i32) -> (i32, i32) {
    %c0_i32 = arith.constant 0 : i32
    %c0_i32_0 = arith.constant 0 : i32
    %c0_i32_1 = arith.constant 0 : i32
    return %c0_i32, %c0_i32_0 : i32, i32
  }
  func.func @transform_3(%arg0: i32) -> (i32, i32, i32) {
    %c0_i32 = arith.constant 0 : i32
    %c0_i32_0 = arith.constant 0 : i32
    %c0_i32_1 = arith.constant 0 : i32
    return %arg0, %c0_i32, %c0_i32_0 : i32, i32, i32
  }
}

module attributes {stable_mosaic.version = 11 : i64} {
  func.func @_conv_apply_kernel(%arg0: i32, %arg1: memref<1x4x384xbf16, #tpu.memory_space<vmem>>, %arg2: memref<9x8x4xbf16, #tpu.memory_space<vmem>>, %arg3: memref<8x1xf32, #tpu.memory_space<vmem>>, %arg4: memref<8x1xf32, #tpu.memory_space<vmem>>, %arg5: memref<1x8x16x16xf32, #tpu.memory_space<vmem>>) attributes {dimension_semantics = [#tpu.dimension_semantics<parallel>], iteration_bounds = array<i64: 2>, scalar_prefetch = 0 : i64, scratch_operands = 0 : i64, tpu.core_type = #tpu.core_type<tc>, window_params = [{transform_indices = @transform_0, window_bounds = array<i64: 1, 4, 384>}, {pipeline_mode = #tpu.pipeline_mode<synchronous>, transform_indices = @transform_1, window_bounds = array<i64: 9, 8, 4>}, {pipeline_mode = #tpu.pipeline_mode<synchronous>, transform_indices = @transform_2, window_bounds = array<i64: 8, 1>}, {pipeline_mode = #tpu.pipeline_mode<synchronous>, transform_indices = @transform_3, window_bounds = array<i64: 8, 1>}, {transform_indices = @transform_4, window_bounds = array<i64: 1, 8, 16, 16>}]} {
    %c0 = arith.constant 0 : index
    %c0_0 = arith.constant 0 : index
    %0 = vector.load %arg3[%c0, %c0_0] : memref<8x1xf32, #tpu.memory_space<vmem>>, vector<8x1xf32>
    %c0_1 = arith.constant 0 : index
    %c0_2 = arith.constant 0 : index
    %1 = vector.load %arg4[%c0_1, %c0_2] : memref<8x1xf32, #tpu.memory_space<vmem>>, vector<8x1xf32>
    %c0_3 = arith.constant 0 : index
    %c0_4 = arith.constant 0 : index
    %c0_5 = arith.constant 0 : index
    %2 = vector.load %arg1[%c0_3, %c0_4, %c0_5] : memref<1x4x384xbf16, #tpu.memory_space<vmem>>, vector<1x4x252xbf16>
    %3 = vector.shape_cast %2 : vector<1x4x252xbf16> to vector<4x252xbf16>
    %c0_6 = arith.constant 0 : index
    %c0_7 = arith.constant 0 : index
    %c0_8 = arith.constant 0 : index
    %4 = vector.load %arg2[%c0_6, %c0_7, %c0_8] : memref<9x8x4xbf16, #tpu.memory_space<vmem>>, vector<1x8x4xbf16>
    %5 = vector.shape_cast %4 : vector<1x8x4xbf16> to vector<8x4xbf16>
    %cst = arith.constant dense<0.000000e+00> : vector<8x252xf32>
    %6 = tpu.matmul %5, %3, %cst {dimension_numbers = #tpu.dot_dimension_numbers<[1], [0], [0], [1], [0, 0, 1, 1], [], []>} : vector<8x4xbf16>, vector<4x252xbf16>, vector<8x252xf32> -> vector<8x252xf32>
    %c0_9 = arith.constant 0 : index
    %c0_10 = arith.constant 0 : index
    %c1 = arith.constant 1 : index
    %7 = vector.load %arg1[%c0_9, %c0_10, %c1] : memref<1x4x384xbf16, #tpu.memory_space<vmem>>, vector<1x4x252xbf16>
    %8 = vector.shape_cast %7 : vector<1x4x252xbf16> to vector<4x252xbf16>
    %c1_11 = arith.constant 1 : index
    %c0_12 = arith.constant 0 : index
    %c0_13 = arith.constant 0 : index
    %9 = vector.load %arg2[%c1_11, %c0_12, %c0_13] : memref<9x8x4xbf16, #tpu.memory_space<vmem>>, vector<1x8x4xbf16>
    %10 = vector.shape_cast %9 : vector<1x8x4xbf16> to vector<8x4xbf16>
    %cst_14 = arith.constant dense<0.000000e+00> : vector<8x252xf32>
    %11 = tpu.matmul %10, %8, %cst_14 {dimension_numbers = #tpu.dot_dimension_numbers<[1], [0], [0], [1], [0, 0, 1, 1], [], []>} : vector<8x4xbf16>, vector<4x252xbf16>, vector<8x252xf32> -> vector<8x252xf32>
    %12 = arith.addf %6, %11 : vector<8x252xf32>
    %c0_15 = arith.constant 0 : index
    %c0_16 = arith.constant 0 : index
    %c2 = arith.constant 2 : index
    %13 = vector.load %arg1[%c0_15, %c0_16, %c2] : memref<1x4x384xbf16, #tpu.memory_space<vmem>>, vector<1x4x252xbf16>
    %14 = vector.shape_cast %13 : vector<1x4x252xbf16> to vector<4x252xbf16>
    %c2_17 = arith.constant 2 : index
    %c0_18 = arith.constant 0 : index
    %c0_19 = arith.constant 0 : index
    %15 = vector.load %arg2[%c2_17, %c0_18, %c0_19] : memref<9x8x4xbf16, #tpu.memory_space<vmem>>, vector<1x8x4xbf16>
    %16 = vector.shape_cast %15 : vector<1x8x4xbf16> to vector<8x4xbf16>
    %cst_20 = arith.constant dense<0.000000e+00> : vector<8x252xf32>
    %17 = tpu.matmul %16, %14, %cst_20 {dimension_numbers = #tpu.dot_dimension_numbers<[1], [0], [0], [1], [0, 0, 1, 1], [], []>} : vector<8x4xbf16>, vector<4x252xbf16>, vector<8x252xf32> -> vector<8x252xf32>
    %18 = arith.addf %12, %17 : vector<8x252xf32>
    %c0_21 = arith.constant 0 : index
    %c0_22 = arith.constant 0 : index
    %c18 = arith.constant 18 : index
    %19 = vector.load %arg1[%c0_21, %c0_22, %c18] : memref<1x4x384xbf16, #tpu.memory_space<vmem>>, vector<1x4x252xbf16>
    %20 = vector.shape_cast %19 : vector<1x4x252xbf16> to vector<4x252xbf16>
    %c3 = arith.constant 3 : index
    %c0_23 = arith.constant 0 : index
    %c0_24 = arith.constant 0 : index
    %21 = vector.load %arg2[%c3, %c0_23, %c0_24] : memref<9x8x4xbf16, #tpu.memory_space<vmem>>, vector<1x8x4xbf16>
    %22 = vector.shape_cast %21 : vector<1x8x4xbf16> to vector<8x4xbf16>
    %cst_25 = arith.constant dense<0.000000e+00> : vector<8x252xf32>
    %23 = tpu.matmul %22, %20, %cst_25 {dimension_numbers = #tpu.dot_dimension_numbers<[1], [0], [0], [1], [0, 0, 1, 1], [], []>} : vector<8x4xbf16>, vector<4x252xbf16>, vector<8x252xf32> -> vector<8x252xf32>
    %24 = arith.addf %18, %23 : vector<8x252xf32>
    %c0_26 = arith.constant 0 : index
    %c0_27 = arith.constant 0 : index
    %c19 = arith.constant 19 : index
    %25 = vector.load %arg1[%c0_26, %c0_27, %c19] : memref<1x4x384xbf16, #tpu.memory_space<vmem>>, vector<1x4x252xbf16>
    %26 = vector.shape_cast %25 : vector<1x4x252xbf16> to vector<4x252xbf16>
    %c4 = arith.constant 4 : index
    %c0_28 = arith.constant 0 : index
    %c0_29 = arith.constant 0 : index
    %27 = vector.load %arg2[%c4, %c0_28, %c0_29] : memref<9x8x4xbf16, #tpu.memory_space<vmem>>, vector<1x8x4xbf16>
    %28 = vector.shape_cast %27 : vector<1x8x4xbf16> to vector<8x4xbf16>
    %cst_30 = arith.constant dense<0.000000e+00> : vector<8x252xf32>
    %29 = tpu.matmul %28, %26, %cst_30 {dimension_numbers = #tpu.dot_dimension_numbers<[1], [0], [0], [1], [0, 0, 1, 1], [], []>} : vector<8x4xbf16>, vector<4x252xbf16>, vector<8x252xf32> -> vector<8x252xf32>
    %30 = arith.addf %24, %29 : vector<8x252xf32>
    %c0_31 = arith.constant 0 : index
    %c0_32 = arith.constant 0 : index
    %c20 = arith.constant 20 : index
    %31 = vector.load %arg1[%c0_31, %c0_32, %c20] : memref<1x4x384xbf16, #tpu.memory_space<vmem>>, vector<1x4x252xbf16>
    %32 = vector.shape_cast %31 : vector<1x4x252xbf16> to vector<4x252xbf16>
    %c5 = arith.constant 5 : index
    %c0_33 = arith.constant 0 : index
    %c0_34 = arith.constant 0 : index
    %33 = vector.load %arg2[%c5, %c0_33, %c0_34] : memref<9x8x4xbf16, #tpu.memory_space<vmem>>, vector<1x8x4xbf16>
    %34 = vector.shape_cast %33 : vector<1x8x4xbf16> to vector<8x4xbf16>
    %cst_35 = arith.constant dense<0.000000e+00> : vector<8x252xf32>
    %35 = tpu.matmul %34, %32, %cst_35 {dimension_numbers = #tpu.dot_dimension_numbers<[1], [0], [0], [1], [0, 0, 1, 1], [], []>} : vector<8x4xbf16>, vector<4x252xbf16>, vector<8x252xf32> -> vector<8x252xf32>
    %36 = arith.addf %30, %35 : vector<8x252xf32>
    %c0_36 = arith.constant 0 : index
    %c0_37 = arith.constant 0 : index
    %c36 = arith.constant 36 : index
    %37 = vector.load %arg1[%c0_36, %c0_37, %c36] : memref<1x4x384xbf16, #tpu.memory_space<vmem>>, vector<1x4x252xbf16>
    %38 = vector.shape_cast %37 : vector<1x4x252xbf16> to vector<4x252xbf16>
    %c6 = arith.constant 6 : index
    %c0_38 = arith.constant 0 : index
    %c0_39 = arith.constant 0 : index
    %39 = vector.load %arg2[%c6, %c0_38, %c0_39] : memref<9x8x4xbf16, #tpu.memory_space<vmem>>, vector<1x8x4xbf16>
    %40 = vector.shape_cast %39 : vector<1x8x4xbf16> to vector<8x4xbf16>
    %cst_40 = arith.constant dense<0.000000e+00> : vector<8x252xf32>
    %41 = tpu.matmul %40, %38, %cst_40 {dimension_numbers = #tpu.dot_dimension_numbers<[1], [0], [0], [1], [0, 0, 1, 1], [], []>} : vector<8x4xbf16>, vector<4x252xbf16>, vector<8x252xf32> -> vector<8x252xf32>
    %42 = arith.addf %36, %41 : vector<8x252xf32>
    %c0_41 = arith.constant 0 : index
    %c0_42 = arith.constant 0 : index
    %c37 = arith.constant 37 : index
    %43 = vector.load %arg1[%c0_41, %c0_42, %c37] : memref<1x4x384xbf16, #tpu.memory_space<vmem>>, vector<1x4x252xbf16>
    %44 = vector.shape_cast %43 : vector<1x4x252xbf16> to vector<4x252xbf16>
    %c7 = arith.constant 7 : index
    %c0_43 = arith.constant 0 : index
    %c0_44 = arith.constant 0 : index
    %45 = vector.load %arg2[%c7, %c0_43, %c0_44] : memref<9x8x4xbf16, #tpu.memory_space<vmem>>, vector<1x8x4xbf16>
    %46 = vector.shape_cast %45 : vector<1x8x4xbf16> to vector<8x4xbf16>
    %cst_45 = arith.constant dense<0.000000e+00> : vector<8x252xf32>
    %47 = tpu.matmul %46, %44, %cst_45 {dimension_numbers = #tpu.dot_dimension_numbers<[1], [0], [0], [1], [0, 0, 1, 1], [], []>} : vector<8x4xbf16>, vector<4x252xbf16>, vector<8x252xf32> -> vector<8x252xf32>
    %48 = arith.addf %42, %47 : vector<8x252xf32>
    %c0_46 = arith.constant 0 : index
    %c0_47 = arith.constant 0 : index
    %c38 = arith.constant 38 : index
    %49 = vector.load %arg1[%c0_46, %c0_47, %c38] : memref<1x4x384xbf16, #tpu.memory_space<vmem>>, vector<1x4x252xbf16>
    %50 = vector.shape_cast %49 : vector<1x4x252xbf16> to vector<4x252xbf16>
    %c8 = arith.constant 8 : index
    %c0_48 = arith.constant 0 : index
    %c0_49 = arith.constant 0 : index
    %51 = vector.load %arg2[%c8, %c0_48, %c0_49] : memref<9x8x4xbf16, #tpu.memory_space<vmem>>, vector<1x8x4xbf16>
    %52 = vector.shape_cast %51 : vector<1x8x4xbf16> to vector<8x4xbf16>
    %cst_50 = arith.constant dense<0.000000e+00> : vector<8x252xf32>
    %53 = tpu.matmul %52, %50, %cst_50 {dimension_numbers = #tpu.dot_dimension_numbers<[1], [0], [0], [1], [0, 0, 1, 1], [], []>} : vector<8x4xbf16>, vector<4x252xbf16>, vector<8x252xf32> -> vector<8x252xf32>
    %54 = arith.addf %48, %53 : vector<8x252xf32>
    %55 = vector.broadcast %0 : vector<8x1xf32> to vector<8x252xf32>
    %56 = arith.mulf %54, %55 : vector<8x252xf32>
    %57 = vector.broadcast %1 : vector<8x1xf32> to vector<8x252xf32>
    %58 = arith.addf %56, %57 : vector<8x252xf32>
    %59 = vector.extract_strided_slice %58 {offsets = [0, 0], sizes = [8, 16], strides = [1, 1]} : vector<8x252xf32> to vector<8x16xf32>
    %c0_51 = arith.constant 0 : index
    %c0_52 = arith.constant 0 : index
    %c0_53 = arith.constant 0 : index
    %c0_54 = arith.constant 0 : index
    %60 = vector.load %arg5[%c0_51, %c0_52, %c0_53, %c0_54] : memref<1x8x16x16xf32, #tpu.memory_space<vmem>>, vector<1x8x1x16xf32>
    %61 = vector.shape_cast %60 : vector<1x8x1x16xf32> to vector<8x16xf32>
    %62 = vector.shape_cast %59 : vector<8x16xf32> to vector<1x8x1x16xf32>
    tpu.vector_store %arg5[%c0_51, %c0_52, %c0_53, %c0_54], %62 {strides = array<i32>} : memref<1x8x16x16xf32, #tpu.memory_space<vmem>>, vector<1x8x1x16xf32>,
    %63 = vector.extract_strided_slice %58 {offsets = [0, 18], sizes = [8, 16], strides = [1, 1]} : vector<8x252xf32> to vector<8x16xf32>
    %c0_55 = arith.constant 0 : index
    %c0_56 = arith.constant 0 : index
    %c1_57 = arith.constant 1 : index
    %c0_58 = arith.constant 0 : index
    %64 = vector.load %arg5[%c0_55, %c0_56, %c1_57, %c0_58] : memref<1x8x16x16xf32, #tpu.memory_space<vmem>>, vector<1x8x1x16xf32>
    %65 = vector.shape_cast %64 : vector<1x8x1x16xf32> to vector<8x16xf32>
    %66 = vector.shape_cast %63 : vector<8x16xf32> to vector<1x8x1x16xf32>
    tpu.vector_store %arg5[%c0_55, %c0_56, %c1_57, %c0_58], %66 {strides = array<i32>} : memref<1x8x16x16xf32, #tpu.memory_space<vmem>>, vector<1x8x1x16xf32>,
    %67 = vector.extract_strided_slice %58 {offsets = [0, 36], sizes = [8, 16], strides = [1, 1]} : vector<8x252xf32> to vector<8x16xf32>
    %c0_59 = arith.constant 0 : index
    %c0_60 = arith.constant 0 : index
    %c2_61 = arith.constant 2 : index
    %c0_62 = arith.constant 0 : index
    %68 = vector.load %arg5[%c0_59, %c0_60, %c2_61, %c0_62] : memref<1x8x16x16xf32, #tpu.memory_space<vmem>>, vector<1x8x1x16xf32>
    %69 = vector.shape_cast %68 : vector<1x8x1x16xf32> to vector<8x16xf32>
    %70 = vector.shape_cast %67 : vector<8x16xf32> to vector<1x8x1x16xf32>
    tpu.vector_store %arg5[%c0_59, %c0_60, %c2_61, %c0_62], %70 {strides = array<i32>} : memref<1x8x16x16xf32, #tpu.memory_space<vmem>>, vector<1x8x1x16xf32>,
    %71 = vector.extract_strided_slice %58 {offsets = [0, 54], sizes = [8, 16], strides = [1, 1]} : vector<8x252xf32> to vector<8x16xf32>
    %c0_63 = arith.constant 0 : index
    %c0_64 = arith.constant 0 : index
    %c3_65 = arith.constant 3 : index
    %c0_66 = arith.constant 0 : index
    %72 = vector.load %arg5[%c0_63, %c0_64, %c3_65, %c0_66] : memref<1x8x16x16xf32, #tpu.memory_space<vmem>>, vector<1x8x1x16xf32>
    %73 = vector.shape_cast %72 : vector<1x8x1x16xf32> to vector<8x16xf32>
    %74 = vector.shape_cast %71 : vector<8x16xf32> to vector<1x8x1x16xf32>
    tpu.vector_store %arg5[%c0_63, %c0_64, %c3_65, %c0_66], %74 {strides = array<i32>} : memref<1x8x16x16xf32, #tpu.memory_space<vmem>>, vector<1x8x1x16xf32>,
    %75 = vector.extract_strided_slice %58 {offsets = [0, 72], sizes = [8, 16], strides = [1, 1]} : vector<8x252xf32> to vector<8x16xf32>
    %c0_67 = arith.constant 0 : index
    %c0_68 = arith.constant 0 : index
    %c4_69 = arith.constant 4 : index
    %c0_70 = arith.constant 0 : index
    %76 = vector.load %arg5[%c0_67, %c0_68, %c4_69, %c0_70] : memref<1x8x16x16xf32, #tpu.memory_space<vmem>>, vector<1x8x1x16xf32>
    %77 = vector.shape_cast %76 : vector<1x8x1x16xf32> to vector<8x16xf32>
    %78 = vector.shape_cast %75 : vector<8x16xf32> to vector<1x8x1x16xf32>
    tpu.vector_store %arg5[%c0_67, %c0_68, %c4_69, %c0_70], %78 {strides = array<i32>} : memref<1x8x16x16xf32, #tpu.memory_space<vmem>>, vector<1x8x1x16xf32>,
    %79 = vector.extract_strided_slice %58 {offsets = [0, 90], sizes = [8, 16], strides = [1, 1]} : vector<8x252xf32> to vector<8x16xf32>
    %c0_71 = arith.constant 0 : index
    %c0_72 = arith.constant 0 : index
    %c5_73 = arith.constant 5 : index
    %c0_74 = arith.constant 0 : index
    %80 = vector.load %arg5[%c0_71, %c0_72, %c5_73, %c0_74] : memref<1x8x16x16xf32, #tpu.memory_space<vmem>>, vector<1x8x1x16xf32>
    %81 = vector.shape_cast %80 : vector<1x8x1x16xf32> to vector<8x16xf32>
    %82 = vector.shape_cast %79 : vector<8x16xf32> to vector<1x8x1x16xf32>
    tpu.vector_store %arg5[%c0_71, %c0_72, %c5_73, %c0_74], %82 {strides = array<i32>} : memref<1x8x16x16xf32, #tpu.memory_space<vmem>>, vector<1x8x1x16xf32>,
    %83 = vector.extract_strided_slice %58 {offsets = [0, 108], sizes = [8, 16], strides = [1, 1]} : vector<8x252xf32> to vector<8x16xf32>
    %c0_75 = arith.constant 0 : index
    %c0_76 = arith.constant 0 : index
    %c6_77 = arith.constant 6 : index
    %c0_78 = arith.constant 0 : index
    %84 = vector.load %arg5[%c0_75, %c0_76, %c6_77, %c0_78] : memref<1x8x16x16xf32, #tpu.memory_space<vmem>>, vector<1x8x1x16xf32>
    %85 = vector.shape_cast %84 : vector<1x8x1x16xf32> to vector<8x16xf32>
    %86 = vector.shape_cast %83 : vector<8x16xf32> to vector<1x8x1x16xf32>
    tpu.vector_store %arg5[%c0_75, %c0_76, %c6_77, %c0_78], %86 {strides = array<i32>} : memref<1x8x16x16xf32, #tpu.memory_space<vmem>>, vector<1x8x1x16xf32>,
    %87 = vector.extract_strided_slice %58 {offsets = [0, 126], sizes = [8, 16], strides = [1, 1]} : vector<8x252xf32> to vector<8x16xf32>
    %c0_79 = arith.constant 0 : index
    %c0_80 = arith.constant 0 : index
    %c7_81 = arith.constant 7 : index
    %c0_82 = arith.constant 0 : index
    %88 = vector.load %arg5[%c0_79, %c0_80, %c7_81, %c0_82] : memref<1x8x16x16xf32, #tpu.memory_space<vmem>>, vector<1x8x1x16xf32>
    %89 = vector.shape_cast %88 : vector<1x8x1x16xf32> to vector<8x16xf32>
    %90 = vector.shape_cast %87 : vector<8x16xf32> to vector<1x8x1x16xf32>
    tpu.vector_store %arg5[%c0_79, %c0_80, %c7_81, %c0_82], %90 {strides = array<i32>} : memref<1x8x16x16xf32, #tpu.memory_space<vmem>>, vector<1x8x1x16xf32>,
    %91 = vector.extract_strided_slice %58 {offsets = [0, 144], sizes = [8, 16], strides = [1, 1]} : vector<8x252xf32> to vector<8x16xf32>
    %c0_83 = arith.constant 0 : index
    %c0_84 = arith.constant 0 : index
    %c8_85 = arith.constant 8 : index
    %c0_86 = arith.constant 0 : index
    %92 = vector.load %arg5[%c0_83, %c0_84, %c8_85, %c0_86] : memref<1x8x16x16xf32, #tpu.memory_space<vmem>>, vector<1x8x1x16xf32>
    %93 = vector.shape_cast %92 : vector<1x8x1x16xf32> to vector<8x16xf32>
    %94 = vector.shape_cast %91 : vector<8x16xf32> to vector<1x8x1x16xf32>
    tpu.vector_store %arg5[%c0_83, %c0_84, %c8_85, %c0_86], %94 {strides = array<i32>} : memref<1x8x16x16xf32, #tpu.memory_space<vmem>>, vector<1x8x1x16xf32>,
    %95 = vector.extract_strided_slice %58 {offsets = [0, 162], sizes = [8, 16], strides = [1, 1]} : vector<8x252xf32> to vector<8x16xf32>
    %c0_87 = arith.constant 0 : index
    %c0_88 = arith.constant 0 : index
    %c9 = arith.constant 9 : index
    %c0_89 = arith.constant 0 : index
    %96 = vector.load %arg5[%c0_87, %c0_88, %c9, %c0_89] : memref<1x8x16x16xf32, #tpu.memory_space<vmem>>, vector<1x8x1x16xf32>
    %97 = vector.shape_cast %96 : vector<1x8x1x16xf32> to vector<8x16xf32>
    %98 = vector.shape_cast %95 : vector<8x16xf32> to vector<1x8x1x16xf32>
    tpu.vector_store %arg5[%c0_87, %c0_88, %c9, %c0_89], %98 {strides = array<i32>} : memref<1x8x16x16xf32, #tpu.memory_space<vmem>>, vector<1x8x1x16xf32>,
    %99 = vector.extract_strided_slice %58 {offsets = [0, 180], sizes = [8, 16], strides = [1, 1]} : vector<8x252xf32> to vector<8x16xf32>
    %c0_90 = arith.constant 0 : index
    %c0_91 = arith.constant 0 : index
    %c10 = arith.constant 10 : index
    %c0_92 = arith.constant 0 : index
    %100 = vector.load %arg5[%c0_90, %c0_91, %c10, %c0_92] : memref<1x8x16x16xf32, #tpu.memory_space<vmem>>, vector<1x8x1x16xf32>
    %101 = vector.shape_cast %100 : vector<1x8x1x16xf32> to vector<8x16xf32>
    %102 = vector.shape_cast %99 : vector<8x16xf32> to vector<1x8x1x16xf32>
    tpu.vector_store %arg5[%c0_90, %c0_91, %c10, %c0_92], %102 {strides = array<i32>} : memref<1x8x16x16xf32, #tpu.memory_space<vmem>>, vector<1x8x1x16xf32>,
    %103 = vector.extract_strided_slice %58 {offsets = [0, 198], sizes = [8, 16], strides = [1, 1]} : vector<8x252xf32> to vector<8x16xf32>
    %c0_93 = arith.constant 0 : index
    %c0_94 = arith.constant 0 : index
    %c11 = arith.constant 11 : index
    %c0_95 = arith.constant 0 : index
    %104 = vector.load %arg5[%c0_93, %c0_94, %c11, %c0_95] : memref<1x8x16x16xf32, #tpu.memory_space<vmem>>, vector<1x8x1x16xf32>
    %105 = vector.shape_cast %104 : vector<1x8x1x16xf32> to vector<8x16xf32>
    %106 = vector.shape_cast %103 : vector<8x16xf32> to vector<1x8x1x16xf32>
    tpu.vector_store %arg5[%c0_93, %c0_94, %c11, %c0_95], %106 {strides = array<i32>} : memref<1x8x16x16xf32, #tpu.memory_space<vmem>>, vector<1x8x1x16xf32>,
    %107 = vector.extract_strided_slice %58 {offsets = [0, 216], sizes = [8, 16], strides = [1, 1]} : vector<8x252xf32> to vector<8x16xf32>
    %c0_96 = arith.constant 0 : index
    %c0_97 = arith.constant 0 : index
    %c12 = arith.constant 12 : index
    %c0_98 = arith.constant 0 : index
    %108 = vector.load %arg5[%c0_96, %c0_97, %c12, %c0_98] : memref<1x8x16x16xf32, #tpu.memory_space<vmem>>, vector<1x8x1x16xf32>
    %109 = vector.shape_cast %108 : vector<1x8x1x16xf32> to vector<8x16xf32>
    %110 = vector.shape_cast %107 : vector<8x16xf32> to vector<1x8x1x16xf32>
    tpu.vector_store %arg5[%c0_96, %c0_97, %c12, %c0_98], %110 {strides = array<i32>} : memref<1x8x16x16xf32, #tpu.memory_space<vmem>>, vector<1x8x1x16xf32>,
    %111 = vector.extract_strided_slice %58 {offsets = [0, 234], sizes = [8, 16], strides = [1, 1]} : vector<8x252xf32> to vector<8x16xf32>
    %c0_99 = arith.constant 0 : index
    %c0_100 = arith.constant 0 : index
    %c13 = arith.constant 13 : index
    %c0_101 = arith.constant 0 : index
    %112 = vector.load %arg5[%c0_99, %c0_100, %c13, %c0_101] : memref<1x8x16x16xf32, #tpu.memory_space<vmem>>, vector<1x8x1x16xf32>
    %113 = vector.shape_cast %112 : vector<1x8x1x16xf32> to vector<8x16xf32>
    %114 = vector.shape_cast %111 : vector<8x16xf32> to vector<1x8x1x16xf32>
    tpu.vector_store %arg5[%c0_99, %c0_100, %c13, %c0_101], %114 {strides = array<i32>} : memref<1x8x16x16xf32, #tpu.memory_space<vmem>>, vector<1x8x1x16xf32>,
    %c0_102 = arith.constant 0 : index
    %c0_103 = arith.constant 0 : index
    %c252 = arith.constant 252 : index
    %115 = vector.load %arg1[%c0_102, %c0_103, %c252] : memref<1x4x384xbf16, #tpu.memory_space<vmem>>, vector<1x4x36xbf16>
    %116 = vector.shape_cast %115 : vector<1x4x36xbf16> to vector<4x36xbf16>
    %c0_104 = arith.constant 0 : index
    %c0_105 = arith.constant 0 : index
    %c0_106 = arith.constant 0 : index
    %117 = vector.load %arg2[%c0_104, %c0_105, %c0_106] : memref<9x8x4xbf16, #tpu.memory_space<vmem>>, vector<1x8x4xbf16>
    %118 = vector.shape_cast %117 : vector<1x8x4xbf16> to vector<8x4xbf16>
    %cst_107 = arith.constant dense<0.000000e+00> : vector<8x36xf32>
    %119 = tpu.matmul %118, %116, %cst_107 {dimension_numbers = #tpu.dot_dimension_numbers<[1], [0], [0], [1], [0, 0, 1, 1], [], []>} : vector<8x4xbf16>, vector<4x36xbf16>, vector<8x36xf32> -> vector<8x36xf32>
    %c0_108 = arith.constant 0 : index
    %c0_109 = arith.constant 0 : index
    %c253 = arith.constant 253 : index
    %120 = vector.load %arg1[%c0_108, %c0_109, %c253] : memref<1x4x384xbf16, #tpu.memory_space<vmem>>, vector<1x4x36xbf16>
    %121 = vector.shape_cast %120 : vector<1x4x36xbf16> to vector<4x36xbf16>
    %c1_110 = arith.constant 1 : index
    %c0_111 = arith.constant 0 : index
    %c0_112 = arith.constant 0 : index
    %122 = vector.load %arg2[%c1_110, %c0_111, %c0_112] : memref<9x8x4xbf16, #tpu.memory_space<vmem>>, vector<1x8x4xbf16>
    %123 = vector.shape_cast %122 : vector<1x8x4xbf16> to vector<8x4xbf16>
    %cst_113 = arith.constant dense<0.000000e+00> : vector<8x36xf32>
    %124 = tpu.matmul %123, %121, %cst_113 {dimension_numbers = #tpu.dot_dimension_numbers<[1], [0], [0], [1], [0, 0, 1, 1], [], []>} : vector<8x4xbf16>, vector<4x36xbf16>, vector<8x36xf32> -> vector<8x36xf32>
    %125 = arith.addf %119, %124 : vector<8x36xf32>
    %c0_114 = arith.constant 0 : index
    %c0_115 = arith.constant 0 : index
    %c254 = arith.constant 254 : index
    %126 = vector.load %arg1[%c0_114, %c0_115, %c254] : memref<1x4x384xbf16, #tpu.memory_space<vmem>>, vector<1x4x36xbf16>
    %127 = vector.shape_cast %126 : vector<1x4x36xbf16> to vector<4x36xbf16>
    %c2_116 = arith.constant 2 : index
    %c0_117 = arith.constant 0 : index
    %c0_118 = arith.constant 0 : index
    %128 = vector.load %arg2[%c2_116, %c0_117, %c0_118] : memref<9x8x4xbf16, #tpu.memory_space<vmem>>, vector<1x8x4xbf16>
    %129 = vector.shape_cast %128 : vector<1x8x4xbf16> to vector<8x4xbf16>
    %cst_119 = arith.constant dense<0.000000e+00> : vector<8x36xf32>
    %130 = tpu.matmul %129, %127, %cst_119 {dimension_numbers = #tpu.dot_dimension_numbers<[1], [0], [0], [1], [0, 0, 1, 1], [], []>} : vector<8x4xbf16>, vector<4x36xbf16>, vector<8x36xf32> -> vector<8x36xf32>
    %131 = arith.addf %125, %130 : vector<8x36xf32>
    %c0_120 = arith.constant 0 : index
    %c0_121 = arith.constant 0 : index
    %c270 = arith.constant 270 : index
    %132 = vector.load %arg1[%c0_120, %c0_121, %c270] : memref<1x4x384xbf16, #tpu.memory_space<vmem>>, vector<1x4x36xbf16>
    %133 = vector.shape_cast %132 : vector<1x4x36xbf16> to vector<4x36xbf16>
    %c3_122 = arith.constant 3 : index
    %c0_123 = arith.constant 0 : index
    %c0_124 = arith.constant 0 : index
    %134 = vector.load %arg2[%c3_122, %c0_123, %c0_124] : memref<9x8x4xbf16, #tpu.memory_space<vmem>>, vector<1x8x4xbf16>
    %135 = vector.shape_cast %134 : vector<1x8x4xbf16> to vector<8x4xbf16>
    %cst_125 = arith.constant dense<0.000000e+00> : vector<8x36xf32>
    %136 = tpu.matmul %135, %133, %cst_125 {dimension_numbers = #tpu.dot_dimension_numbers<[1], [0], [0], [1], [0, 0, 1, 1], [], []>} : vector<8x4xbf16>, vector<4x36xbf16>, vector<8x36xf32> -> vector<8x36xf32>
    %137 = arith.addf %131, %136 : vector<8x36xf32>
    %c0_126 = arith.constant 0 : index
    %c0_127 = arith.constant 0 : index
    %c271 = arith.constant 271 : index
    %138 = vector.load %arg1[%c0_126, %c0_127, %c271] : memref<1x4x384xbf16, #tpu.memory_space<vmem>>, vector<1x4x36xbf16>
    %139 = vector.shape_cast %138 : vector<1x4x36xbf16> to vector<4x36xbf16>
    %c4_128 = arith.constant 4 : index
    %c0_129 = arith.constant 0 : index
    %c0_130 = arith.constant 0 : index
    %140 = vector.load %arg2[%c4_128, %c0_129, %c0_130] : memref<9x8x4xbf16, #tpu.memory_space<vmem>>, vector<1x8x4xbf16>
    %141 = vector.shape_cast %140 : vector<1x8x4xbf16> to vector<8x4xbf16>
    %cst_131 = arith.constant dense<0.000000e+00> : vector<8x36xf32>
    %142 = tpu.matmul %141, %139, %cst_131 {dimension_numbers = #tpu.dot_dimension_numbers<[1], [0], [0], [1], [0, 0, 1, 1], [], []>} : vector<8x4xbf16>, vector<4x36xbf16>, vector<8x36xf32> -> vector<8x36xf32>
    %143 = arith.addf %137, %142 : vector<8x36xf32>
    %c0_132 = arith.constant 0 : index
    %c0_133 = arith.constant 0 : index
    %c272 = arith.constant 272 : index
    %144 = vector.load %arg1[%c0_132, %c0_133, %c272] : memref<1x4x384xbf16, #tpu.memory_space<vmem>>, vector<1x4x36xbf16>
    %145 = vector.shape_cast %144 : vector<1x4x36xbf16> to vector<4x36xbf16>
    %c5_134 = arith.constant 5 : index
    %c0_135 = arith.constant 0 : index
    %c0_136 = arith.constant 0 : index
    %146 = vector.load %arg2[%c5_134, %c0_135, %c0_136] : memref<9x8x4xbf16, #tpu.memory_space<vmem>>, vector<1x8x4xbf16>
    %147 = vector.shape_cast %146 : vector<1x8x4xbf16> to vector<8x4xbf16>
    %cst_137 = arith.constant dense<0.000000e+00> : vector<8x36xf32>
    %148 = tpu.matmul %147, %145, %cst_137 {dimension_numbers = #tpu.dot_dimension_numbers<[1], [0], [0], [1], [0, 0, 1, 1], [], []>} : vector<8x4xbf16>, vector<4x36xbf16>, vector<8x36xf32> -> vector<8x36xf32>
    %149 = arith.addf %143, %148 : vector<8x36xf32>
    %c0_138 = arith.constant 0 : index
    %c0_139 = arith.constant 0 : index
    %c288 = arith.constant 288 : index
    %150 = vector.load %arg1[%c0_138, %c0_139, %c288] : memref<1x4x384xbf16, #tpu.memory_space<vmem>>, vector<1x4x36xbf16>
    %151 = vector.shape_cast %150 : vector<1x4x36xbf16> to vector<4x36xbf16>
    %c6_140 = arith.constant 6 : index
    %c0_141 = arith.constant 0 : index
    %c0_142 = arith.constant 0 : index
    %152 = vector.load %arg2[%c6_140, %c0_141, %c0_142] : memref<9x8x4xbf16, #tpu.memory_space<vmem>>, vector<1x8x4xbf16>
    %153 = vector.shape_cast %152 : vector<1x8x4xbf16> to vector<8x4xbf16>
    %cst_143 = arith.constant dense<0.000000e+00> : vector<8x36xf32>
    %154 = tpu.matmul %153, %151, %cst_143 {dimension_numbers = #tpu.dot_dimension_numbers<[1], [0], [0], [1], [0, 0, 1, 1], [], []>} : vector<8x4xbf16>, vector<4x36xbf16>, vector<8x36xf32> -> vector<8x36xf32>
    %155 = arith.addf %149, %154 : vector<8x36xf32>
    %c0_144 = arith.constant 0 : index
    %c0_145 = arith.constant 0 : index
    %c289 = arith.constant 289 : index
    %156 = vector.load %arg1[%c0_144, %c0_145, %c289] : memref<1x4x384xbf16, #tpu.memory_space<vmem>>, vector<1x4x36xbf16>
    %157 = vector.shape_cast %156 : vector<1x4x36xbf16> to vector<4x36xbf16>
    %c7_146 = arith.constant 7 : index
    %c0_147 = arith.constant 0 : index
    %c0_148 = arith.constant 0 : index
    %158 = vector.load %arg2[%c7_146, %c0_147, %c0_148] : memref<9x8x4xbf16, #tpu.memory_space<vmem>>, vector<1x8x4xbf16>
    %159 = vector.shape_cast %158 : vector<1x8x4xbf16> to vector<8x4xbf16>
    %cst_149 = arith.constant dense<0.000000e+00> : vector<8x36xf32>
    %160 = tpu.matmul %159, %157, %cst_149 {dimension_numbers = #tpu.dot_dimension_numbers<[1], [0], [0], [1], [0, 0, 1, 1], [], []>} : vector<8x4xbf16>, vector<4x36xbf16>, vector<8x36xf32> -> vector<8x36xf32>
    %161 = arith.addf %155, %160 : vector<8x36xf32>
    %c0_150 = arith.constant 0 : index
    %c0_151 = arith.constant 0 : index
    %c290 = arith.constant 290 : index
    %162 = vector.load %arg1[%c0_150, %c0_151, %c290] : memref<1x4x384xbf16, #tpu.memory_space<vmem>>, vector<1x4x36xbf16>
    %163 = vector.shape_cast %162 : vector<1x4x36xbf16> to vector<4x36xbf16>
    %c8_152 = arith.constant 8 : index
    %c0_153 = arith.constant 0 : index
    %c0_154 = arith.constant 0 : index
    %164 = vector.load %arg2[%c8_152, %c0_153, %c0_154] : memref<9x8x4xbf16, #tpu.memory_space<vmem>>, vector<1x8x4xbf16>
    %165 = vector.shape_cast %164 : vector<1x8x4xbf16> to vector<8x4xbf16>
    %cst_155 = arith.constant dense<0.000000e+00> : vector<8x36xf32>
    %166 = tpu.matmul %165, %163, %cst_155 {dimension_numbers = #tpu.dot_dimension_numbers<[1], [0], [0], [1], [0, 0, 1, 1], [], []>} : vector<8x4xbf16>, vector<4x36xbf16>, vector<8x36xf32> -> vector<8x36xf32>
    %167 = arith.addf %161, %166 : vector<8x36xf32>
    %168 = vector.broadcast %0 : vector<8x1xf32> to vector<8x36xf32>
    %169 = arith.mulf %167, %168 : vector<8x36xf32>
    %170 = vector.broadcast %1 : vector<8x1xf32> to vector<8x36xf32>
    %171 = arith.addf %169, %170 : vector<8x36xf32>
    %172 = vector.extract_strided_slice %171 {offsets = [0, 0], sizes = [8, 16], strides = [1, 1]} : vector<8x36xf32> to vector<8x16xf32>
    %c0_156 = arith.constant 0 : index
    %c0_157 = arith.constant 0 : index
    %c14 = arith.constant 14 : index
    %c0_158 = arith.constant 0 : index
    %173 = vector.load %arg5[%c0_156, %c0_157, %c14, %c0_158] : memref<1x8x16x16xf32, #tpu.memory_space<vmem>>, vector<1x8x1x16xf32>
    %174 = vector.shape_cast %173 : vector<1x8x1x16xf32> to vector<8x16xf32>
    %175 = vector.shape_cast %172 : vector<8x16xf32> to vector<1x8x1x16xf32>
    tpu.vector_store %arg5[%c0_156, %c0_157, %c14, %c0_158], %175 {strides = array<i32>} : memref<1x8x16x16xf32, #tpu.memory_space<vmem>>, vector<1x8x1x16xf32>,
    %176 = vector.extract_strided_slice %171 {offsets = [0, 18], sizes = [8, 16], strides = [1, 1]} : vector<8x36xf32> to vector<8x16xf32>
    %c0_159 = arith.constant 0 : index
    %c0_160 = arith.constant 0 : index
    %c15 = arith.constant 15 : index
    %c0_161 = arith.constant 0 : index
    %177 = vector.load %arg5[%c0_159, %c0_160, %c15, %c0_161] : memref<1x8x16x16xf32, #tpu.memory_space<vmem>>, vector<1x8x1x16xf32>
    %178 = vector.shape_cast %177 : vector<1x8x1x16xf32> to vector<8x16xf32>
    %179 = vector.shape_cast %176 : vector<8x16xf32> to vector<1x8x1x16xf32>
    tpu.vector_store %arg5[%c0_159, %c0_160, %c15, %c0_161], %179 {strides = array<i32>} : memref<1x8x16x16xf32, #tpu.memory_space<vmem>>, vector<1x8x1x16xf32>,
    return
  }
  func.func @transform_0(%arg0: i32) -> (i32, i32, i32) {
    %c0_i32 = arith.constant 0 : i32
    %c0_i32_0 = arith.constant 0 : i32
    %c0_i32_1 = arith.constant 0 : i32
    return %arg0, %c0_i32, %c0_i32_0 : i32, i32, i32
  }
  func.func @transform_1(%arg0: i32) -> (i32, i32, i32) {
    %c0_i32 = arith.constant 0 : i32
    %c0_i32_0 = arith.constant 0 : i32
    %c0_i32_1 = arith.constant 0 : i32
    %c0_i32_2 = arith.constant 0 : i32
    return %c0_i32, %c0_i32_0, %c0_i32_1 : i32, i32, i32
  }
  func.func @transform_2(%arg0: i32) -> (i32, i32) {
    %c0_i32 = arith.constant 0 : i32
    %c0_i32_0 = arith.constant 0 : i32
    %c0_i32_1 = arith.constant 0 : i32
    return %c0_i32, %c0_i32_0 : i32, i32
  }
  func.func @transform_3(%arg0: i32) -> (i32, i32) {
    %c0_i32 = arith.constant 0 : i32
    %c0_i32_0 = arith.constant 0 : i32
    %c0_i32_1 = arith.constant 0 : i32
    return %c0_i32, %c0_i32_0 : i32, i32
  }
  func.func @transform_4(%arg0: i32) -> (i32, i32, i32, i32) {
    %c0_i32 = arith.constant 0 : i32
    %c0_i32_0 = arith.constant 0 : i32
    %c0_i32_1 = arith.constant 0 : i32
    %c0_i32_2 = arith.constant 0 : i32
    return %arg0, %c0_i32, %c0_i32_0, %c0_i32_1 : i32, i32, i32, i32
  }
}

</mosaic_0001>

<llo_original>
// kernel: conv2d_batchnorm.2
$region0: #{conv2d_batchnorm.2}
  #allocation0 [shape = 'u32[]', space=smem, size = 0x4, offset = 0x4, fixed_abs, tag = 'smem constant byte address 0x4 - core index']
  #allocation1 [shape = 'u32[144,128]{1,0:T(1,128)}', space=vmem, size = 0x12000, scoped, tag = 'internal scratch']
  %s0 = inlined_call_operand.vmem [shape: bf16[2,4,384], index: 0, kind: input, shape index: {}]
  %s1 = inlined_call_operand.vmem [shape: bf16[9,8,4], index: 1, kind: input, shape index: {}]
  %s2 = inlined_call_operand.vmem [shape: f32[1,288], index: 2, kind: input, shape index: {}]
  %s3 = inlined_call_operand.vmem [shape: f32[2,8,2], index: 3, kind: output, shape index: {}]
  %s4 = sld [smem:[#allocation0]]
  $region45: #{conv2d_batchnorm.2} parent=0
    _
  %s6 = ssub.s32 1, %s4
  %s7 = scalar_select 0, %s6, %s4
  loop: start=0, step=1, limit=4
  $region2: #{conv2d_batchnorm.2} parent=0 // loop_pre_header
    _
  $region3: #{conv2d_batchnorm.2} parent=0 // loop_header
    %s9 = sphi 0, %s13
    %p10 = scmp.ge.s32.totalorder %s9, 4
    %s19 = sphi 0, %s21
    %s22 = sphi 0, %s19
    %s23 = sphi 0, %s22
    %s39 = sphi 0, %s23
    %s43 = sphi 0, %s43
    %s45 = sphi 0, %s43
    %s46 = sphi 0, %s45
    %s60 = sphi 0, %s46
    %s64 = sphi 0, %s64
    %s66 = sphi 0, %s64
    %s67 = sphi 0, %s66
    %s81 = sphi 0, %s67
    %s87 = sphi 0, %s89
    %s90 = sphi 0, %s87
    %s91 = sphi 0, %s90
    %s107 = sphi 0, %s91
  $region4: #{conv2d_batchnorm.2} parent=0 // loop_header_branch
    %12 = sbr.rel (%p10) target = $region8
  $region5: #{conv2d_batchnorm.2} parent=0 // loop_body
    %s14 = ssub.s32 %s9, 1
    %s15 = ssub.s32 %s9, 2
    %s16 = sadd.s32 %s9, 1
    %s17 = ssub.s32 %s9, %s16
    %p18 = scmp.eq.s32.totalorder %s17, 0
    %s20 = sadd.s32 %s19, 1
    %s21 = scalar_select %p18, %s19, %s20
    %p24 = pneg %p18
    %p25 = scmp.eq.s32.totalorder %s9, 1
    %p26 = por %p24, %p25
    %p27 = scmp.ne.s32.totalorder %s19, %s22
    %p28 = scmp.eq.s32.totalorder %s9, 0
    %p29 = por %p27, %p28
    %p30 = scmp.ne.s32.totalorder %s19, %s22
    %p31 = scmp.eq.s32.totalorder %s14, 1
    %p32 = por %p30, %p31
    %p33 = scmp.ne.s32.totalorder %s22, %s23
    %p34 = scmp.eq.s32.totalorder %s14, 0
    %p35 = por %p33, %p34
    %p36 = scmp.ne.s32.totalorder %s22, %s23
    %p37 = scmp.eq.s32.totalorder %s15, 1
    %p38 = por %p36, %p37
    %p40 = scmp.ne.s32.totalorder %s23, %s39
    %p41 = scmp.eq.s32.totalorder %s15, 0
    %p42 = por %p40, %p41
    %s44 = sadd.s32 %s43, 1
    %p47 = scmp.eq.s32.totalorder %s9, 1
    %p48 = scmp.ne.s32.totalorder %s43, %s45
    %p49 = scmp.eq.s32.totalorder %s9, 0
    %p50 = por %p48, %p49
    %p51 = scmp.ne.s32.totalorder %s43, %s45
    %p52 = scmp.eq.s32.totalorder %s14, 1
    %p53 = por %p51, %p52
    %p54 = scmp.ne.s32.totalorder %s45, %s46
    %p55 = scmp.eq.s32.totalorder %s14, 0
    %p56 = por %p54, %p55
    %p57 = scmp.ne.s32.totalorder %s45, %s46
    %p58 = scmp.eq.s32.totalorder %s15, 1
    %p59 = por %p57, %p58
    %p61 = scmp.ne.s32.totalorder %s46, %s60
    %p62 = scmp.eq.s32.totalorder %s15, 0
    %p63 = por %p61, %p62
    %s65 = sadd.s32 %s64, 1
    %p68 = scmp.eq.s32.totalorder %s9, 1
    %p69 = scmp.ne.s32.totalorder %s64, %s66
    %p70 = scmp.eq.s32.totalorder %s9, 0
    %p71 = por %p69, %p70
    %p72 = scmp.ne.s32.totalorder %s64, %s66
    %p73 = scmp.eq.s32.totalorder %s14, 1
    %p74 = por %p72, %p73
    %p75 = scmp.ne.s32.totalorder %s66, %s67
    %p76 = scmp.eq.s32.totalorder %s14, 0
    %p77 = por %p75, %p76
    %p78 = scmp.ne.s32.totalorder %s66, %s67
    %p79 = scmp.eq.s32.totalorder %s15, 1
    %p80 = por %p78, %p79
    %p82 = scmp.ne.s32.totalorder %s67, %s81
    %p83 = scmp.eq.s32.totalorder %s15, 0
    %p84 = por %p82, %p83
    %s85 = ssub.s32 %s9, %s16
    %p86 = scmp.eq.s32.totalorder %s85, 0
    %s88 = sadd.s32 %s87, 1
    %s89 = scalar_select %p86, %s87, %s88
    %p92 = pneg %p86
    %p93 = scmp.eq.s32.totalorder %s9, 1
    %p94 = por %p92, %p93
    %p95 = scmp.ne.s32.totalorder %s87, %s90
    %p96 = scmp.eq.s32.totalorder %s9, 0
    %p97 = por %p95, %p96
    %p98 = scmp.ne.s32.totalorder %s87, %s90
    %p99 = scmp.eq.s32.totalorder %s14, 1
    %p100 = por %p98, %p99
    %p101 = scmp.ne.s32.totalorder %s90, %s91
    %p102 = scmp.eq.s32.totalorder %s14, 0
    %p103 = por %p101, %p102
    %p104 = scmp.ne.s32.totalorder %s90, %s91
    %p105 = scmp.eq.s32.totalorder %s15, 1
    %p106 = por %p104, %p105
    %p108 = scmp.ne.s32.totalorder %s91, %s107
    %p109 = scmp.eq.s32.totalorder %s15, 0
    %p110 = por %p108, %p109
    %p111 = scmp.le.s32.totalorder 1, %s9
    %p112 = scmp.lt.s32.totalorder %s9, 3
    %p113 = pnand %p111, %p112
    %p114 = pneg %p113
    // Predicated region
    $region9: #{conv2d_batchnorm.2} parent=5 // pred_check
      _
    $region10: #{conv2d_batchnorm.2} parent=5 // pred_check_branch
      %116 = sbr.rel (%p113) target = $region12
    $region11: #{conv2d_batchnorm.2} parent=5 // pred_region
      %s117 = ssub.s32 %s9, 1
      // Predicated region
      $region13: #{conv2d_batchnorm.2} parent=11 // pred_check
        %p118 = pneg %p56
      $region14: #{conv2d_batchnorm.2} parent=11 // pred_check_branch
        %120 = sbr.rel (%p118) target = $region16
      $region15: #{conv2d_batchnorm.2} parent=11 // pred_region
        _
      $region16: #{conv2d_batchnorm.2} parent=11 // pred_fallthru
        _
      // Predicated region
      $region17: #{conv2d_batchnorm.2} parent=11 // pred_check
        %p121 = pneg %p77
      $region18: #{conv2d_batchnorm.2} parent=11 // pred_check_branch
        %123 = sbr.rel (%p121) target = $region20
      $region19: #{conv2d_batchnorm.2} parent=11 // pred_region
        _
      $region20: #{conv2d_batchnorm.2} parent=11 // pred_fallthru
        _
    $region12: #{conv2d_batchnorm.2} parent=5 // pred_fallthru
      _
    %p124 = scmp.lt.s32.totalorder %s9, 2
    // Predicated region
    $region21: #{conv2d_batchnorm.2} parent=5 // pred_check
      %p125 = pneg %p124
    $region22: #{conv2d_batchnorm.2} parent=5 // pred_check_branch
      %127 = sbr.rel (%p125) target = $region24
    $region23: #{conv2d_batchnorm.2} parent=5 // pred_region
      // Predicated region
      $region25: #{conv2d_batchnorm.2} parent=23 // pred_check
        %p128 = pneg %p29
      $region26: #{conv2d_batchnorm.2} parent=23 // pred_check_branch
        %130 = sbr.rel (%p128) target = $region28
      $region27: #{conv2d_batchnorm.2} parent=23 // pred_region
        %p131 = scmp.lt.s32.totalorder %s9, 1
        %s132 = scalar_select %p131, %s9, 1
        %s133 = smul.addr %s132, 3
        %s134 = smul.addr %s133, 2
        %s135 = scalar_lea.vmem %s0, %s134
      $region28: #{conv2d_batchnorm.2} parent=23 // pred_fallthru
        _
    $region24: #{conv2d_batchnorm.2} parent=5 // pred_fallthru
      _
    %p136 = scmp.le.s32.totalorder 1, %s9
    %p137 = scmp.lt.s32.totalorder %s9, 3
    %p138 = pnand %p136, %p137
    %p139 = pneg %p138
    // Predicated region
    $region29: #{conv2d_batchnorm.2} parent=5 // pred_check
      _
    $region30: #{conv2d_batchnorm.2} parent=5 // pred_check_branch
      %141 = sbr.rel (%p138) target = $region32
    $region31: #{conv2d_batchnorm.2} parent=5 // pred_region
      %s142 = ssub.s32 %s9, 1
      %p143 = scmp.lt.s32.totalorder %s14, 1
      %s144 = scalar_select %p143, %s14, 1
      %s145 = smul.addr %s144, 3
      %s146 = smul.addr %s145, 2
      %s147 = scalar_lea.vmem %s0, %s146
      %p148 = pneg %p35
      %p149 = pneg %p32
      %p150 = pneg %p56
      %p151 = pneg %p53
      %p152 = pneg %p77
      %p153 = pneg %p74
      %p154 = pneg %p103
      %p155 = pneg %p100
      %p156 = scmp.lt.s32.totalorder %s14, 1
      %s157 = scalar_select %p156, %s14, 1
      %s158 = smul.addr %s157, 8
      %s159 = scalar_lea.vmem %s3, %s158
      %p160 = scmp.lt.s32.totalorder %s14, 1
      %s161 = scalar_select %p160, %s14, 1
      %s162 = smul.addr %s161, 3
      %s163 = smul.addr %s162, 2
      %s164 = scalar_lea.vmem %s0, %s163
      %p165 = scmp.lt.s32.totalorder %s14, 1
      %s166 = scalar_select %p165, %s14, 1
      %s167 = smul.addr %s166, 8
      %s168 = scalar_lea.vmem %s3, %s167
      %v170 = vld [vmem:[%s164] sm:$0xf]
      %v171 = vld [vmem:[%s1] sm:$0xf]
      %s172 = scalar_lea.vmem %s1, 4
      %v173 = vld [vmem:[%s172] sm:$0xf]
      %v176 = vunpack.c.l.s4 1983009808
      %v177 = vunpack.c.0.s8 %v176
      %v178 = vlaneseq
      %v179 = vshrl.u32 %v178, 7
      %v180 = vsub.s32 %v177, %v179
      %v181 = vrot.slane %v170, %v180
      %v182 = vcombine.high %v181, %v181
      %183 = vrot.lane.b32.xlu0 %v181, 127
      %v184 = vpop.permute.xlu0 %183
      %185 = vrot.lane.b32.xlu0 %v182, 127
      %v186 = vpop.permute.xlu0 %185
      %vm187 = vcmask 1039360
      %v188 = vsel %vm187, %v184, %v186
      %vm189 = vcmask 31744
      %v191 = vsel %vm189, %v173, 0
      %vm193 = vcmask 1041408
      %v195 = vsel %vm193, %v188, 0
      %v198 = vsel %vm193, %v186, 0
      %200 = vmatprep.subr.bf16.mxu0 %v198
      %201 = vmatpush1.bf16.msra.mxu0 %v195
      %202 = vmatprep.subr.bf16.mxu0 0
      %203 = vmatpush1.bf16.msra.mxu0 0
      %204 = vmatprep.subr.bf16.mxu0 0
      %205 = vmatpush1.bf16.msra.mxu0 0
      %206 = vmatprep.subr.bf16.mxu0 0
      %207 = vmatpush1.bf16.msra.mxu0 0
      %208 = vmatprep.subr.bf16.mxu0 0
      %209 = vmatpush1.bf16.msra.mxu0 0
      %210 = vmatprep.subr.bf16.mxu0 0
      %211 = vmatpush1.bf16.msra.mxu0 0
      %212 = vmatprep.subr.bf16.mxu0 0
      %213 = vmatpush1.bf16.msra.mxu0 0
      %214 = vmatprep.subr.bf16.mxu0 0
      %215 = vmatpush1.bf16.msra.mxu0 0
      %216 = vmatprep.subr.bf16.mxu0 0
      %217 = vmatpush1.bf16.msra.mxu0 0
      %218 = vmatprep.subr.bf16.mxu0 0
      %219 = vmatpush1.bf16.msra.mxu0 0
      %220 = vmatprep.subr.bf16.mxu0 0
      %221 = vmatpush1.bf16.msra.mxu0 0
      %222 = vmatprep.subr.bf16.mxu0 0
      %223 = vmatpush1.bf16.msra.mxu0 0
      %224 = vmatprep.subr.bf16.mxu0 0
      %225 = vmatpush1.bf16.msra.mxu0 0
      %226 = vmatprep.subr.bf16.mxu0 0
      %227 = vmatpush1.bf16.msra.mxu0 0
      %228 = vmatprep.subr.bf16.mxu0 0
      %229 = vmatpush1.bf16.msra.mxu0 0
      %230 = vmatprep.subr.bf16.mxu0 0
      %231 = vmatpush1.bf16.msra.mxu0 0
      %232 = vmatprep.mubr.bf16.mxu0 0
      %233 = vmatmul.mubr.bf16.gmra.mrb[0].mxu0 %v191
      %v234 = vpop.f32.mrb[0].mxu0
      %v235 = vadd.f32 0.0, %v234
      %v236 = vpop.f32.mrb[0].mxu0
      %v237 = vadd.f32 0.0, %v236
      %v238 = vpop.f32.mrb[0].mxu0
      %v239 = vpop.f32.mrb[0].mxu0
      %240 = vdwg.mxu0
      %v242 = vsel %vm189, %v171, 0
      %v245 = vsel %vm193, %v181, 0
      %v248 = vsel %vm193, %v182, 0
      %250 = vmatprep.subr.bf16.mxu0 %v248
      %251 = vmatpush1.bf16.msra.mxu0 %v245
      %252 = vmatprep.subr.bf16.mxu0 0
      %253 = vmatpush1.bf16.msra.mxu0 0
      %254 = vmatprep.subr.bf16.mxu0 0
      %255 = vmatpush1.bf16.msra.mxu0 0
      %256 = vmatprep.subr.bf16.mxu0 0
      %257 = vmatpush1.bf16.msra.mxu0 0
      %258 = vmatprep.subr.bf16.mxu0 0
      %259 = vmatpush1.bf16.msra.mxu0 0
      %260 = vmatprep.subr.bf16.mxu0 0
      %261 = vmatpush1.bf16.msra.mxu0 0
      %262 = vmatprep.subr.bf16.mxu0 0
      %263 = vmatpush1.bf16.msra.mxu0 0
      %264 = vmatprep.subr.bf16.mxu0 0
      %265 = vmatpush1.bf16.msra.mxu0 0
      %266 = vmatprep.subr.bf16.mxu0 0
      %267 = vmatpush1.bf16.msra.mxu0 0
      %268 = vmatprep.subr.bf16.mxu0 0
      %269 = vmatpush1.bf16.msra.mxu0 0
      %270 = vmatprep.subr.bf16.mxu0 0
      %271 = vmatpush1.bf16.msra.mxu0 0
      %272 = vmatprep.subr.bf16.mxu0 0
      %273 = vmatpush1.bf16.msra.mxu0 0
      %274 = vmatprep.subr.bf16.mxu0 0
      %275 = vmatpush1.bf16.msra.mxu0 0
      %276 = vmatprep.subr.bf16.mxu0 0
      %277 = vmatpush1.bf16.msra.mxu0 0
      %278 = vmatprep.subr.bf16.mxu0 0
      %279 = vmatpush1.bf16.msra.mxu0 0
      %280 = vmatprep.subr.bf16.mxu0 0
      %281 = vmatpush1.bf16.msra.mxu0 0
      %282 = vmatprep.mubr.bf16.mxu0 0
      %283 = vmatmul.mubr.bf16.gmra.mrb[0].mxu0 %v242
      %v284 = vpop.f32.mrb[0].mxu0
      %v285 = vadd.f32 %v235, %v284
      %v286 = vpop.f32.mrb[0].mxu0
      %v287 = vadd.f32 %v237, %v286
      %v288 = vpop.f32.mrb[0].mxu0
      %v289 = vpop.f32.mrb[0].mxu0
      %290 = vdwg.mxu0
      %v291 = vld [vmem:[%s164] sm:$0xf]
      %s292 = scalar_lea.vmem %s1, 8
      %v293 = vld [vmem:[%s292] sm:$0xf]
      %v296 = vunpack.c.l.s4 1983009808
      %v297 = vunpack.c.0.s8 %v296
      %v298 = vlaneseq
      %v299 = vshrl.u32 %v298, 7
      %v300 = vsub.s32 %v297, %v299
      %v301 = vrot.slane %v291, %v300
      %v302 = vcombine.high %v301, %v301
      %303 = vrot.lane.b32.xlu0 %v301, 126
      %v304 = vpop.permute.xlu0 %303
      %305 = vrot.lane.b32.xlu0 %v302, 126
      %v306 = vpop.permute.xlu0 %305
      %vm307 = vcmask 1031168
      %v308 = vsel %vm307, %v304, %v306
      %v310 = vsel %vm189, %v293, 0
      %v313 = vsel %vm193, %v308, 0
      %v316 = vsel %vm193, %v306, 0
      %318 = vmatprep.subr.bf16.mxu0 %v316
      %319 = vmatpush1.bf16.msra.mxu0 %v313
      %320 = vmatprep.subr.bf16.mxu0 0
      %321 = vmatpush1.bf16.msra.mxu0 0
      %322 = vmatprep.subr.bf16.mxu0 0
      %323 = vmatpush1.bf16.msra.mxu0 0
      %324 = vmatprep.subr.bf16.mxu0 0
      %325 = vmatpush1.bf16.msra.mxu0 0
      %326 = vmatprep.subr.bf16.mxu0 0
      %327 = vmatpush1.bf16.msra.mxu0 0
      %328 = vmatprep.subr.bf16.mxu0 0
      %329 = vmatpush1.bf16.msra.mxu0 0
      %330 = vmatprep.subr.bf16.mxu0 0
      %331 = vmatpush1.bf16.msra.mxu0 0
      %332 = vmatprep.subr.bf16.mxu0 0
      %333 = vmatpush1.bf16.msra.mxu0 0
      %334 = vmatprep.subr.bf16.mxu0 0
      %335 = vmatpush1.bf16.msra.mxu0 0
      %336 = vmatprep.subr.bf16.mxu0 0
      %337 = vmatpush1.bf16.msra.mxu0 0
      %338 = vmatprep.subr.bf16.mxu0 0
      %339 = vmatpush1.bf16.msra.mxu0 0
      %340 = vmatprep.subr.bf16.mxu0 0
      %341 = vmatpush1.bf16.msra.mxu0 0
      %342 = vmatprep.subr.bf16.mxu0 0
      %343 = vmatpush1.bf16.msra.mxu0 0
      %344 = vmatprep.subr.bf16.mxu0 0
      %345 = vmatpush1.bf16.msra.mxu0 0
      %346 = vmatprep.subr.bf16.mxu0 0
      %347 = vmatpush1.bf16.msra.mxu0 0
      %348 = vmatprep.subr.bf16.mxu0 0
      %349 = vmatpush1.bf16.msra.mxu0 0
      %350 = vmatprep.mubr.bf16.mxu0 0
      %351 = vmatmul.mubr.bf16.gmra.mrb[0].mxu0 %v310
      %v352 = vpop.f32.mrb[0].mxu0
      %v353 = vadd.f32 0.0, %v352
      %v354 = vpop.f32.mrb[0].mxu0
      %v355 = vadd.f32 0.0, %v354
      %v356 = vpop.f32.mrb[0].mxu0
      %v357 = vpop.f32.mrb[0].mxu0
      %358 = vdwg.mxu0
      %v359 = vadd.f32 %v285, %v353
      %v360 = vadd.f32 %v287, %v355
      %v361 = vld [vmem:[%s164] sm:$0x3f]
      %s362 = scalar_lea.vmem %s1, 12
      %v363 = vld [vmem:[%s362] sm:$0xf]
      %v365 = vcombine.high %v361, %v361
      %v367 = vunpack.c.l.s4 1983009808
      %v368 = vunpack.c.0.s8 %v367
      %v369 = vlaneseq
      %v370 = vshrl.u32 %v369, 7
      %v371 = vsub.s32 %v368, %v370
      %v372 = vrot.slane %v361, %v371
      %v374 = vunpack.c.l.s4 1983009808
      %v375 = vunpack.c.0.s8 %v374
      %v376 = vlaneseq
      %v377 = vshrl.u32 %v376, 7
      %v378 = vsub.s32 %v375, %v377
      %v379 = vrot.slane %v365, %v378
      %v380 = vcombine.high %v372, %v372
      %381 = vrot.lane.b32.xlu0 %v372, 110
      %v382 = vpop.permute.xlu0 %381
      %383 = vrot.lane.b32.xlu0 %v380, 110
      %v384 = vpop.permute.xlu0 %383
      %385 = vrot.lane.b32.xlu0 %v379, 110
      %v386 = vpop.permute.xlu0 %385
      %vm387 = vcmask 900096
      %v388 = vsel %vm387, %v382, %v384
      %v389 = vsel %vm387, %v384, %v386
      %v391 = vsel %vm189, %v363, 0
      %v394 = vsel %vm193, %v388, 0
      %v397 = vsel %vm193, %v389, 0
      %399 = vmatprep.subr.bf16.mxu0 %v397
      %400 = vmatpush1.bf16.msra.mxu0 %v394
      %401 = vmatprep.subr.bf16.mxu0 0
      %402 = vmatpush1.bf16.msra.mxu0 0
      %403 = vmatprep.subr.bf16.mxu0 0
      %404 = vmatpush1.bf16.msra.mxu0 0
      %405 = vmatprep.subr.bf16.mxu0 0
      %406 = vmatpush1.bf16.msra.mxu0 0
      %407 = vmatprep.subr.bf16.mxu0 0
      %408 = vmatpush1.bf16.msra.mxu0 0
      %409 = vmatprep.subr.bf16.mxu0 0
      %410 = vmatpush1.bf16.msra.mxu0 0
      %411 = vmatprep.subr.bf16.mxu0 0
      %412 = vmatpush1.bf16.msra.mxu0 0
      %413 = vmatprep.subr.bf16.mxu0 0
      %414 = vmatpush1.bf16.msra.mxu0 0
      %415 = vmatprep.subr.bf16.mxu0 0
      %416 = vmatpush1.bf16.msra.mxu0 0
      %417 = vmatprep.subr.bf16.mxu0 0
      %418 = vmatpush1.bf16.msra.mxu0 0
      %419 = vmatprep.subr.bf16.mxu0 0
      %420 = vmatpush1.bf16.msra.mxu0 0
      %421 = vmatprep.subr.bf16.mxu0 0
      %422 = vmatpush1.bf16.msra.mxu0 0
      %423 = vmatprep.subr.bf16.mxu0 0
      %424 = vmatpush1.bf16.msra.mxu0 0
      %425 = vmatprep.subr.bf16.mxu0 0
      %426 = vmatpush1.bf16.msra.mxu0 0
      %427 = vmatprep.subr.bf16.mxu0 0
      %428 = vmatpush1.bf16.msra.mxu0 0
      %429 = vmatprep.subr.bf16.mxu0 0
      %430 = vmatpush1.bf16.msra.mxu0 0
      %431 = vmatprep.mubr.bf16.mxu0 0
      %432 = vmatmul.mubr.bf16.gmra.mrb[0].mxu0 %v391
      %v433 = vpop.f32.mrb[0].mxu0
      %v434 = vadd.f32 0.0, %v433
      %v435 = vpop.f32.mrb[0].mxu0
      %v436 = vadd.f32 0.0, %v435
      %v437 = vpop.f32.mrb[0].mxu0
      %v438 = vpop.f32.mrb[0].mxu0
      %439 = vdwg.mxu0
      %v440 = vadd.f32 %v359, %v434
      %v441 = vadd.f32 %v360, %v436
      %v442 = vld [vmem:[%s164] sm:$0x3f]
      %s443 = scalar_lea.vmem %s1, 16
      %v444 = vld [vmem:[%s443] sm:$0xf]
      %v446 = vcombine.high %v442, %v442
      %v448 = vunpack.c.l.s4 1983009808
      %v449 = vunpack.c.0.s8 %v448
      %v450 = vlaneseq
      %v451 = vshrl.u32 %v450, 7
      %v452 = vsub.s32 %v449, %v451
      %v453 = vrot.slane %v442, %v452
      %v455 = vunpack.c.l.s4 1983009808
      %v456 = vunpack.c.0.s8 %v455
      %v457 = vlaneseq
      %v458 = vshrl.u32 %v457, 7
      %v459 = vsub.s32 %v456, %v458
      %v460 = vrot.slane %v446, %v459
      %v461 = vcombine.high %v453, %v453
      %462 = vrot.lane.b32.xlu0 %v453, 109
      %v463 = vpop.permute.xlu0 %462
      %464 = vrot.lane.b32.xlu0 %v461, 109
      %v465 = vpop.permute.xlu0 %464
      %466 = vrot.lane.b32.xlu0 %v460, 109
      %v467 = vpop.permute.xlu0 %466
      %vm468 = vcmask 891904
      %v469 = vsel %vm468, %v463, %v465
      %v470 = vsel %vm468, %v465, %v467
      %v472 = vsel %vm189, %v444, 0
      %v475 = vsel %vm193, %v469, 0
      %v478 = vsel %vm193, %v470, 0
      %480 = vmatprep.subr.bf16.mxu0 %v478
      %481 = vmatpush1.bf16.msra.mxu0 %v475
      %482 = vmatprep.subr.bf16.mxu0 0
      %483 = vmatpush1.bf16.msra.mxu0 0
      %484 = vmatprep.subr.bf16.mxu0 0
      %485 = vmatpush1.bf16.msra.mxu0 0
      %486 = vmatprep.subr.bf16.mxu0 0
      %487 = vmatpush1.bf16.msra.mxu0 0
      %488 = vmatprep.subr.bf16.mxu0 0
      %489 = vmatpush1.bf16.msra.mxu0 0
      %490 = vmatprep.subr.bf16.mxu0 0
      %491 = vmatpush1.bf16.msra.mxu0 0
      %492 = vmatprep.subr.bf16.mxu0 0
      %493 = vmatpush1.bf16.msra.mxu0 0
      %494 = vmatprep.subr.bf16.mxu0 0
      %495 = vmatpush1.bf16.msra.mxu0 0
      %496 = vmatprep.subr.bf16.mxu0 0
      %497 = vmatpush1.bf16.msra.mxu0 0
      %498 = vmatprep.subr.bf16.mxu0 0
      %499 = vmatpush1.bf16.msra.mxu0 0
      %500 = vmatprep.subr.bf16.mxu0 0
      %501 = vmatpush1.bf16.msra.mxu0 0
      %502 = vmatprep.subr.bf16.mxu0 0
      %503 = vmatpush1.bf16.msra.mxu0 0
      %504 = vmatprep.subr.bf16.mxu0 0
      %505 = vmatpush1.bf16.msra.mxu0 0
      %506 = vmatprep.subr.bf16.mxu0 0
      %507 = vmatpush1.bf16.msra.mxu0 0
      %508 = vmatprep.subr.bf16.mxu0 0
      %509 = vmatpush1.bf16.msra.mxu0 0
      %510 = vmatprep.subr.bf16.mxu0 0
      %511 = vmatpush1.bf16.msra.mxu0 0
      %512 = vmatprep.mubr.bf16.mxu0 0
      %513 = vmatmul.mubr.bf16.gmra.mrb[0].mxu0 %v472
      %v514 = vpop.f32.mrb[0].mxu0
      %v515 = vadd.f32 0.0, %v514
      %v516 = vpop.f32.mrb[0].mxu0
      %v517 = vadd.f32 0.0, %v516
      %v518 = vpop.f32.mrb[0].mxu0
      %v519 = vpop.f32.mrb[0].mxu0
      %520 = vdwg.mxu0
      %v521 = vadd.f32 %v440, %v515
      %v522 = vadd.f32 %v441, %v517
      %v523 = vld [vmem:[%s164] sm:$0x3f]
      %s524 = scalar_lea.vmem %s1, 20
      %v525 = vld [vmem:[%s524] sm:$0xf]
      %v527 = vcombine.high %v523, %v523
      %v529 = vunpack.c.l.s4 1983009808
      %v530 = vunpack.c.0.s8 %v529
      %v531 = vlaneseq
      %v532 = vshrl.u32 %v531, 7
      %v533 = vsub.s32 %v530, %v532
      %v534 = vrot.slane %v523, %v533
      %v536 = vunpack.c.l.s4 1983009808
      %v537 = vunpack.c.0.s8 %v536
      %v538 = vlaneseq
      %v539 = vshrl.u32 %v538, 7
      %v540 = vsub.s32 %v537, %v539
      %v541 = vrot.slane %v527, %v540
      %v542 = vcombine.high %v534, %v534
      %543 = vrot.lane.b32.xlu0 %v534, 108
      %v544 = vpop.permute.xlu0 %543
      %545 = vrot.lane.b32.xlu0 %v542, 108
      %v546 = vpop.permute.xlu0 %545
      %547 = vrot.lane.b32.xlu0 %v541, 108
      %v548 = vpop.permute.xlu0 %547
      %vm549 = vcmask 883712
      %v550 = vsel %vm549, %v544, %v546
      %v551 = vsel %vm549, %v546, %v548
      %v553 = vsel %vm189, %v525, 0
      %v556 = vsel %vm193, %v550, 0
      %v559 = vsel %vm193, %v551, 0
      %561 = vmatprep.subr.bf16.mxu0 %v559
      %562 = vmatpush1.bf16.msra.mxu0 %v556
      %563 = vmatprep.subr.bf16.mxu0 0
      %564 = vmatpush1.bf16.msra.mxu0 0
      %565 = vmatprep.subr.bf16.mxu0 0
      %566 = vmatpush1.bf16.msra.mxu0 0
      %567 = vmatprep.subr.bf16.mxu0 0
      %568 = vmatpush1.bf16.msra.mxu0 0
      %569 = vmatprep.subr.bf16.mxu0 0
      %570 = vmatpush1.bf16.msra.mxu0 0
      %571 = vmatprep.subr.bf16.mxu0 0
      %572 = vmatpush1.bf16.msra.mxu0 0
      %573 = vmatprep.subr.bf16.mxu0 0
      %574 = vmatpush1.bf16.msra.mxu0 0
      %575 = vmatprep.subr.bf16.mxu0 0
      %576 = vmatpush1.bf16.msra.mxu0 0
      %577 = vmatprep.subr.bf16.mxu0 0
      %578 = vmatpush1.bf16.msra.mxu0 0
      %579 = vmatprep.subr.bf16.mxu0 0
      %580 = vmatpush1.bf16.msra.mxu0 0
      %581 = vmatprep.subr.bf16.mxu0 0
      %582 = vmatpush1.bf16.msra.mxu0 0
      %583 = vmatprep.subr.bf16.mxu0 0
      %584 = vmatpush1.bf16.msra.mxu0 0
      %585 = vmatprep.subr.bf16.mxu0 0
      %586 = vmatpush1.bf16.msra.mxu0 0
      %587 = vmatprep.subr.bf16.mxu0 0
      %588 = vmatpush1.bf16.msra.mxu0 0
      %589 = vmatprep.subr.bf16.mxu0 0
      %590 = vmatpush1.bf16.msra.mxu0 0
      %591 = vmatprep.subr.bf16.mxu0 0
      %592 = vmatpush1.bf16.msra.mxu0 0
      %593 = vmatprep.mubr.bf16.mxu0 0
      %594 = vmatmul.mubr.bf16.gmra.mrb[0].mxu0 %v553
      %v595 = vpop.f32.mrb[0].mxu0
      %v596 = vadd.f32 0.0, %v595
      %v597 = vpop.f32.mrb[0].mxu0
      %v598 = vadd.f32 0.0, %v597
      %v599 = vpop.f32.mrb[0].mxu0
      %v600 = vpop.f32.mrb[0].mxu0
      %601 = vdwg.mxu0
      %v602 = vadd.f32 %v521, %v596
      %v603 = vadd.f32 %v522, %v598
      %v604 = vld [vmem:[%s164] sm:$0x3f]
      %s605 = scalar_lea.vmem %s1, 24
      %v606 = vld [vmem:[%s605] sm:$0xf]
      %v608 = vcombine.high %v604, %v604
      %v610 = vunpack.c.l.s4 1983009808
      %v611 = vunpack.c.0.s8 %v610
      %v612 = vlaneseq
      %v613 = vshrl.u32 %v612, 7
      %v614 = vsub.s32 %v611, %v613
      %v615 = vrot.slane %v604, %v614
      %v617 = vunpack.c.l.s4 1983009808
      %v618 = vunpack.c.0.s8 %v617
      %v619 = vlaneseq
      %v620 = vshrl.u32 %v619, 7
      %v621 = vsub.s32 %v618, %v620
      %v622 = vrot.slane %v608, %v621
      %v623 = vcombine.high %v615, %v615
      %624 = vrot.lane.b32.xlu0 %v615, 92
      %v625 = vpop.permute.xlu0 %624
      %626 = vrot.lane.b32.xlu0 %v623, 92
      %v627 = vpop.permute.xlu0 %626
      %628 = vrot.lane.b32.xlu0 %v622, 92
      %v629 = vpop.permute.xlu0 %628
      %vm630 = vcmask 752640
      %v631 = vsel %vm630, %v625, %v627
      %v632 = vsel %vm630, %v627, %v629
      %v634 = vsel %vm189, %v606, 0
      %v637 = vsel %vm193, %v631, 0
      %v640 = vsel %vm193, %v632, 0
      %642 = vmatprep.subr.bf16.mxu0 %v640
      %643 = vmatpush1.bf16.msra.mxu0 %v637
      %644 = vmatprep.subr.bf16.mxu0 0
      %645 = vmatpush1.bf16.msra.mxu0 0
      %646 = vmatprep.subr.bf16.mxu0 0
      %647 = vmatpush1.bf16.msra.mxu0 0
      %648 = vmatprep.subr.bf16.mxu0 0
      %649 = vmatpush1.bf16.msra.mxu0 0
      %650 = vmatprep.subr.bf16.mxu0 0
      %651 = vmatpush1.bf16.msra.mxu0 0
      %652 = vmatprep.subr.bf16.mxu0 0
      %653 = vmatpush1.bf16.msra.mxu0 0
      %654 = vmatprep.subr.bf16.mxu0 0
      %655 = vmatpush1.bf16.msra.mxu0 0
      %656 = vmatprep.subr.bf16.mxu0 0
      %657 = vmatpush1.bf16.msra.mxu0 0
      %658 = vmatprep.subr.bf16.mxu0 0
      %659 = vmatpush1.bf16.msra.mxu0 0
      %660 = vmatprep.subr.bf16.mxu0 0
      %661 = vmatpush1.bf16.msra.mxu0 0
      %662 = vmatprep.subr.bf16.mxu0 0
      %663 = vmatpush1.bf16.msra.mxu0 0
      %664 = vmatprep.subr.bf16.mxu0 0
      %665 = vmatpush1.bf16.msra.mxu0 0
      %666 = vmatprep.subr.bf16.mxu0 0
      %667 = vmatpush1.bf16.msra.mxu0 0
      %668 = vmatprep.subr.bf16.mxu0 0
      %669 = vmatpush1.bf16.msra.mxu0 0
      %670 = vmatprep.subr.bf16.mxu0 0
      %671 = vmatpush1.bf16.msra.mxu0 0
      %672 = vmatprep.subr.bf16.mxu0 0
      %673 = vmatpush1.bf16.msra.mxu0 0
      %674 = vmatprep.mubr.bf16.mxu0 0
      %675 = vmatmul.mubr.bf16.gmra.mrb[0].mxu0 %v634
      %v676 = vpop.f32.mrb[0].mxu0
      %v677 = vadd.f32 0.0, %v676
      %v678 = vpop.f32.mrb[0].mxu0
      %v679 = vadd.f32 0.0, %v678
      %v680 = vpop.f32.mrb[0].mxu0
      %v681 = vpop.f32.mrb[0].mxu0
      %682 = vdwg.mxu0
      %v683 = vadd.f32 %v602, %v677
      %v684 = vadd.f32 %v603, %v679
      %v685 = vld [vmem:[%s164] sm:$0x3f]
      %s686 = scalar_lea.vmem %s1, 28
      %v687 = vld [vmem:[%s686] sm:$0xf]
      %v689 = vcombine.high %v685, %v685
      %v691 = vunpack.c.l.s4 1983009808
      %v692 = vunpack.c.0.s8 %v691
      %v693 = vlaneseq
      %v694 = vshrl.u32 %v693, 7
      %v695 = vsub.s32 %v692, %v694
      %v696 = vrot.slane %v685, %v695
      %v698 = vunpack.c.l.s4 1983009808
      %v699 = vunpack.c.0.s8 %v698
      %v700 = vlaneseq
      %v701 = vshrl.u32 %v700, 7
      %v702 = vsub.s32 %v699, %v701
      %v703 = vrot.slane %v689, %v702
      %v704 = vcombine.high %v696, %v696
      %705 = vrot.lane.b32.xlu0 %v696, 91
      %v706 = vpop.permute.xlu0 %705
      %707 = vrot.lane.b32.xlu0 %v704, 91
      %v708 = vpop.permute.xlu0 %707
      %709 = vrot.lane.b32.xlu0 %v703, 91
      %v710 = vpop.permute.xlu0 %709
      %vm711 = vcmask 744448
      %v712 = vsel %vm711, %v706, %v708
      %v713 = vsel %vm711, %v708, %v710
      %v715 = vsel %vm189, %v687, 0
      %v718 = vsel %vm193, %v712, 0
      %v721 = vsel %vm193, %v713, 0
      %723 = vmatprep.subr.bf16.mxu0 %v721
      %724 = vmatpush1.bf16.msra.mxu0 %v718
      %725 = vmatprep.subr.bf16.mxu0 0
      %726 = vmatpush1.bf16.msra.mxu0 0
      %727 = vmatprep.subr.bf16.mxu0 0
      %728 = vmatpush1.bf16.msra.mxu0 0
      %729 = vmatprep.subr.bf16.mxu0 0
      %730 = vmatpush1.bf16.msra.mxu0 0
      %731 = vmatprep.subr.bf16.mxu0 0
      %732 = vmatpush1.bf16.msra.mxu0 0
      %733 = vmatprep.subr.bf16.mxu0 0
      %734 = vmatpush1.bf16.msra.mxu0 0
      %735 = vmatprep.subr.bf16.mxu0 0
      %736 = vmatpush1.bf16.msra.mxu0 0
      %737 = vmatprep.subr.bf16.mxu0 0
      %738 = vmatpush1.bf16.msra.mxu0 0
      %739 = vmatprep.subr.bf16.mxu0 0
      %740 = vmatpush1.bf16.msra.mxu0 0
      %741 = vmatprep.subr.bf16.mxu0 0
      %742 = vmatpush1.bf16.msra.mxu0 0
      %743 = vmatprep.subr.bf16.mxu0 0
      %744 = vmatpush1.bf16.msra.mxu0 0
      %745 = vmatprep.subr.bf16.mxu0 0
      %746 = vmatpush1.bf16.msra.mxu0 0
      %747 = vmatprep.subr.bf16.mxu0 0
      %748 = vmatpush1.bf16.msra.mxu0 0
      %749 = vmatprep.subr.bf16.mxu0 0
      %750 = vmatpush1.bf16.msra.mxu0 0
      %751 = vmatprep.subr.bf16.mxu0 0
      %752 = vmatpush1.bf16.msra.mxu0 0
      %753 = vmatprep.subr.bf16.mxu0 0
      %754 = vmatpush1.bf16.msra.mxu0 0
      %755 = vmatprep.mubr.bf16.mxu0 0
      %756 = vmatmul.mubr.bf16.gmra.mrb[0].mxu0 %v715
      %v757 = vpop.f32.mrb[0].mxu0
      %v758 = vadd.f32 0.0, %v757
      %v759 = vpop.f32.mrb[0].mxu0
      %v760 = vadd.f32 0.0, %v759
      %v761 = vpop.f32.mrb[0].mxu0
      %v762 = vpop.f32.mrb[0].mxu0
      %763 = vdwg.mxu0
      %v764 = vadd.f32 %v683, %v758
      %v765 = vadd.f32 %v684, %v760
      %v766 = vld [vmem:[%s164] sm:$0x3f]
      %s767 = scalar_lea.vmem %s1, 32
      %v768 = vld [vmem:[%s767] sm:$0xf]
      %v770 = vcombine.high %v766, %v766
      %v772 = vunpack.c.l.s4 1983009808
      %v773 = vunpack.c.0.s8 %v772
      %v774 = vlaneseq
      %v775 = vshrl.u32 %v774, 7
      %v776 = vsub.s32 %v773, %v775
      %v777 = vrot.slane %v766, %v776
      %v779 = vunpack.c.l.s4 1983009808
      %v780 = vunpack.c.0.s8 %v779
      %v781 = vlaneseq
      %v782 = vshrl.u32 %v781, 7
      %v783 = vsub.s32 %v780, %v782
      %v784 = vrot.slane %v770, %v783
      %v785 = vcombine.high %v777, %v777
      %786 = vrot.lane.b32.xlu0 %v777, 90
      %v787 = vpop.permute.xlu0 %786
      %788 = vrot.lane.b32.xlu0 %v785, 90
      %v789 = vpop.permute.xlu0 %788
      %790 = vrot.lane.b32.xlu0 %v784, 90
      %v791 = vpop.permute.xlu0 %790
      %vm792 = vcmask 736256
      %v793 = vsel %vm792, %v787, %v789
      %v794 = vsel %vm792, %v789, %v791
      %v796 = vsel %vm189, %v768, 0
      %v799 = vsel %vm193, %v793, 0
      %v802 = vsel %vm193, %v794, 0
      %804 = vmatprep.subr.bf16.mxu0 %v802
      %805 = vmatpush1.bf16.msra.mxu0 %v799
      %806 = vmatprep.subr.bf16.mxu0 0
      %807 = vmatpush1.bf16.msra.mxu0 0
      %808 = vmatprep.subr.bf16.mxu0 0
      %809 = vmatpush1.bf16.msra.mxu0 0
      %810 = vmatprep.subr.bf16.mxu0 0
      %811 = vmatpush1.bf16.msra.mxu0 0
      %812 = vmatprep.subr.bf16.mxu0 0
      %813 = vmatpush1.bf16.msra.mxu0 0
      %814 = vmatprep.subr.bf16.mxu0 0
      %815 = vmatpush1.bf16.msra.mxu0 0
      %816 = vmatprep.subr.bf16.mxu0 0
      %817 = vmatpush1.bf16.msra.mxu0 0
      %818 = vmatprep.subr.bf16.mxu0 0
      %819 = vmatpush1.bf16.msra.mxu0 0
      %820 = vmatprep.subr.bf16.mxu0 0
      %821 = vmatpush1.bf16.msra.mxu0 0
      %822 = vmatprep.subr.bf16.mxu0 0
      %823 = vmatpush1.bf16.msra.mxu0 0
      %824 = vmatprep.subr.bf16.mxu0 0
      %825 = vmatpush1.bf16.msra.mxu0 0
      %826 = vmatprep.subr.bf16.mxu0 0
      %827 = vmatpush1.bf16.msra.mxu0 0
      %828 = vmatprep.subr.bf16.mxu0 0
      %829 = vmatpush1.bf16.msra.mxu0 0
      %830 = vmatprep.subr.bf16.mxu0 0
      %831 = vmatpush1.bf16.msra.mxu0 0
      %832 = vmatprep.subr.bf16.mxu0 0
      %833 = vmatpush1.bf16.msra.mxu0 0
      %834 = vmatprep.subr.bf16.mxu0 0
      %835 = vmatpush1.bf16.msra.mxu0 0
      %836 = vmatprep.mubr.bf16.mxu0 0
      %837 = vmatmul.mubr.bf16.gmra.mrb[0].mxu0 %v796
      %v838 = vpop.f32.mrb[0].mxu0
      %v839 = vadd.f32 0.0, %v838
      %v840 = vpop.f32.mrb[0].mxu0
      %v841 = vadd.f32 0.0, %v840
      %v842 = vpop.f32.mrb[0].mxu0
      %v843 = vpop.f32.mrb[0].mxu0
      %844 = vdwg.mxu0
      %v845 = vadd.f32 %v764, %v839
      %v846 = vadd.f32 %v765, %v841
      %v847 = vld [vmem:[%s2] sm:$0x3]
      %v849 = vlaneseq
      %v850 = vshrl.u32 %v849, 7
      %v851 = vsub.s32 0, %v850
      %v852 = vrot.slane %v847, %v851
      %v853 = vlaneseq
      %v854 = vshrl.u32 %v853, 7
      %v855 = vsub.s32 1, %v854
      %v856 = vrot.slane %v847, %v855
      %v859 = vmul.f32 %v845, %v852
      %v860 = vmul.f32 %v846, %v856
      %vm861 = vcmask 1014784
      %v862 = vsel %vm861, %v860, 0.0
      %v863 = vadd.f32 %v859, %v862
      %864 = vadd.xlane.f32.xlu0 %v863
      %v865 = vpop.xlane.xlu0 %864
      %v866 = vadd.f32 %v865, 0.0
      %v867 = vmul.f32 %v859, %v859
      %v868 = vmul.f32 %v860, %v860
      %v869 = vsel %vm861, %v868, 0.0
      %v870 = vadd.f32 %v867, %v869
      %871 = vadd.xlane.f32.xlu0 %v870
      %v872 = vpop.xlane.xlu0 %871
      %v873 = vadd.f32 %v872, 0.0
      %v874 = vld [vmem:[%s164 + $0x2] sm:$0xf]
      %v877 = vunpack.c.l.s4 1983009808
      %v878 = vunpack.c.0.s8 %v877
      %v879 = vlaneseq
      %v880 = vshrl.u32 %v879, 7
      %v881 = vsub.s32 %v878, %v880
      %v882 = vrot.slane %v874, %v881
      %v883 = vcombine.high %v882, %v882
      %884 = vrot.lane.b32.xlu0 %v882, 3
      %v885 = vpop.permute.xlu0 %884
      %886 = vrot.lane.b32.xlu0 %v883, 3
      %v887 = vpop.permute.xlu0 %886
      %vm888 = vcmask 23552
      %v889 = vsel %vm888, %v885, %v887
      %v891 = vsel %vm193, %v889, 0
      %893 = vmatprep.subr.bf16.mxu0 0
      %894 = vmatpush1.bf16.msra.mxu0 %v891
      %895 = vmatprep.subr.bf16.mxu0 0
      %896 = vmatpush1.bf16.msra.mxu0 0
      %897 = vmatprep.subr.bf16.mxu0 0
      %898 = vmatpush1.bf16.msra.mxu0 0
      %899 = vmatprep.subr.bf16.mxu0 0
      %900 = vmatpush1.bf16.msra.mxu0 0
      %901 = vmatprep.subr.bf16.mxu0 0
      %902 = vmatpush1.bf16.msra.mxu0 0
      %903 = vmatprep.subr.bf16.mxu0 0
      %904 = vmatpush1.bf16.msra.mxu0 0
      %905 = vmatprep.subr.bf16.mxu0 0
      %906 = vmatpush1.bf16.msra.mxu0 0
      %907 = vmatprep.subr.bf16.mxu0 0
      %908 = vmatpush1.bf16.msra.mxu0 0
      %909 = vmatprep.subr.bf16.mxu0 0
      %910 = vmatpush1.bf16.msra.mxu0 0
      %911 = vmatprep.subr.bf16.mxu0 0
      %912 = vmatpush1.bf16.msra.mxu0 0
      %913 = vmatprep.subr.bf16.mxu0 0
      %914 = vmatpush1.bf16.msra.mxu0 0
      %915 = vmatprep.subr.bf16.mxu0 0
      %916 = vmatpush1.bf16.msra.mxu0 0
      %917 = vmatprep.subr.bf16.mxu0 0
      %918 = vmatpush1.bf16.msra.mxu0 0
      %919 = vmatprep.subr.bf16.mxu0 0
      %920 = vmatpush1.bf16.msra.mxu0 0
      %921 = vmatprep.subr.bf16.mxu0 0
      %922 = vmatpush1.bf16.msra.mxu0 0
      %923 = vmatprep.subr.bf16.mxu0 0
      %924 = vmatpush1.bf16.msra.mxu0 0
      %925 = vmatprep.mubr.bf16.mxu0 0
      %926 = vmatmul.mubr.bf16.gmra.mrb[0].mxu0 %v191
      %v927 = vpop.f32.mrb[0].mxu0
      %v928 = vadd.f32 0.0, %v927
      %v929 = vpop.f32.mrb[0].mxu0
      %v930 = vpop.f32.mrb[0].mxu0
      %v931 = vpop.f32.mrb[0].mxu0
      %932 = vdwg.mxu0
      %933 = vrot.lane.b32.xlu0 %v882, 4
      %v934 = vpop.permute.xlu0 %933
      %935 = vrot.lane.b32.xlu0 %v883, 4
      %v936 = vpop.permute.xlu0 %935
      %vm937 = vcmask 31744
      %v938 = vsel %vm937, %v934, %v936
      %v940 = vsel %vm193, %v938, 0
      %942 = vmatprep.subr.bf16.mxu0 0
      %943 = vmatpush1.bf16.msra.mxu0 %v940
      %944 = vmatprep.subr.bf16.mxu0 0
      %945 = vmatpush1.bf16.msra.mxu0 0
      %946 = vmatprep.subr.bf16.mxu0 0
      %947 = vmatpush1.bf16.msra.mxu0 0
      %948 = vmatprep.subr.bf16.mxu0 0
      %949 = vmatpush1.bf16.msra.mxu0 0
      %950 = vmatprep.subr.bf16.mxu0 0
      %951 = vmatpush1.bf16.msra.mxu0 0
      %952 = vmatprep.subr.bf16.mxu0 0
      %953 = vmatpush1.bf16.msra.mxu0 0
      %954 = vmatprep.subr.bf16.mxu0 0
      %955 = vmatpush1.bf16.msra.mxu0 0
      %956 = vmatprep.subr.bf16.mxu0 0
      %957 = vmatpush1.bf16.msra.mxu0 0
      %958 = vmatprep.subr.bf16.mxu0 0
      %959 = vmatpush1.bf16.msra.mxu0 0
      %960 = vmatprep.subr.bf16.mxu0 0
      %961 = vmatpush1.bf16.msra.mxu0 0
      %962 = vmatprep.subr.bf16.mxu0 0
      %963 = vmatpush1.bf16.msra.mxu0 0
      %964 = vmatprep.subr.bf16.mxu0 0
      %965 = vmatpush1.bf16.msra.mxu0 0
      %966 = vmatprep.subr.bf16.mxu0 0
      %967 = vmatpush1.bf16.msra.mxu0 0
      %968 = vmatprep.subr.bf16.mxu0 0
      %969 = vmatpush1.bf16.msra.mxu0 0
      %970 = vmatprep.subr.bf16.mxu0 0
      %971 = vmatpush1.bf16.msra.mxu0 0
      %972 = vmatprep.subr.bf16.mxu0 0
      %973 = vmatpush1.bf16.msra.mxu0 0
      %974 = vmatprep.mubr.bf16.mxu0 0
      %975 = vmatmul.mubr.bf16.gmra.mrb[0].mxu0 %v242
      %v976 = vpop.f32.mrb[0].mxu0
      %v977 = vadd.f32 %v928, %v976
      %v978 = vpop.f32.mrb[0].mxu0
      %v979 = vpop.f32.mrb[0].mxu0
      %v980 = vpop.f32.mrb[0].mxu0
      %981 = vdwg.mxu0
      %v982 = vld [vmem:[%s164 + $0x2] sm:$0xf]
      %v985 = vunpack.c.l.s4 1983009808
      %v986 = vunpack.c.0.s8 %v985
      %v987 = vlaneseq
      %v988 = vshrl.u32 %v987, 7
      %v989 = vsub.s32 %v986, %v988
      %v990 = vrot.slane %v982, %v989
      %v991 = vcombine.high %v990, %v990
      %992 = vrot.lane.b32.xlu0 %v990, 2
      %v993 = vpop.permute.xlu0 %992
      %994 = vrot.lane.b32.xlu0 %v991, 2
      %v995 = vpop.permute.xlu0 %994
      %vm996 = vcmask 15360
      %v997 = vsel %vm996, %v993, %v995
      %v999 = vsel %vm193, %v997, 0
      %1001 = vmatprep.subr.bf16.mxu0 0
      %1002 = vmatpush1.bf16.msra.mxu0 %v999
      %1003 = vmatprep.subr.bf16.mxu0 0
      %1004 = vmatpush1.bf16.msra.mxu0 0
      %1005 = vmatprep.subr.bf16.mxu0 0
      %1006 = vmatpush1.bf16.msra.mxu0 0
      %1007 = vmatprep.subr.bf16.mxu0 0
      %1008 = vmatpush1.bf16.msra.mxu0 0
      %1009 = vmatprep.subr.bf16.mxu0 0
      %1010 = vmatpush1.bf16.msra.mxu0 0
      %1011 = vmatprep.subr.bf16.mxu0 0
      %1012 = vmatpush1.bf16.msra.mxu0 0
      %1013 = vmatprep.subr.bf16.mxu0 0
      %1014 = vmatpush1.bf16.msra.mxu0 0
      %1015 = vmatprep.subr.bf16.mxu0 0
      %1016 = vmatpush1.bf16.msra.mxu0 0
      %1017 = vmatprep.subr.bf16.mxu0 0
      %1018 = vmatpush1.bf16.msra.mxu0 0
      %1019 = vmatprep.subr.bf16.mxu0 0
      %1020 = vmatpush1.bf16.msra.mxu0 0
      %1021 = vmatprep.subr.bf16.mxu0 0
      %1022 = vmatpush1.bf16.msra.mxu0 0
      %1023 = vmatprep.subr.bf16.mxu0 0
      %1024 = vmatpush1.bf16.msra.mxu0 0
      %1025 = vmatprep.subr.bf16.mxu0 0
      %1026 = vmatpush1.bf16.msra.mxu0 0
      %1027 = vmatprep.subr.bf16.mxu0 0
      %1028 = vmatpush1.bf16.msra.mxu0 0
      %1029 = vmatprep.subr.bf16.mxu0 0
      %1030 = vmatpush1.bf16.msra.mxu0 0
      %1031 = vmatprep.subr.bf16.mxu0 0
      %1032 = vmatpush1.bf16.msra.mxu0 0
      %1033 = vmatprep.mubr.bf16.mxu0 0
      %1034 = vmatmul.mubr.bf16.gmra.mrb[0].mxu0 %v310
      %v1035 = vpop.f32.mrb[0].mxu0
      %v1036 = vadd.f32 0.0, %v1035
      %v1037 = vpop.f32.mrb[0].mxu0
      %v1038 = vpop.f32.mrb[0].mxu0
      %v1039 = vpop.f32.mrb[0].mxu0
      %1040 = vdwg.mxu0
      %v1041 = vadd.f32 %v977, %v1036
      %v1042 = vld [vmem:[%s164 + $0x4] sm:$0x3]
      %v1045 = vunpack.c.l.s4 1983009808
      %v1046 = vunpack.c.0.s8 %v1045
      %v1047 = vlaneseq
      %v1048 = vshrl.u32 %v1047, 7
      %v1049 = vsub.s32 %v1046, %v1048
      %v1050 = vrot.slane %v1042, %v1049
      %1051 = vrot.lane.b32.xlu0 %v1050, 114
      %v1052 = vpop.permute.xlu0 %1051
      %v1054 = vsel %vm193, %v1052, 0
      %1056 = vmatprep.subr.bf16.mxu0 0
      %1057 = vmatpush1.bf16.msra.mxu0 %v1054
      %1058 = vmatprep.subr.bf16.mxu0 0
      %1059 = vmatpush1.bf16.msra.mxu0 0
      %1060 = vmatprep.subr.bf16.mxu0 0
      %1061 = vmatpush1.bf16.msra.mxu0 0
      %1062 = vmatprep.subr.bf16.mxu0 0
      %1063 = vmatpush1.bf16.msra.mxu0 0
      %1064 = vmatprep.subr.bf16.mxu0 0
      %1065 = vmatpush1.bf16.msra.mxu0 0
      %1066 = vmatprep.subr.bf16.mxu0 0
      %1067 = vmatpush1.bf16.msra.mxu0 0
      %1068 = vmatprep.subr.bf16.mxu0 0
      %1069 = vmatpush1.bf16.msra.mxu0 0
      %1070 = vmatprep.subr.bf16.mxu0 0
      %1071 = vmatpush1.bf16.msra.mxu0 0
      %1072 = vmatprep.subr.bf16.mxu0 0
      %1073 = vmatpush1.bf16.msra.mxu0 0
      %1074 = vmatprep.subr.bf16.mxu0 0
      %1075 = vmatpush1.bf16.msra.mxu0 0
      %1076 = vmatprep.subr.bf16.mxu0 0
      %1077 = vmatpush1.bf16.msra.mxu0 0
      %1078 = vmatprep.subr.bf16.mxu0 0
      %1079 = vmatpush1.bf16.msra.mxu0 0
      %1080 = vmatprep.subr.bf16.mxu0 0
      %1081 = vmatpush1.bf16.msra.mxu0 0
      %1082 = vmatprep.subr.bf16.mxu0 0
      %1083 = vmatpush1.bf16.msra.mxu0 0
      %1084 = vmatprep.subr.bf16.mxu0 0
      %1085 = vmatpush1.bf16.msra.mxu0 0
      %1086 = vmatprep.subr.bf16.mxu0 0
      %1087 = vmatpush1.bf16.msra.mxu0 0
      %1088 = vmatprep.mubr.bf16.mxu0 0
      %1089 = vmatmul.mubr.bf16.gmra.mrb[0].mxu0 %v391
      %v1090 = vpop.f32.mrb[0].mxu0
      %v1091 = vadd.f32 0.0, %v1090
      %v1092 = vpop.f32.mrb[0].mxu0
      %v1093 = vpop.f32.mrb[0].mxu0
      %v1094 = vpop.f32.mrb[0].mxu0
      %1095 = vdwg.mxu0
      %v1096 = vadd.f32 %v1041, %v1091
      %v1097 = vld [vmem:[%s164 + $0x4] sm:$0x3]
      %v1100 = vunpack.c.l.s4 1983009808
      %v1101 = vunpack.c.0.s8 %v1100
      %v1102 = vlaneseq
      %v1103 = vshrl.u32 %v1102, 7
      %v1104 = vsub.s32 %v1101, %v1103
      %v1105 = vrot.slane %v1097, %v1104
      %1106 = vrot.lane.b32.xlu0 %v1105, 113
      %v1107 = vpop.permute.xlu0 %1106
      %v1109 = vsel %vm193, %v1107, 0
      %1111 = vmatprep.subr.bf16.mxu0 0
      %1112 = vmatpush1.bf16.msra.mxu0 %v1109
      %1113 = vmatprep.subr.bf16.mxu0 0
      %1114 = vmatpush1.bf16.msra.mxu0 0
      %1115 = vmatprep.subr.bf16.mxu0 0
      %1116 = vmatpush1.bf16.msra.mxu0 0
      %1117 = vmatprep.subr.bf16.mxu0 0
      %1118 = vmatpush1.bf16.msra.mxu0 0
      %1119 = vmatprep.subr.bf16.mxu0 0
      %1120 = vmatpush1.bf16.msra.mxu0 0
      %1121 = vmatprep.subr.bf16.mxu0 0
      %1122 = vmatpush1.bf16.msra.mxu0 0
      %1123 = vmatprep.subr.bf16.mxu0 0
      %1124 = vmatpush1.bf16.msra.mxu0 0
      %1125 = vmatprep.subr.bf16.mxu0 0
      %1126 = vmatpush1.bf16.msra.mxu0 0
      %1127 = vmatprep.subr.bf16.mxu0 0
      %1128 = vmatpush1.bf16.msra.mxu0 0
      %1129 = vmatprep.subr.bf16.mxu0 0
      %1130 = vmatpush1.bf16.msra.mxu0 0
      %1131 = vmatprep.subr.bf16.mxu0 0
      %1132 = vmatpush1.bf16.msra.mxu0 0
      %1133 = vmatprep.subr.bf16.mxu0 0
      %1134 = vmatpush1.bf16.msra.mxu0 0
      %1135 = vmatprep.subr.bf16.mxu0 0
      %1136 = vmatpush1.bf16.msra.mxu0 0
      %1137 = vmatprep.subr.bf16.mxu0 0
      %1138 = vmatpush1.bf16.msra.mxu0 0
      %1139 = vmatprep.subr.bf16.mxu0 0
      %1140 = vmatpush1.bf16.msra.mxu0 0
      %1141 = vmatprep.subr.bf16.mxu0 0
      %1142 = vmatpush1.bf16.msra.mxu0 0
      %1143 = vmatprep.mubr.bf16.mxu0 0
      %1144 = vmatmul.mubr.bf16.gmra.mrb[0].mxu0 %v472
      %v1145 = vpop.f32.mrb[0].mxu0
      %v1146 = vadd.f32 0.0, %v1145
      %v1147 = vpop.f32.mrb[0].mxu0
      %v1148 = vpop.f32.mrb[0].mxu0
      %v1149 = vpop.f32.mrb[0].mxu0
      %1150 = vdwg.mxu0
      %v1151 = vadd.f32 %v1096, %v1146
      %v1152 = vld [vmem:[%s164 + $0x4] sm:$0x3]
      %v1155 = vunpack.c.l.s4 1983009808
      %v1156 = vunpack.c.0.s8 %v1155
      %v1157 = vlaneseq
      %v1158 = vshrl.u32 %v1157, 7
      %v1159 = vsub.s32 %v1156, %v1158
      %v1160 = vrot.slane %v1152, %v1159
      %1161 = vrot.lane.b32.xlu0 %v1160, 112
      %v1162 = vpop.permute.xlu0 %1161
      %v1164 = vsel %vm193, %v1162, 0
      %1166 = vmatprep.subr.bf16.mxu0 0
      %1167 = vmatpush1.bf16.msra.mxu0 %v1164
      %1168 = vmatprep.subr.bf16.mxu0 0
      %1169 = vmatpush1.bf16.msra.mxu0 0
      %1170 = vmatprep.subr.bf16.mxu0 0
      %1171 = vmatpush1.bf16.msra.mxu0 0
      %1172 = vmatprep.subr.bf16.mxu0 0
      %1173 = vmatpush1.bf16.msra.mxu0 0
      %1174 = vmatprep.subr.bf16.mxu0 0
      %1175 = vmatpush1.bf16.msra.mxu0 0
      %1176 = vmatprep.subr.bf16.mxu0 0
      %1177 = vmatpush1.bf16.msra.mxu0 0
      %1178 = vmatprep.subr.bf16.mxu0 0
      %1179 = vmatpush1.bf16.msra.mxu0 0
      %1180 = vmatprep.subr.bf16.mxu0 0
      %1181 = vmatpush1.bf16.msra.mxu0 0
      %1182 = vmatprep.subr.bf16.mxu0 0
      %1183 = vmatpush1.bf16.msra.mxu0 0
      %1184 = vmatprep.subr.bf16.mxu0 0
      %1185 = vmatpush1.bf16.msra.mxu0 0
      %1186 = vmatprep.subr.bf16.mxu0 0
      %1187 = vmatpush1.bf16.msra.mxu0 0
      %1188 = vmatprep.subr.bf16.mxu0 0
      %1189 = vmatpush1.bf16.msra.mxu0 0
      %1190 = vmatprep.subr.bf16.mxu0 0
      %1191 = vmatpush1.bf16.msra.mxu0 0
      %1192 = vmatprep.subr.bf16.mxu0 0
      %1193 = vmatpush1.bf16.msra.mxu0 0
      %1194 = vmatprep.subr.bf16.mxu0 0
      %1195 = vmatpush1.bf16.msra.mxu0 0
      %1196 = vmatprep.subr.bf16.mxu0 0
      %1197 = vmatpush1.bf16.msra.mxu0 0
      %1198 = vmatprep.mubr.bf16.mxu0 0
      %1199 = vmatmul.mubr.bf16.gmra.mrb[0].mxu0 %v553
      %v1200 = vpop.f32.mrb[0].mxu0
      %v1201 = vadd.f32 0.0, %v1200
      %v1202 = vpop.f32.mrb[0].mxu0
      %v1203 = vpop.f32.mrb[0].mxu0
      %v1204 = vpop.f32.mrb[0].mxu0
      %1205 = vdwg.mxu0
      %v1206 = vadd.f32 %v1151, %v1201
      %v1207 = vld [vmem:[%s164 + $0x4] sm:$0x3]
      %v1210 = vunpack.c.l.s4 1983009808
      %v1211 = vunpack.c.0.s8 %v1210
      %v1212 = vlaneseq
      %v1213 = vshrl.u32 %v1212, 7
      %v1214 = vsub.s32 %v1211, %v1213
      %v1215 = vrot.slane %v1207, %v1214
      %1216 = vrot.lane.b32.xlu0 %v1215, 96
      %v1217 = vpop.permute.xlu0 %1216
      %v1219 = vsel %vm193, %v1217, 0
      %1221 = vmatprep.subr.bf16.mxu0 0
      %1222 = vmatpush1.bf16.msra.mxu0 %v1219
      %1223 = vmatprep.subr.bf16.mxu0 0
      %1224 = vmatpush1.bf16.msra.mxu0 0
      %1225 = vmatprep.subr.bf16.mxu0 0
      %1226 = vmatpush1.bf16.msra.mxu0 0
      %1227 = vmatprep.subr.bf16.mxu0 0
      %1228 = vmatpush1.bf16.msra.mxu0 0
      %1229 = vmatprep.subr.bf16.mxu0 0
      %1230 = vmatpush1.bf16.msra.mxu0 0
      %1231 = vmatprep.subr.bf16.mxu0 0
      %1232 = vmatpush1.bf16.msra.mxu0 0
      %1233 = vmatprep.subr.bf16.mxu0 0
      %1234 = vmatpush1.bf16.msra.mxu0 0
      %1235 = vmatprep.subr.bf16.mxu0 0
      %1236 = vmatpush1.bf16.msra.mxu0 0
      %1237 = vmatprep.subr.bf16.mxu0 0
      %1238 = vmatpush1.bf16.msra.mxu0 0
      %1239 = vmatprep.subr.bf16.mxu0 0
      %1240 = vmatpush1.bf16.msra.mxu0 0
      %1241 = vmatprep.subr.bf16.mxu0 0
      %1242 = vmatpush1.bf16.msra.mxu0 0
      %1243 = vmatprep.subr.bf16.mxu0 0
      %1244 = vmatpush1.bf16.msra.mxu0 0
      %1245 = vmatprep.subr.bf16.mxu0 0
      %1246 = vmatpush1.bf16.msra.mxu0 0
      %1247 = vmatprep.subr.bf16.mxu0 0
      %1248 = vmatpush1.bf16.msra.mxu0 0
      %1249 = vmatprep.subr.bf16.mxu0 0
      %1250 = vmatpush1.bf16.msra.mxu0 0
      %1251 = vmatprep.subr.bf16.mxu0 0
      %1252 = vmatpush1.bf16.msra.mxu0 0
      %1253 = vmatprep.mubr.bf16.mxu0 0
      %1254 = vmatmul.mubr.bf16.gmra.mrb[0].mxu0 %v634
      %v1255 = vpop.f32.mrb[0].mxu0
      %v1256 = vadd.f32 0.0, %v1255
      %v1257 = vpop.f32.mrb[0].mxu0
      %v1258 = vpop.f32.mrb[0].mxu0
      %v1259 = vpop.f32.mrb[0].mxu0
      %1260 = vdwg.mxu0
      %v1261 = vadd.f32 %v1206, %v1256
      %v1262 = vld [vmem:[%s164 + $0x4] sm:$0x3]
      %v1265 = vunpack.c.l.s4 1983009808
      %v1266 = vunpack.c.0.s8 %v1265
      %v1267 = vlaneseq
      %v1268 = vshrl.u32 %v1267, 7
      %v1269 = vsub.s32 %v1266, %v1268
      %v1270 = vrot.slane %v1262, %v1269
      %1271 = vrot.lane.b32.xlu0 %v1270, 95
      %v1272 = vpop.permute.xlu0 %1271
      %v1274 = vsel %vm193, %v1272, 0
      %1276 = vmatprep.subr.bf16.mxu0 0
      %1277 = vmatpush1.bf16.msra.mxu0 %v1274
      %1278 = vmatprep.subr.bf16.mxu0 0
      %1279 = vmatpush1.bf16.msra.mxu0 0
      %1280 = vmatprep.subr.bf16.mxu0 0
      %1281 = vmatpush1.bf16.msra.mxu0 0
      %1282 = vmatprep.subr.bf16.mxu0 0
      %1283 = vmatpush1.bf16.msra.mxu0 0
      %1284 = vmatprep.subr.bf16.mxu0 0
      %1285 = vmatpush1.bf16.msra.mxu0 0
      %1286 = vmatprep.subr.bf16.mxu0 0
      %1287 = vmatpush1.bf16.msra.mxu0 0
      %1288 = vmatprep.subr.bf16.mxu0 0
      %1289 = vmatpush1.bf16.msra.mxu0 0
      %1290 = vmatprep.subr.bf16.mxu0 0
      %1291 = vmatpush1.bf16.msra.mxu0 0
      %1292 = vmatprep.subr.bf16.mxu0 0
      %1293 = vmatpush1.bf16.msra.mxu0 0
      %1294 = vmatprep.subr.bf16.mxu0 0
      %1295 = vmatpush1.bf16.msra.mxu0 0
      %1296 = vmatprep.subr.bf16.mxu0 0
      %1297 = vmatpush1.bf16.msra.mxu0 0
      %1298 = vmatprep.subr.bf16.mxu0 0
      %1299 = vmatpush1.bf16.msra.mxu0 0
      %1300 = vmatprep.subr.bf16.mxu0 0
      %1301 = vmatpush1.bf16.msra.mxu0 0
      %1302 = vmatprep.subr.bf16.mxu0 0
      %1303 = vmatpush1.bf16.msra.mxu0 0
      %1304 = vmatprep.subr.bf16.mxu0 0
      %1305 = vmatpush1.bf16.msra.mxu0 0
      %1306 = vmatprep.subr.bf16.mxu0 0
      %1307 = vmatpush1.bf16.msra.mxu0 0
      %1308 = vmatprep.mubr.bf16.mxu0 0
      %1309 = vmatmul.mubr.bf16.gmra.mrb[0].mxu0 %v715
      %v1310 = vpop.f32.mrb[0].mxu0
      %v1311 = vadd.f32 0.0, %v1310
      %v1312 = vpop.f32.mrb[0].mxu0
      %v1313 = vpop.f32.mrb[0].mxu0
      %v1314 = vpop.f32.mrb[0].mxu0
      %1315 = vdwg.mxu0
      %v1316 = vadd.f32 %v1261, %v1311
      %v1317 = vld [vmem:[%s164 + $0x4] sm:$0x3]
      %v1320 = vunpack.c.l.s4 1983009808
      %v1321 = vunpack.c.0.s8 %v1320
      %v1322 = vlaneseq
      %v1323 = vshrl.u32 %v1322, 7
      %v1324 = vsub.s32 %v1321, %v1323
      %v1325 = vrot.slane %v1317, %v1324
      %1326 = vrot.lane.b32.xlu0 %v1325, 94
      %v1327 = vpop.permute.xlu0 %1326
      %v1329 = vsel %vm193, %v1327, 0
      %1331 = vmatprep.subr.bf16.mxu0 0
      %1332 = vmatpush1.bf16.msra.mxu0 %v1329
      %1333 = vmatprep.subr.bf16.mxu0 0
      %1334 = vmatpush1.bf16.msra.mxu0 0
      %1335 = vmatprep.subr.bf16.mxu0 0
      %1336 = vmatpush1.bf16.msra.mxu0 0
      %1337 = vmatprep.subr.bf16.mxu0 0
      %1338 = vmatpush1.bf16.msra.mxu0 0
      %1339 = vmatprep.subr.bf16.mxu0 0
      %1340 = vmatpush1.bf16.msra.mxu0 0
      %1341 = vmatprep.subr.bf16.mxu0 0
      %1342 = vmatpush1.bf16.msra.mxu0 0
      %1343 = vmatprep.subr.bf16.mxu0 0
      %1344 = vmatpush1.bf16.msra.mxu0 0
      %1345 = vmatprep.subr.bf16.mxu0 0
      %1346 = vmatpush1.bf16.msra.mxu0 0
      %1347 = vmatprep.subr.bf16.mxu0 0
      %1348 = vmatpush1.bf16.msra.mxu0 0
      %1349 = vmatprep.subr.bf16.mxu0 0
      %1350 = vmatpush1.bf16.msra.mxu0 0
      %1351 = vmatprep.subr.bf16.mxu0 0
      %1352 = vmatpush1.bf16.msra.mxu0 0
      %1353 = vmatprep.subr.bf16.mxu0 0
      %1354 = vmatpush1.bf16.msra.mxu0 0
      %1355 = vmatprep.subr.bf16.mxu0 0
      %1356 = vmatpush1.bf16.msra.mxu0 0
      %1357 = vmatprep.subr.bf16.mxu0 0
      %1358 = vmatpush1.bf16.msra.mxu0 0
      %1359 = vmatprep.subr.bf16.mxu0 0
      %1360 = vmatpush1.bf16.msra.mxu0 0
      %1361 = vmatprep.subr.bf16.mxu0 0
      %1362 = vmatpush1.bf16.msra.mxu0 0
      %1363 = vmatprep.mubr.bf16.mxu0 0
      %1364 = vmatmul.mubr.bf16.gmra.mrb[0].mxu0 %v796
      %v1365 = vpop.f32.mrb[0].mxu0
      %v1366 = vadd.f32 0.0, %v1365
      %v1367 = vpop.f32.mrb[0].mxu0
      %v1368 = vpop.f32.mrb[0].mxu0
      %v1369 = vpop.f32.mrb[0].mxu0
      %1370 = vdwg.mxu0
      %v1371 = vadd.f32 %v1316, %v1366
      %v1372 = vld [vmem:[%s2 + $0x1] sm:$0x3]
      %v1374 = vlaneseq
      %v1375 = vshrl.u32 %v1374, 7
      %v1376 = vsub.s32 0, %v1375
      %v1377 = vrot.slane %v1372, %v1376
      %v1378 = vlaneseq
      %v1379 = vshrl.u32 %v1378, 7
      %v1380 = vsub.s32 1, %v1379
      %v1381 = vrot.slane %v1372, %v1380
      %1382 = vrot.lane.b32.xlu0 %v1377, 4
      %v1383 = vpop.permute.xlu0 %1382
      %1384 = vrot.lane.b32.xlu0 %v1381, 4
      %v1385 = vpop.permute.xlu0 %1384
      %v1386 = vsel %vm189, %v1383, %v1385
      %v1388 = vmul.f32 %v1371, %v1386
      %vm1389 = vcmask 293888
      %v1390 = vsel %vm1389, %v1388, 0.0
      %1391 = vadd.xlane.f32.xlu0 %v1390
      %v1392 = vpop.xlane.xlu0 %1391
      %v1393 = vadd.f32 %v866, %v1392
      %v1394 = vmul.f32 %v1388, %v1388
      %v1395 = vsel %vm1389, %v1394, 0.0
      %1396 = vadd.xlane.f32.xlu0 %v1395
      %v1397 = vpop.xlane.xlu0 %1396
      %v1398 = vadd.f32 %v873, %v1397
      %vm1399 = vcmask 7168
      %1400 = vst.msk [vmem:[%s168] sm:$0xff] %vm1399, %v1393
      %vm1401 = vcmask 15368
      %1402 = vst.msk [vmem:[%s168] sm:$0xff] %vm1401, %v1398
      %p1403 = scmp.lt.s32.totalorder %s14, 1
      %s1404 = scalar_select %p1403, %s14, 1
      %s1405 = smul.addr %s1404, 8
      %s1406 = scalar_lea.vmem %s3, %s1405
      // Predicated region
      $region33: #{conv2d_batchnorm.2} parent=31 // pred_check
        %p1407 = pneg %p100
      $region34: #{conv2d_batchnorm.2} parent=31 // pred_check_branch
        %1409 = sbr.rel (%p1407) target = $region36
      $region35: #{conv2d_batchnorm.2} parent=31 // pred_region
        _
      $region36: #{conv2d_batchnorm.2} parent=31 // pred_fallthru
        _
    $region32: #{conv2d_batchnorm.2} parent=5 // pred_fallthru
      _
    %p1410 = scmp.le.s32.totalorder 2, %s9
    // Predicated region
    $region37: #{conv2d_batchnorm.2} parent=5 // pred_check
      %p1411 = pneg %p1410
    $region38: #{conv2d_batchnorm.2} parent=5 // pred_check_branch
      %1413 = sbr.rel (%p1411) target = $region40
    $region39: #{conv2d_batchnorm.2} parent=5 // pred_region
      %s1414 = ssub.s32 %s9, 2
      // Predicated region
      $region41: #{conv2d_batchnorm.2} parent=39 // pred_check
        %p1415 = pneg %p106
      $region42: #{conv2d_batchnorm.2} parent=39 // pred_check_branch
        %1417 = sbr.rel (%p1415) target = $region44
      $region43: #{conv2d_batchnorm.2} parent=39 // pred_region
        %p1418 = scmp.lt.s32.totalorder %s15, 1
        %s1419 = scalar_select %p1418, %s15, 1
        %s1420 = smul.addr %s1419, 8
        %s1421 = scalar_lea.vmem %s3, %s1420
      $region44: #{conv2d_batchnorm.2} parent=39 // pred_fallthru
        _
    $region40: #{conv2d_batchnorm.2} parent=5 // pred_fallthru
      _
  $region6: #{conv2d_batchnorm.2} parent=0 // loop_footer
    %s13 = sadd.s32 1, %s9
  $region7: #{conv2d_batchnorm.2} parent=0 // loop_footer_branch
    %8 = sbr.rel target = $region3
  $region8: #{conv2d_batchnorm.2} parent=0 // loop_exit
    _

// kernel: conv2d_batchnorm.3
$region0: #{conv2d_batchnorm.3}
  #allocation0 [shape = 'u32[]', space=smem, size = 0x4, offset = 0x4, fixed_abs, tag = 'smem constant byte address 0x4 - core index']
  #allocation1 [shape = 'u32[144,128]{1,0:T(1,128)}', space=vmem, size = 0x12000, scoped, tag = 'internal scratch']
  %s0 = inlined_call_operand.vmem [shape: bf16[2,4,384], index: 0, kind: input, shape index: {}]
  %s1 = inlined_call_operand.vmem [shape: bf16[9,8,4], index: 1, kind: input, shape index: {}]
  %s2 = inlined_call_operand.vmem [shape: f32[8,1], index: 2, kind: input, shape index: {}]
  %s3 = inlined_call_operand.vmem [shape: f32[8,1], index: 3, kind: input, shape index: {}]
  %s4 = inlined_call_operand.hbm [shape: f32[2,8,16,16], index: 4, kind: output, shape index: {}]
  %s5 = sld [smem:[#allocation0]]
  $region49: #{conv2d_batchnorm.3} parent=0
    _
  %s7 = ssub.s32 1, %s5
  %s8 = scalar_select 0, %s7, %s5
  $region1: #{conv2d_batchnorm.3} parent=0
    #allocation2 [shape = 'u8[131072]{0}', space=vmem, size = 0x20000, scoped, tag = 'output window, operand 0']
    #allocation3 [shape = 's32[2]{0}', space=sflag, size = 0x8, scoped, tag = 'scoped memory for conv2d_batchnorm.3']
    %9 = vsyncpa [#allocation3], 0
    %s10 = scalar_lea.sflag [#allocation3], 1
    %11 = vsyncpa %s10, 0
    loop: start=0, step=1, limit=4
    $region2: #{conv2d_batchnorm.3} parent=1 // loop_pre_header
      _
    $region3: #{conv2d_batchnorm.3} parent=1 // loop_header
      %s13 = sphi 0, %s17
      %p14 = scmp.ge.s32.totalorder %s13, 4
      %s23 = sphi 0, %s25
      %s26 = sphi 0, %s23
      %s27 = sphi 0, %s26
      %s43 = sphi 0, %s27
      %s47 = sphi 0, %s47
      %s49 = sphi 0, %s47
      %s50 = sphi 0, %s49
      %s64 = sphi 0, %s50
      %s68 = sphi 0, %s68
      %s70 = sphi 0, %s68
      %s71 = sphi 0, %s70
      %s85 = sphi 0, %s71
      %s89 = sphi 0, %s89
      %s91 = sphi 0, %s89
      %s92 = sphi 0, %s91
      %s106 = sphi 0, %s92
      %s112 = sphi 0, %s114
      %s115 = sphi 0, %s112
      %s116 = sphi 0, %s115
      %s132 = sphi 0, %s116
    $region4: #{conv2d_batchnorm.3} parent=1 // loop_header_branch
      %16 = sbr.rel (%p14) target = $region8
    $region5: #{conv2d_batchnorm.3} parent=1 // loop_body
      %s18 = ssub.s32 %s13, 1
      %s19 = ssub.s32 %s13, 2
      %s20 = sadd.s32 %s13, 1
      %s21 = ssub.s32 %s13, %s20
      %p22 = scmp.eq.s32.totalorder %s21, 0
      %s24 = sadd.s32 %s23, 1
      %s25 = scalar_select %p22, %s23, %s24
      %p28 = pneg %p22
      %p29 = scmp.eq.s32.totalorder %s13, 1
      %p30 = por %p28, %p29
      %p31 = scmp.ne.s32.totalorder %s23, %s26
      %p32 = scmp.eq.s32.totalorder %s13, 0
      %p33 = por %p31, %p32
      %p34 = scmp.ne.s32.totalorder %s23, %s26
      %p35 = scmp.eq.s32.totalorder %s18, 1
      %p36 = por %p34, %p35
      %p37 = scmp.ne.s32.totalorder %s26, %s27
      %p38 = scmp.eq.s32.totalorder %s18, 0
      %p39 = por %p37, %p38
      %p40 = scmp.ne.s32.totalorder %s26, %s27
      %p41 = scmp.eq.s32.totalorder %s19, 1
      %p42 = por %p40, %p41
      %p44 = scmp.ne.s32.totalorder %s27, %s43
      %p45 = scmp.eq.s32.totalorder %s19, 0
      %p46 = por %p44, %p45
      %s48 = sadd.s32 %s47, 1
      %p51 = scmp.eq.s32.totalorder %s13, 1
      %p52 = scmp.ne.s32.totalorder %s47, %s49
      %p53 = scmp.eq.s32.totalorder %s13, 0
      %p54 = por %p52, %p53
      %p55 = scmp.ne.s32.totalorder %s47, %s49
      %p56 = scmp.eq.s32.totalorder %s18, 1
      %p57 = por %p55, %p56
      %p58 = scmp.ne.s32.totalorder %s49, %s50
      %p59 = scmp.eq.s32.totalorder %s18, 0
      %p60 = por %p58, %p59
      %p61 = scmp.ne.s32.totalorder %s49, %s50
      %p62 = scmp.eq.s32.totalorder %s19, 1
      %p63 = por %p61, %p62
      %p65 = scmp.ne.s32.totalorder %s50, %s64
      %p66 = scmp.eq.s32.totalorder %s19, 0
      %p67 = por %p65, %p66
      %s69 = sadd.s32 %s68, 1
      %p72 = scmp.eq.s32.totalorder %s13, 1
      %p73 = scmp.ne.s32.totalorder %s68, %s70
      %p74 = scmp.eq.s32.totalorder %s13, 0
      %p75 = por %p73, %p74
      %p76 = scmp.ne.s32.totalorder %s68, %s70
      %p77 = scmp.eq.s32.totalorder %s18, 1
      %p78 = por %p76, %p77
      %p79 = scmp.ne.s32.totalorder %s70, %s71
      %p80 = scmp.eq.s32.totalorder %s18, 0
      %p81 = por %p79, %p80
      %p82 = scmp.ne.s32.totalorder %s70, %s71
      %p83 = scmp.eq.s32.totalorder %s19, 1
      %p84 = por %p82, %p83
      %p86 = scmp.ne.s32.totalorder %s71, %s85
      %p87 = scmp.eq.s32.totalorder %s19, 0
      %p88 = por %p86, %p87
      %s90 = sadd.s32 %s89, 1
      %p93 = scmp.eq.s32.totalorder %s13, 1
      %p94 = scmp.ne.s32.totalorder %s89, %s91
      %p95 = scmp.eq.s32.totalorder %s13, 0
      %p96 = por %p94, %p95
      %p97 = scmp.ne.s32.totalorder %s89, %s91
      %p98 = scmp.eq.s32.totalorder %s18, 1
      %p99 = por %p97, %p98
      %p100 = scmp.ne.s32.totalorder %s91, %s92
      %p101 = scmp.eq.s32.totalorder %s18, 0
      %p102 = por %p100, %p101
      %p103 = scmp.ne.s32.totalorder %s91, %s92
      %p104 = scmp.eq.s32.totalorder %s19, 1
      %p105 = por %p103, %p104
      %p107 = scmp.ne.s32.totalorder %s92, %s106
      %p108 = scmp.eq.s32.totalorder %s19, 0
      %p109 = por %p107, %p108
      %s110 = ssub.s32 %s13, %s20
      %p111 = scmp.eq.s32.totalorder %s110, 0
      %s113 = sadd.s32 %s112, 1
      %s114 = scalar_select %p111, %s112, %s113
      %p117 = pneg %p111
      %p118 = scmp.eq.s32.totalorder %s13, 1
      %p119 = por %p117, %p118
      %p120 = scmp.ne.s32.totalorder %s112, %s115
      %p121 = scmp.eq.s32.totalorder %s13, 0
      %p122 = por %p120, %p121
      %p123 = scmp.ne.s32.totalorder %s112, %s115
      %p124 = scmp.eq.s32.totalorder %s18, 1
      %p125 = por %p123, %p124
      %p126 = scmp.ne.s32.totalorder %s115, %s116
      %p127 = scmp.eq.s32.totalorder %s18, 0
      %p128 = por %p126, %p127
      %p129 = scmp.ne.s32.totalorder %s115, %s116
      %p130 = scmp.eq.s32.totalorder %s19, 1
      %p131 = por %p129, %p130
      %p133 = scmp.ne.s32.totalorder %s116, %s132
      %p134 = scmp.eq.s32.totalorder %s19, 0
      %p135 = por %p133, %p134
      %p136 = scmp.le.s32.totalorder 1, %s13
      %p137 = scmp.lt.s32.totalorder %s13, 3
      %p138 = pnand %p136, %p137
      %p139 = pneg %p138
      // Predicated region
      $region9: #{conv2d_batchnorm.3} parent=5 // pred_check
        _
      $region10: #{conv2d_batchnorm.3} parent=5 // pred_check_branch
        %141 = sbr.rel (%p138) target = $region12
      $region11: #{conv2d_batchnorm.3} parent=5 // pred_region
        %s142 = ssub.s32 %s13, 1
        // Predicated region
        $region13: #{conv2d_batchnorm.3} parent=11 // pred_check
          %p143 = pneg %p60
        $region14: #{conv2d_batchnorm.3} parent=11 // pred_check_branch
          %145 = sbr.rel (%p143) target = $region16
        $region15: #{conv2d_batchnorm.3} parent=11 // pred_region
          _
        $region16: #{conv2d_batchnorm.3} parent=11 // pred_fallthru
          _
        // Predicated region
        $region17: #{conv2d_batchnorm.3} parent=11 // pred_check
          %p146 = pneg %p81
        $region18: #{conv2d_batchnorm.3} parent=11 // pred_check_branch
          %148 = sbr.rel (%p146) target = $region20
        $region19: #{conv2d_batchnorm.3} parent=11 // pred_region
          _
        $region20: #{conv2d_batchnorm.3} parent=11 // pred_fallthru
          _
        // Predicated region
        $region21: #{conv2d_batchnorm.3} parent=11 // pred_check
          %p149 = pneg %p102
        $region22: #{conv2d_batchnorm.3} parent=11 // pred_check_branch
          %151 = sbr.rel (%p149) target = $region24
        $region23: #{conv2d_batchnorm.3} parent=11 // pred_region
          _
        $region24: #{conv2d_batchnorm.3} parent=11 // pred_fallthru
          _
      $region12: #{conv2d_batchnorm.3} parent=5 // pred_fallthru
        _
      %p152 = scmp.lt.s32.totalorder %s13, 2
      // Predicated region
      $region25: #{conv2d_batchnorm.3} parent=5 // pred_check
        %p153 = pneg %p152
      $region26: #{conv2d_batchnorm.3} parent=5 // pred_check_branch
        %155 = sbr.rel (%p153) target = $region28
      $region27: #{conv2d_batchnorm.3} parent=5 // pred_region
        // Predicated region
        $region29: #{conv2d_batchnorm.3} parent=27 // pred_check
          %p156 = pneg %p33
        $region30: #{conv2d_batchnorm.3} parent=27 // pred_check_branch
          %158 = sbr.rel (%p156) target = $region32
        $region31: #{conv2d_batchnorm.3} parent=27 // pred_region
          %p159 = scmp.lt.s32.totalorder %s13, 1
          %s160 = scalar_select %p159, %s13, 1
          %s161 = smul.addr %s160, 3
          %s162 = smul.addr %s161, 2
          %s163 = scalar_lea.vmem %s0, %s162
        $region32: #{conv2d_batchnorm.3} parent=27 // pred_fallthru
          _
      $region28: #{conv2d_batchnorm.3} parent=5 // pred_fallthru
        _
      %p164 = scmp.le.s32.totalorder 1, %s13
      %p165 = scmp.lt.s32.totalorder %s13, 3
      %p166 = pnand %p164, %p165
      %p167 = pneg %p166
      // Predicated region
      $region33: #{conv2d_batchnorm.3} parent=5 // pred_check
        _
      $region34: #{conv2d_batchnorm.3} parent=5 // pred_check_branch
        %169 = sbr.rel (%p166) target = $region36
      $region35: #{conv2d_batchnorm.3} parent=5 // pred_region
        %s170 = ssub.s32 %s13, 1
        %p171 = scmp.lt.s32.totalorder %s18, 1
        %s172 = scalar_select %p171, %s18, 1
        %s173 = smul.addr %s172, 3
        %s174 = smul.addr %s173, 2
        %s175 = scalar_lea.vmem %s0, %s174
        %p176 = pneg %p39
        %p177 = pneg %p36
        %p178 = pneg %p60
        %p179 = pneg %p57
        %p180 = pneg %p81
        %p181 = pneg %p78
        %p182 = pneg %p102
        %p183 = pneg %p99
        %p184 = pneg %p128
        %p185 = pneg %p125
        %s186 = sand.u32 %s115, 1
        %s187 = scalar_lea.sflag [#allocation3], %s186
        %s188 = sand.u32 %s115, 1
        %s189 = smul.addr %s188, 128
        %s190 = scalar_lea.vmem [#allocation2], %s189
        %p191 = scmp.lt.s32.totalorder %s18, 1
        %s192 = scalar_select %p191, %s18, 1
        %s193 = smul.addr %s192, 3
        %s194 = smul.addr %s193, 2
        %s195 = scalar_lea.vmem %s0, %s194
        %v197 = vld [vmem:[%s2] sm:$0xff]
        %v198 = vld [vmem:[%s3] sm:$0xff]
        %v199 = vld [vmem:[%s195] sm:$0xf]
        %v200 = vld [vmem:[%s1] sm:$0xf]
        %s201 = scalar_lea.vmem %s1, 4
        %v202 = vld [vmem:[%s201] sm:$0xf]
        %v205 = vunpack.c.l.s4 1983009808
        %v206 = vunpack.c.0.s8 %v205
        %v207 = vlaneseq
        %v208 = vshrl.u32 %v207, 7
        %v209 = vsub.s32 %v206, %v208
        %v210 = vrot.slane %v199, %v209
        %v211 = vcombine.high %v210, %v210
        %212 = vrot.lane.b32.xlu0 %v210, 127
        %v213 = vpop.permute.xlu0 %212
        %214 = vrot.lane.b32.xlu0 %v211, 127
        %v215 = vpop.permute.xlu0 %214
        %vm216 = vcmask 1039360
        %v217 = vsel %vm216, %v213, %v215
        %vm218 = vcmask 31744
        %v220 = vsel %vm218, %v202, 0
        %vm222 = vcmask 1041408
        %v224 = vsel %vm222, %v217, 0
        %v227 = vsel %vm222, %v215, 0
        %229 = vmatprep.subr.bf16.mxu0 %v227
        %230 = vmatpush1.bf16.msra.mxu0 %v224
        %231 = vmatprep.subr.bf16.mxu0 0
        %232 = vmatpush1.bf16.msra.mxu0 0
        %233 = vmatprep.subr.bf16.mxu0 0
        %234 = vmatpush1.bf16.msra.mxu0 0
        %235 = vmatprep.subr.bf16.mxu0 0
        %236 = vmatpush1.bf16.msra.mxu0 0
        %237 = vmatprep.subr.bf16.mxu0 0
        %238 = vmatpush1.bf16.msra.mxu0 0
        %239 = vmatprep.subr.bf16.mxu0 0
        %240 = vmatpush1.bf16.msra.mxu0 0
        %241 = vmatprep.subr.bf16.mxu0 0
        %242 = vmatpush1.bf16.msra.mxu0 0
        %243 = vmatprep.subr.bf16.mxu0 0
        %244 = vmatpush1.bf16.msra.mxu0 0
        %245 = vmatprep.subr.bf16.mxu0 0
        %246 = vmatpush1.bf16.msra.mxu0 0
        %247 = vmatprep.subr.bf16.mxu0 0
        %248 = vmatpush1.bf16.msra.mxu0 0
        %249 = vmatprep.subr.bf16.mxu0 0
        %250 = vmatpush1.bf16.msra.mxu0 0
        %251 = vmatprep.subr.bf16.mxu0 0
        %252 = vmatpush1.bf16.msra.mxu0 0
        %253 = vmatprep.subr.bf16.mxu0 0
        %254 = vmatpush1.bf16.msra.mxu0 0
        %255 = vmatprep.subr.bf16.mxu0 0
        %256 = vmatpush1.bf16.msra.mxu0 0
        %257 = vmatprep.subr.bf16.mxu0 0
        %258 = vmatpush1.bf16.msra.mxu0 0
        %259 = vmatprep.subr.bf16.mxu0 0
        %260 = vmatpush1.bf16.msra.mxu0 0
        %261 = vmatprep.mubr.bf16.mxu0 0
        %262 = vmatmul.mubr.bf16.gmra.mrb[0].mxu0 %v220
        %v263 = vpop.f32.mrb[0].mxu0
        %v264 = vadd.f32 0.0, %v263
        %v265 = vpop.f32.mrb[0].mxu0
        %v266 = vadd.f32 0.0, %v265
        %v267 = vpop.f32.mrb[0].mxu0
        %v268 = vpop.f32.mrb[0].mxu0
        %269 = vdwg.mxu0
        %v271 = vsel %vm218, %v200, 0
        %v274 = vsel %vm222, %v210, 0
        %v277 = vsel %vm222, %v211, 0
        %279 = vmatprep.subr.bf16.mxu0 %v277
        %280 = vmatpush1.bf16.msra.mxu0 %v274
        %281 = vmatprep.subr.bf16.mxu0 0
        %282 = vmatpush1.bf16.msra.mxu0 0
        %283 = vmatprep.subr.bf16.mxu0 0
        %284 = vmatpush1.bf16.msra.mxu0 0
        %285 = vmatprep.subr.bf16.mxu0 0
        %286 = vmatpush1.bf16.msra.mxu0 0
        %287 = vmatprep.subr.bf16.mxu0 0
        %288 = vmatpush1.bf16.msra.mxu0 0
        %289 = vmatprep.subr.bf16.mxu0 0
        %290 = vmatpush1.bf16.msra.mxu0 0
        %291 = vmatprep.subr.bf16.mxu0 0
        %292 = vmatpush1.bf16.msra.mxu0 0
        %293 = vmatprep.subr.bf16.mxu0 0
        %294 = vmatpush1.bf16.msra.mxu0 0
        %295 = vmatprep.subr.bf16.mxu0 0
        %296 = vmatpush1.bf16.msra.mxu0 0
        %297 = vmatprep.subr.bf16.mxu0 0
        %298 = vmatpush1.bf16.msra.mxu0 0
        %299 = vmatprep.subr.bf16.mxu0 0
        %300 = vmatpush1.bf16.msra.mxu0 0
        %301 = vmatprep.subr.bf16.mxu0 0
        %302 = vmatpush1.bf16.msra.mxu0 0
        %303 = vmatprep.subr.bf16.mxu0 0
        %304 = vmatpush1.bf16.msra.mxu0 0
        %305 = vmatprep.subr.bf16.mxu0 0
        %306 = vmatpush1.bf16.msra.mxu0 0
        %307 = vmatprep.subr.bf16.mxu0 0
        %308 = vmatpush1.bf16.msra.mxu0 0
        %309 = vmatprep.subr.bf16.mxu0 0
        %310 = vmatpush1.bf16.msra.mxu0 0
        %311 = vmatprep.mubr.bf16.mxu0 0
        %312 = vmatmul.mubr.bf16.gmra.mrb[0].mxu0 %v271
        %v313 = vpop.f32.mrb[0].mxu0
        %v314 = vadd.f32 %v264, %v313
        %v315 = vpop.f32.mrb[0].mxu0
        %v316 = vadd.f32 %v266, %v315
        %v317 = vpop.f32.mrb[0].mxu0
        %v318 = vpop.f32.mrb[0].mxu0
        %319 = vdwg.mxu0
        %v320 = vld [vmem:[%s195] sm:$0xf]
        %s321 = scalar_lea.vmem %s1, 8
        %v322 = vld [vmem:[%s321] sm:$0xf]
        %v325 = vunpack.c.l.s4 1983009808
        %v326 = vunpack.c.0.s8 %v325
        %v327 = vlaneseq
        %v328 = vshrl.u32 %v327, 7
        %v329 = vsub.s32 %v326, %v328
        %v330 = vrot.slane %v320, %v329
        %v331 = vcombine.high %v330, %v330
        %332 = vrot.lane.b32.xlu0 %v330, 126
        %v333 = vpop.permute.xlu0 %332
        %334 = vrot.lane.b32.xlu0 %v331, 126
        %v335 = vpop.permute.xlu0 %334
        %vm336 = vcmask 1031168
        %v337 = vsel %vm336, %v333, %v335
        %v339 = vsel %vm218, %v322, 0
        %v342 = vsel %vm222, %v337, 0
        %v345 = vsel %vm222, %v335, 0
        %347 = vmatprep.subr.bf16.mxu0 %v345
        %348 = vmatpush1.bf16.msra.mxu0 %v342
        %349 = vmatprep.subr.bf16.mxu0 0
        %350 = vmatpush1.bf16.msra.mxu0 0
        %351 = vmatprep.subr.bf16.mxu0 0
        %352 = vmatpush1.bf16.msra.mxu0 0
        %353 = vmatprep.subr.bf16.mxu0 0
        %354 = vmatpush1.bf16.msra.mxu0 0
        %355 = vmatprep.subr.bf16.mxu0 0
        %356 = vmatpush1.bf16.msra.mxu0 0
        %357 = vmatprep.subr.bf16.mxu0 0
        %358 = vmatpush1.bf16.msra.mxu0 0
        %359 = vmatprep.subr.bf16.mxu0 0
        %360 = vmatpush1.bf16.msra.mxu0 0
        %361 = vmatprep.subr.bf16.mxu0 0
        %362 = vmatpush1.bf16.msra.mxu0 0
        %363 = vmatprep.subr.bf16.mxu0 0
        %364 = vmatpush1.bf16.msra.mxu0 0
        %365 = vmatprep.subr.bf16.mxu0 0
        %366 = vmatpush1.bf16.msra.mxu0 0
        %367 = vmatprep.subr.bf16.mxu0 0
        %368 = vmatpush1.bf16.msra.mxu0 0
        %369 = vmatprep.subr.bf16.mxu0 0
        %370 = vmatpush1.bf16.msra.mxu0 0
        %371 = vmatprep.subr.bf16.mxu0 0
        %372 = vmatpush1.bf16.msra.mxu0 0
        %373 = vmatprep.subr.bf16.mxu0 0
        %374 = vmatpush1.bf16.msra.mxu0 0
        %375 = vmatprep.subr.bf16.mxu0 0
        %376 = vmatpush1.bf16.msra.mxu0 0
        %377 = vmatprep.subr.bf16.mxu0 0
        %378 = vmatpush1.bf16.msra.mxu0 0
        %379 = vmatprep.mubr.bf16.mxu0 0
        %380 = vmatmul.mubr.bf16.gmra.mrb[0].mxu0 %v339
        %v381 = vpop.f32.mrb[0].mxu0
        %v382 = vadd.f32 0.0, %v381
        %v383 = vpop.f32.mrb[0].mxu0
        %v384 = vadd.f32 0.0, %v383
        %v385 = vpop.f32.mrb[0].mxu0
        %v386 = vpop.f32.mrb[0].mxu0
        %387 = vdwg.mxu0
        %v388 = vadd.f32 %v314, %v382
        %v389 = vadd.f32 %v316, %v384
        %v390 = vld [vmem:[%s195] sm:$0x3f]
        %s391 = scalar_lea.vmem %s1, 12
        %v392 = vld [vmem:[%s391] sm:$0xf]
        %v394 = vcombine.high %v390, %v390
        %v396 = vunpack.c.l.s4 1983009808
        %v397 = vunpack.c.0.s8 %v396
        %v398 = vlaneseq
        %v399 = vshrl.u32 %v398, 7
        %v400 = vsub.s32 %v397, %v399
        %v401 = vrot.slane %v390, %v400
        %v403 = vunpack.c.l.s4 1983009808
        %v404 = vunpack.c.0.s8 %v403
        %v405 = vlaneseq
        %v406 = vshrl.u32 %v405, 7
        %v407 = vsub.s32 %v404, %v406
        %v408 = vrot.slane %v394, %v407
        %v409 = vcombine.high %v401, %v401
        %410 = vrot.lane.b32.xlu0 %v401, 110
        %v411 = vpop.permute.xlu0 %410
        %412 = vrot.lane.b32.xlu0 %v409, 110
        %v413 = vpop.permute.xlu0 %412
        %414 = vrot.lane.b32.xlu0 %v408, 110
        %v415 = vpop.permute.xlu0 %414
        %vm416 = vcmask 900096
        %v417 = vsel %vm416, %v411, %v413
        %v418 = vsel %vm416, %v413, %v415
        %v420 = vsel %vm218, %v392, 0
        %v423 = vsel %vm222, %v417, 0
        %v426 = vsel %vm222, %v418, 0
        %428 = vmatprep.subr.bf16.mxu0 %v426
        %429 = vmatpush1.bf16.msra.mxu0 %v423
        %430 = vmatprep.subr.bf16.mxu0 0
        %431 = vmatpush1.bf16.msra.mxu0 0
        %432 = vmatprep.subr.bf16.mxu0 0
        %433 = vmatpush1.bf16.msra.mxu0 0
        %434 = vmatprep.subr.bf16.mxu0 0
        %435 = vmatpush1.bf16.msra.mxu0 0
        %436 = vmatprep.subr.bf16.mxu0 0
        %437 = vmatpush1.bf16.msra.mxu0 0
        %438 = vmatprep.subr.bf16.mxu0 0
        %439 = vmatpush1.bf16.msra.mxu0 0
        %440 = vmatprep.subr.bf16.mxu0 0
        %441 = vmatpush1.bf16.msra.mxu0 0
        %442 = vmatprep.subr.bf16.mxu0 0
        %443 = vmatpush1.bf16.msra.mxu0 0
        %444 = vmatprep.subr.bf16.mxu0 0
        %445 = vmatpush1.bf16.msra.mxu0 0
        %446 = vmatprep.subr.bf16.mxu0 0
        %447 = vmatpush1.bf16.msra.mxu0 0
        %448 = vmatprep.subr.bf16.mxu0 0
        %449 = vmatpush1.bf16.msra.mxu0 0
        %450 = vmatprep.subr.bf16.mxu0 0
        %451 = vmatpush1.bf16.msra.mxu0 0
        %452 = vmatprep.subr.bf16.mxu0 0
        %453 = vmatpush1.bf16.msra.mxu0 0
        %454 = vmatprep.subr.bf16.mxu0 0
        %455 = vmatpush1.bf16.msra.mxu0 0
        %456 = vmatprep.subr.bf16.mxu0 0
        %457 = vmatpush1.bf16.msra.mxu0 0
        %458 = vmatprep.subr.bf16.mxu0 0
        %459 = vmatpush1.bf16.msra.mxu0 0
        %460 = vmatprep.mubr.bf16.mxu0 0
        %461 = vmatmul.mubr.bf16.gmra.mrb[0].mxu0 %v420
        %v462 = vpop.f32.mrb[0].mxu0
        %v463 = vadd.f32 0.0, %v462
        %v464 = vpop.f32.mrb[0].mxu0
        %v465 = vadd.f32 0.0, %v464
        %v466 = vpop.f32.mrb[0].mxu0
        %v467 = vpop.f32.mrb[0].mxu0
        %468 = vdwg.mxu0
        %v469 = vadd.f32 %v388, %v463
        %v470 = vadd.f32 %v389, %v465
        %v471 = vld [vmem:[%s195] sm:$0x3f]
        %s472 = scalar_lea.vmem %s1, 16
        %v473 = vld [vmem:[%s472] sm:$0xf]
        %v475 = vcombine.high %v471, %v471
        %v477 = vunpack.c.l.s4 1983009808
        %v478 = vunpack.c.0.s8 %v477
        %v479 = vlaneseq
        %v480 = vshrl.u32 %v479, 7
        %v481 = vsub.s32 %v478, %v480
        %v482 = vrot.slane %v471, %v481
        %v484 = vunpack.c.l.s4 1983009808
        %v485 = vunpack.c.0.s8 %v484
        %v486 = vlaneseq
        %v487 = vshrl.u32 %v486, 7
        %v488 = vsub.s32 %v485, %v487
        %v489 = vrot.slane %v475, %v488
        %v490 = vcombine.high %v482, %v482
        %491 = vrot.lane.b32.xlu0 %v482, 109
        %v492 = vpop.permute.xlu0 %491
        %493 = vrot.lane.b32.xlu0 %v490, 109
        %v494 = vpop.permute.xlu0 %493
        %495 = vrot.lane.b32.xlu0 %v489, 109
        %v496 = vpop.permute.xlu0 %495
        %vm497 = vcmask 891904
        %v498 = vsel %vm497, %v492, %v494
        %v499 = vsel %vm497, %v494, %v496
        %v501 = vsel %vm218, %v473, 0
        %v504 = vsel %vm222, %v498, 0
        %v507 = vsel %vm222, %v499, 0
        %509 = vmatprep.subr.bf16.mxu0 %v507
        %510 = vmatpush1.bf16.msra.mxu0 %v504
        %511 = vmatprep.subr.bf16.mxu0 0
        %512 = vmatpush1.bf16.msra.mxu0 0
        %513 = vmatprep.subr.bf16.mxu0 0
        %514 = vmatpush1.bf16.msra.mxu0 0
        %515 = vmatprep.subr.bf16.mxu0 0
        %516 = vmatpush1.bf16.msra.mxu0 0
        %517 = vmatprep.subr.bf16.mxu0 0
        %518 = vmatpush1.bf16.msra.mxu0 0
        %519 = vmatprep.subr.bf16.mxu0 0
        %520 = vmatpush1.bf16.msra.mxu0 0
        %521 = vmatprep.subr.bf16.mxu0 0
        %522 = vmatpush1.bf16.msra.mxu0 0
        %523 = vmatprep.subr.bf16.mxu0 0
        %524 = vmatpush1.bf16.msra.mxu0 0
        %525 = vmatprep.subr.bf16.mxu0 0
        %526 = vmatpush1.bf16.msra.mxu0 0
        %527 = vmatprep.subr.bf16.mxu0 0
        %528 = vmatpush1.bf16.msra.mxu0 0
        %529 = vmatprep.subr.bf16.mxu0 0
        %530 = vmatpush1.bf16.msra.mxu0 0
        %531 = vmatprep.subr.bf16.mxu0 0
        %532 = vmatpush1.bf16.msra.mxu0 0
        %533 = vmatprep.subr.bf16.mxu0 0
        %534 = vmatpush1.bf16.msra.mxu0 0
        %535 = vmatprep.subr.bf16.mxu0 0
        %536 = vmatpush1.bf16.msra.mxu0 0
        %537 = vmatprep.subr.bf16.mxu0 0
        %538 = vmatpush1.bf16.msra.mxu0 0
        %539 = vmatprep.subr.bf16.mxu0 0
        %540 = vmatpush1.bf16.msra.mxu0 0
        %541 = vmatprep.mubr.bf16.mxu0 0
        %542 = vmatmul.mubr.bf16.gmra.mrb[0].mxu0 %v501
        %v543 = vpop.f32.mrb[0].mxu0
        %v544 = vadd.f32 0.0, %v543
        %v545 = vpop.f32.mrb[0].mxu0
        %v546 = vadd.f32 0.0, %v545
        %v547 = vpop.f32.mrb[0].mxu0
        %v548 = vpop.f32.mrb[0].mxu0
        %549 = vdwg.mxu0
        %v550 = vadd.f32 %v469, %v544
        %v551 = vadd.f32 %v470, %v546
        %v552 = vld [vmem:[%s195] sm:$0x3f]
        %s553 = scalar_lea.vmem %s1, 20
        %v554 = vld [vmem:[%s553] sm:$0xf]
        %v556 = vcombine.high %v552, %v552
        %v558 = vunpack.c.l.s4 1983009808
        %v559 = vunpack.c.0.s8 %v558
        %v560 = vlaneseq
        %v561 = vshrl.u32 %v560, 7
        %v562 = vsub.s32 %v559, %v561
        %v563 = vrot.slane %v552, %v562
        %v565 = vunpack.c.l.s4 1983009808
        %v566 = vunpack.c.0.s8 %v565
        %v567 = vlaneseq
        %v568 = vshrl.u32 %v567, 7
        %v569 = vsub.s32 %v566, %v568
        %v570 = vrot.slane %v556, %v569
        %v571 = vcombine.high %v563, %v563
        %572 = vrot.lane.b32.xlu0 %v563, 108
        %v573 = vpop.permute.xlu0 %572
        %574 = vrot.lane.b32.xlu0 %v571, 108
        %v575 = vpop.permute.xlu0 %574
        %576 = vrot.lane.b32.xlu0 %v570, 108
        %v577 = vpop.permute.xlu0 %576
        %vm578 = vcmask 883712
        %v579 = vsel %vm578, %v573, %v575
        %v580 = vsel %vm578, %v575, %v577
        %v582 = vsel %vm218, %v554, 0
        %v585 = vsel %vm222, %v579, 0
        %v588 = vsel %vm222, %v580, 0
        %590 = vmatprep.subr.bf16.mxu0 %v588
        %591 = vmatpush1.bf16.msra.mxu0 %v585
        %592 = vmatprep.subr.bf16.mxu0 0
        %593 = vmatpush1.bf16.msra.mxu0 0
        %594 = vmatprep.subr.bf16.mxu0 0
        %595 = vmatpush1.bf16.msra.mxu0 0
        %596 = vmatprep.subr.bf16.mxu0 0
        %597 = vmatpush1.bf16.msra.mxu0 0
        %598 = vmatprep.subr.bf16.mxu0 0
        %599 = vmatpush1.bf16.msra.mxu0 0
        %600 = vmatprep.subr.bf16.mxu0 0
        %601 = vmatpush1.bf16.msra.mxu0 0
        %602 = vmatprep.subr.bf16.mxu0 0
        %603 = vmatpush1.bf16.msra.mxu0 0
        %604 = vmatprep.subr.bf16.mxu0 0
        %605 = vmatpush1.bf16.msra.mxu0 0
        %606 = vmatprep.subr.bf16.mxu0 0
        %607 = vmatpush1.bf16.msra.mxu0 0
        %608 = vmatprep.subr.bf16.mxu0 0
        %609 = vmatpush1.bf16.msra.mxu0 0
        %610 = vmatprep.subr.bf16.mxu0 0
        %611 = vmatpush1.bf16.msra.mxu0 0
        %612 = vmatprep.subr.bf16.mxu0 0
        %613 = vmatpush1.bf16.msra.mxu0 0
        %614 = vmatprep.subr.bf16.mxu0 0
        %615 = vmatpush1.bf16.msra.mxu0 0
        %616 = vmatprep.subr.bf16.mxu0 0
        %617 = vmatpush1.bf16.msra.mxu0 0
        %618 = vmatprep.subr.bf16.mxu0 0
        %619 = vmatpush1.bf16.msra.mxu0 0
        %620 = vmatprep.subr.bf16.mxu0 0
        %621 = vmatpush1.bf16.msra.mxu0 0
        %622 = vmatprep.mubr.bf16.mxu0 0
        %623 = vmatmul.mubr.bf16.gmra.mrb[0].mxu0 %v582
        %v624 = vpop.f32.mrb[0].mxu0
        %v625 = vadd.f32 0.0, %v624
        %v626 = vpop.f32.mrb[0].mxu0
        %v627 = vadd.f32 0.0, %v626
        %v628 = vpop.f32.mrb[0].mxu0
        %v629 = vpop.f32.mrb[0].mxu0
        %630 = vdwg.mxu0
        %v631 = vadd.f32 %v550, %v625
        %v632 = vadd.f32 %v551, %v627
        %v633 = vld [vmem:[%s195] sm:$0x3f]
        %s634 = scalar_lea.vmem %s1, 24
        %v635 = vld [vmem:[%s634] sm:$0xf]
        %v637 = vcombine.high %v633, %v633
        %v639 = vunpack.c.l.s4 1983009808
        %v640 = vunpack.c.0.s8 %v639
        %v641 = vlaneseq
        %v642 = vshrl.u32 %v641, 7
        %v643 = vsub.s32 %v640, %v642
        %v644 = vrot.slane %v633, %v643
        %v646 = vunpack.c.l.s4 1983009808
        %v647 = vunpack.c.0.s8 %v646
        %v648 = vlaneseq
        %v649 = vshrl.u32 %v648, 7
        %v650 = vsub.s32 %v647, %v649
        %v651 = vrot.slane %v637, %v650
        %v652 = vcombine.high %v644, %v644
        %653 = vrot.lane.b32.xlu0 %v644, 92
        %v654 = vpop.permute.xlu0 %653
        %655 = vrot.lane.b32.xlu0 %v652, 92
        %v656 = vpop.permute.xlu0 %655
        %657 = vrot.lane.b32.xlu0 %v651, 92
        %v658 = vpop.permute.xlu0 %657
        %vm659 = vcmask 752640
        %v660 = vsel %vm659, %v654, %v656
        %v661 = vsel %vm659, %v656, %v658
        %v663 = vsel %vm218, %v635, 0
        %v666 = vsel %vm222, %v660, 0
        %v669 = vsel %vm222, %v661, 0
        %671 = vmatprep.subr.bf16.mxu0 %v669
        %672 = vmatpush1.bf16.msra.mxu0 %v666
        %673 = vmatprep.subr.bf16.mxu0 0
        %674 = vmatpush1.bf16.msra.mxu0 0
        %675 = vmatprep.subr.bf16.mxu0 0
        %676 = vmatpush1.bf16.msra.mxu0 0
        %677 = vmatprep.subr.bf16.mxu0 0
        %678 = vmatpush1.bf16.msra.mxu0 0
        %679 = vmatprep.subr.bf16.mxu0 0
        %680 = vmatpush1.bf16.msra.mxu0 0
        %681 = vmatprep.subr.bf16.mxu0 0
        %682 = vmatpush1.bf16.msra.mxu0 0
        %683 = vmatprep.subr.bf16.mxu0 0
        %684 = vmatpush1.bf16.msra.mxu0 0
        %685 = vmatprep.subr.bf16.mxu0 0
        %686 = vmatpush1.bf16.msra.mxu0 0
        %687 = vmatprep.subr.bf16.mxu0 0
        %688 = vmatpush1.bf16.msra.mxu0 0
        %689 = vmatprep.subr.bf16.mxu0 0
        %690 = vmatpush1.bf16.msra.mxu0 0
        %691 = vmatprep.subr.bf16.mxu0 0
        %692 = vmatpush1.bf16.msra.mxu0 0
        %693 = vmatprep.subr.bf16.mxu0 0
        %694 = vmatpush1.bf16.msra.mxu0 0
        %695 = vmatprep.subr.bf16.mxu0 0
        %696 = vmatpush1.bf16.msra.mxu0 0
        %697 = vmatprep.subr.bf16.mxu0 0
        %698 = vmatpush1.bf16.msra.mxu0 0
        %699 = vmatprep.subr.bf16.mxu0 0
        %700 = vmatpush1.bf16.msra.mxu0 0
        %701 = vmatprep.subr.bf16.mxu0 0
        %702 = vmatpush1.bf16.msra.mxu0 0
        %703 = vmatprep.mubr.bf16.mxu0 0
        %704 = vmatmul.mubr.bf16.gmra.mrb[0].mxu0 %v663
        %v705 = vpop.f32.mrb[0].mxu0
        %v706 = vadd.f32 0.0, %v705
        %v707 = vpop.f32.mrb[0].mxu0
        %v708 = vadd.f32 0.0, %v707
        %v709 = vpop.f32.mrb[0].mxu0
        %v710 = vpop.f32.mrb[0].mxu0
        %711 = vdwg.mxu0
        %v712 = vadd.f32 %v631, %v706
        %v713 = vadd.f32 %v632, %v708
        %v714 = vld [vmem:[%s195] sm:$0x3f]
        %s715 = scalar_lea.vmem %s1, 28
        %v716 = vld [vmem:[%s715] sm:$0xf]
        %v718 = vcombine.high %v714, %v714
        %v720 = vunpack.c.l.s4 1983009808
        %v721 = vunpack.c.0.s8 %v720
        %v722 = vlaneseq
        %v723 = vshrl.u32 %v722, 7
        %v724 = vsub.s32 %v721, %v723
        %v725 = vrot.slane %v714, %v724
        %v727 = vunpack.c.l.s4 1983009808
        %v728 = vunpack.c.0.s8 %v727
        %v729 = vlaneseq
        %v730 = vshrl.u32 %v729, 7
        %v731 = vsub.s32 %v728, %v730
        %v732 = vrot.slane %v718, %v731
        %v733 = vcombine.high %v725, %v725
        %734 = vrot.lane.b32.xlu0 %v725, 91
        %v735 = vpop.permute.xlu0 %734
        %736 = vrot.lane.b32.xlu0 %v733, 91
        %v737 = vpop.permute.xlu0 %736
        %738 = vrot.lane.b32.xlu0 %v732, 91
        %v739 = vpop.permute.xlu0 %738
        %vm740 = vcmask 744448
        %v741 = vsel %vm740, %v735, %v737
        %v742 = vsel %vm740, %v737, %v739
        %v744 = vsel %vm218, %v716, 0
        %v747 = vsel %vm222, %v741, 0
        %v750 = vsel %vm222, %v742, 0
        %752 = vmatprep.subr.bf16.mxu0 %v750
        %753 = vmatpush1.bf16.msra.mxu0 %v747
        %754 = vmatprep.subr.bf16.mxu0 0
        %755 = vmatpush1.bf16.msra.mxu0 0
        %756 = vmatprep.subr.bf16.mxu0 0
        %757 = vmatpush1.bf16.msra.mxu0 0
        %758 = vmatprep.subr.bf16.mxu0 0
        %759 = vmatpush1.bf16.msra.mxu0 0
        %760 = vmatprep.subr.bf16.mxu0 0
        %761 = vmatpush1.bf16.msra.mxu0 0
        %762 = vmatprep.subr.bf16.mxu0 0
        %763 = vmatpush1.bf16.msra.mxu0 0
        %764 = vmatprep.subr.bf16.mxu0 0
        %765 = vmatpush1.bf16.msra.mxu0 0
        %766 = vmatprep.subr.bf16.mxu0 0
        %767 = vmatpush1.bf16.msra.mxu0 0
        %768 = vmatprep.subr.bf16.mxu0 0
        %769 = vmatpush1.bf16.msra.mxu0 0
        %770 = vmatprep.subr.bf16.mxu0 0
        %771 = vmatpush1.bf16.msra.mxu0 0
        %772 = vmatprep.subr.bf16.mxu0 0
        %773 = vmatpush1.bf16.msra.mxu0 0
        %774 = vmatprep.subr.bf16.mxu0 0
        %775 = vmatpush1.bf16.msra.mxu0 0
        %776 = vmatprep.subr.bf16.mxu0 0
        %777 = vmatpush1.bf16.msra.mxu0 0
        %778 = vmatprep.subr.bf16.mxu0 0
        %779 = vmatpush1.bf16.msra.mxu0 0
        %780 = vmatprep.subr.bf16.mxu0 0
        %781 = vmatpush1.bf16.msra.mxu0 0
        %782 = vmatprep.subr.bf16.mxu0 0
        %783 = vmatpush1.bf16.msra.mxu0 0
        %784 = vmatprep.mubr.bf16.mxu0 0
        %785 = vmatmul.mubr.bf16.gmra.mrb[0].mxu0 %v744
        %v786 = vpop.f32.mrb[0].mxu0
        %v787 = vadd.f32 0.0, %v786
        %v788 = vpop.f32.mrb[0].mxu0
        %v789 = vadd.f32 0.0, %v788
        %v790 = vpop.f32.mrb[0].mxu0
        %v791 = vpop.f32.mrb[0].mxu0
        %792 = vdwg.mxu0
        %v793 = vadd.f32 %v712, %v787
        %v794 = vadd.f32 %v713, %v789
        %v795 = vld [vmem:[%s195] sm:$0x3f]
        %s796 = scalar_lea.vmem %s1, 32
        %v797 = vld [vmem:[%s796] sm:$0xf]
        %v799 = vcombine.high %v795, %v795
        %v801 = vunpack.c.l.s4 1983009808
        %v802 = vunpack.c.0.s8 %v801
        %v803 = vlaneseq
        %v804 = vshrl.u32 %v803, 7
        %v805 = vsub.s32 %v802, %v804
        %v806 = vrot.slane %v795, %v805
        %v808 = vunpack.c.l.s4 1983009808
        %v809 = vunpack.c.0.s8 %v808
        %v810 = vlaneseq
        %v811 = vshrl.u32 %v810, 7
        %v812 = vsub.s32 %v809, %v811
        %v813 = vrot.slane %v799, %v812
        %v814 = vcombine.high %v806, %v806
        %815 = vrot.lane.b32.xlu0 %v806, 90
        %v816 = vpop.permute.xlu0 %815
        %817 = vrot.lane.b32.xlu0 %v814, 90
        %v818 = vpop.permute.xlu0 %817
        %819 = vrot.lane.b32.xlu0 %v813, 90
        %v820 = vpop.permute.xlu0 %819
        %vm821 = vcmask 736256
        %v822 = vsel %vm821, %v816, %v818
        %v823 = vsel %vm821, %v818, %v820
        %v825 = vsel %vm218, %v797, 0
        %v828 = vsel %vm222, %v822, 0
        %v831 = vsel %vm222, %v823, 0
        %833 = vmatprep.subr.bf16.mxu0 %v831
        %834 = vmatpush1.bf16.msra.mxu0 %v828
        %835 = vmatprep.subr.bf16.mxu0 0
        %836 = vmatpush1.bf16.msra.mxu0 0
        %837 = vmatprep.subr.bf16.mxu0 0
        %838 = vmatpush1.bf16.msra.mxu0 0
        %839 = vmatprep.subr.bf16.mxu0 0
        %840 = vmatpush1.bf16.msra.mxu0 0
        %841 = vmatprep.subr.bf16.mxu0 0
        %842 = vmatpush1.bf16.msra.mxu0 0
        %843 = vmatprep.subr.bf16.mxu0 0
        %844 = vmatpush1.bf16.msra.mxu0 0
        %845 = vmatprep.subr.bf16.mxu0 0
        %846 = vmatpush1.bf16.msra.mxu0 0
        %847 = vmatprep.subr.bf16.mxu0 0
        %848 = vmatpush1.bf16.msra.mxu0 0
        %849 = vmatprep.subr.bf16.mxu0 0
        %850 = vmatpush1.bf16.msra.mxu0 0
        %851 = vmatprep.subr.bf16.mxu0 0
        %852 = vmatpush1.bf16.msra.mxu0 0
        %853 = vmatprep.subr.bf16.mxu0 0
        %854 = vmatpush1.bf16.msra.mxu0 0
        %855 = vmatprep.subr.bf16.mxu0 0
        %856 = vmatpush1.bf16.msra.mxu0 0
        %857 = vmatprep.subr.bf16.mxu0 0
        %858 = vmatpush1.bf16.msra.mxu0 0
        %859 = vmatprep.subr.bf16.mxu0 0
        %860 = vmatpush1.bf16.msra.mxu0 0
        %861 = vmatprep.subr.bf16.mxu0 0
        %862 = vmatpush1.bf16.msra.mxu0 0
        %863 = vmatprep.subr.bf16.mxu0 0
        %864 = vmatpush1.bf16.msra.mxu0 0
        %865 = vmatprep.mubr.bf16.mxu0 0
        %866 = vmatmul.mubr.bf16.gmra.mrb[0].mxu0 %v825
        %v867 = vpop.f32.mrb[0].mxu0
        %v868 = vadd.f32 0.0, %v867
        %v869 = vpop.f32.mrb[0].mxu0
        %v870 = vadd.f32 0.0, %v869
        %v871 = vpop.f32.mrb[0].mxu0
        %v872 = vpop.f32.mrb[0].mxu0
        %873 = vdwg.mxu0
        %v874 = vadd.f32 %v793, %v868
        %v875 = vadd.f32 %v794, %v870
        %877 = vset.pattern.permute.xlu0 0
        %878 = vperm.xlu0 %877, %v197
        %v879 = vpop.permute.xlu0 %878
        %v881 = vmul.f32 %v874, %v879
        %v882 = vmul.f32 %v875, %v879
        %884 = vset.pattern.permute.xlu0 0
        %885 = vperm.xlu0 %884, %v198
        %v886 = vpop.permute.xlu0 %885
        %v888 = vadd.f32 %v881, %v886
        %v889 = vadd.f32 %v882, %v886
        %v891 = vcombine.high %v888, %v888
        %v893 = vunpack.c.l.s4 1966171168
        %v894 = vunpack.c.0.s8 %v893
        %v895 = vlaneseq
        %v896 = vshrl.u32 %v895, 7
        %v897 = vsub.s32 %v894, %v896
        %v898 = vrot.slane %v888, %v897
        %v900 = vunpack.c.l.s4 1966171168
        %v901 = vunpack.c.0.s8 %v900
        %v902 = vlaneseq
        %v903 = vshrl.u32 %v902, 7
        %v904 = vsub.s32 %v901, %v903
        %v905 = vrot.slane %v891, %v904
        %v906 = vcombine.high %v898, %v898
        %v907 = vcombine.high %v905, %v905
        %v909 = vunpack.c.l.s4 1966171168
        %v910 = vunpack.c.0.s8 %v909
        %v911 = vlaneseq
        %v912 = vshrl.u32 %v911, 7
        %v913 = vsub.s32 %v910, %v912
        %v914 = vrot.slane %v898, %v913
        %v916 = vunpack.c.l.s4 1966171168
        %v917 = vunpack.c.0.s8 %v916
        %v918 = vlaneseq
        %v919 = vshrl.u32 %v918, 7
        %v920 = vsub.s32 %v917, %v919
        %v921 = vrot.slane %v905, %v920
        %v923 = vunpack.c.l.s4 1966171168
        %v924 = vunpack.c.0.s8 %v923
        %v925 = vlaneseq
        %v926 = vshrl.u32 %v925, 7
        %v927 = vsub.s32 %v924, %v926
        %v928 = vrot.slane %v906, %v927
        %v930 = vunpack.c.l.s4 1966171168
        %v931 = vunpack.c.0.s8 %v930
        %v932 = vlaneseq
        %v933 = vshrl.u32 %v932, 7
        %v934 = vsub.s32 %v931, %v933
        %v935 = vrot.slane %v907, %v934
        %v936 = vcombine.high %v914, %v914
        %v937 = vcombine.high %v921, %v921
        %v938 = vcombine.high %v928, %v928
        %v939 = vcombine.high %v935, %v935
        %vm948 = vcmask 122880
        %949 = vst.msk [vmem:[%s190] sm:$0x1] %vm948, %v914
        %950 = vst.msk [vmem:[%s190 + $0x10] sm:$0x1] %vm948, %v928
        %951 = vst.msk [vmem:[%s190 + $0x20] sm:$0x1] %vm948, %v936
        %952 = vst.msk [vmem:[%s190 + $0x30] sm:$0x1] %vm948, %v938
        %953 = vst.msk [vmem:[%s190 + $0x40] sm:$0x1] %vm948, %v921
        %954 = vst.msk [vmem:[%s190 + $0x50] sm:$0x1] %vm948, %v935
        %955 = vst.msk [vmem:[%s190 + $0x60] sm:$0x1] %vm948, %v937
        %956 = vst.msk [vmem:[%s190 + $0x70] sm:$0x1] %vm948, %v939
        %v957 = vlaneseq
        %v958 = vshrl.u32 %v957, 7
        %v959 = vsub.s32 0, %v958
        %v960 = vrot.slane %v914, %v959
        %v961 = vlaneseq
        %v962 = vshrl.u32 %v961, 7
        %v963 = vsub.s32 0, %v962
        %v964 = vrot.slane %v928, %v963
        %v965 = vlaneseq
        %v966 = vshrl.u32 %v965, 7
        %v967 = vsub.s32 0, %v966
        %v968 = vrot.slane %v936, %v967
        %v969 = vlaneseq
        %v970 = vshrl.u32 %v969, 7
        %v971 = vsub.s32 0, %v970
        %v972 = vrot.slane %v938, %v971
        %v973 = vlaneseq
        %v974 = vshrl.u32 %v973, 7
        %v975 = vsub.s32 0, %v974
        %v976 = vrot.slane %v921, %v975
        %v977 = vlaneseq
        %v978 = vshrl.u32 %v977, 7
        %v979 = vsub.s32 0, %v978
        %v980 = vrot.slane %v935, %v979
        %v981 = vlaneseq
        %v982 = vshrl.u32 %v981, 7
        %v983 = vsub.s32 0, %v982
        %v984 = vrot.slane %v937, %v983
        %v985 = vlaneseq
        %v986 = vshrl.u32 %v985, 7
        %v987 = vsub.s32 0, %v986
        %v988 = vrot.slane %v939, %v987
        %989 = vrot.lane.b32.xlu0 %v960, 110
        %v990 = vpop.permute.xlu0 %989
        %991 = vrot.lane.b32.xlu0 %v964, 110
        %v992 = vpop.permute.xlu0 %991
        %993 = vrot.lane.b32.xlu0 %v968, 110
        %v994 = vpop.permute.xlu0 %993
        %995 = vrot.lane.b32.xlu0 %v972, 110
        %v996 = vpop.permute.xlu0 %995
        %997 = vrot.lane.b32.xlu0 %v976, 110
        %v998 = vpop.permute.xlu0 %997
        %999 = vrot.lane.b32.xlu0 %v980, 110
        %v1000 = vpop.permute.xlu0 %999
        %1001 = vrot.lane.b32.xlu0 %v984, 110
        %v1002 = vpop.permute.xlu0 %1001
        %1003 = vrot.lane.b32.xlu0 %v988, 110
        %v1004 = vpop.permute.xlu0 %1003
        %1013 = vst.msk [vmem:[%s190 + $0x1] sm:$0x1] %vm948, %v990
        %1014 = vst.msk [vmem:[%s190 + $0x11] sm:$0x1] %vm948, %v992
        %1015 = vst.msk [vmem:[%s190 + $0x21] sm:$0x1] %vm948, %v994
        %1016 = vst.msk [vmem:[%s190 + $0x31] sm:$0x1] %vm948, %v996
        %1017 = vst.msk [vmem:[%s190 + $0x41] sm:$0x1] %vm948, %v998
        %1018 = vst.msk [vmem:[%s190 + $0x51] sm:$0x1] %vm948, %v1000
        %1019 = vst.msk [vmem:[%s190 + $0x61] sm:$0x1] %vm948, %v1002
        %1020 = vst.msk [vmem:[%s190 + $0x71] sm:$0x1] %vm948, %v1004
        %1021 = vrot.lane.b32.xlu0 %v960, 92
        %v1022 = vpop.permute.xlu0 %1021
        %1023 = vrot.lane.b32.xlu0 %v964, 92
        %v1024 = vpop.permute.xlu0 %1023
        %1025 = vrot.lane.b32.xlu0 %v968, 92
        %v1026 = vpop.permute.xlu0 %1025
        %1027 = vrot.lane.b32.xlu0 %v972, 92
        %v1028 = vpop.permute.xlu0 %1027
        %1029 = vrot.lane.b32.xlu0 %v976, 92
        %v1030 = vpop.permute.xlu0 %1029
        %1031 = vrot.lane.b32.xlu0 %v980, 92
        %v1032 = vpop.permute.xlu0 %1031
        %1033 = vrot.lane.b32.xlu0 %v984, 92
        %v1034 = vpop.permute.xlu0 %1033
        %1035 = vrot.lane.b32.xlu0 %v988, 92
        %v1036 = vpop.permute.xlu0 %1035
        %1045 = vst.msk [vmem:[%s190 + $0x2] sm:$0x1] %vm948, %v1022
        %1046 = vst.msk [vmem:[%s190 + $0x12] sm:$0x1] %vm948, %v1024
        %1047 = vst.msk [vmem:[%s190 + $0x22] sm:$0x1] %vm948, %v1026
        %1048 = vst.msk [vmem:[%s190 + $0x32] sm:$0x1] %vm948, %v1028
        %1049 = vst.msk [vmem:[%s190 + $0x42] sm:$0x1] %vm948, %v1030
        %1050 = vst.msk [vmem:[%s190 + $0x52] sm:$0x1] %vm948, %v1032
        %1051 = vst.msk [vmem:[%s190 + $0x62] sm:$0x1] %vm948, %v1034
        %1052 = vst.msk [vmem:[%s190 + $0x72] sm:$0x1] %vm948, %v1036
        %1053 = vrot.lane.b32.xlu0 %v960, 74
        %v1054 = vpop.permute.xlu0 %1053
        %1055 = vrot.lane.b32.xlu0 %v964, 74
        %v1056 = vpop.permute.xlu0 %1055
        %1057 = vrot.lane.b32.xlu0 %v968, 74
        %v1058 = vpop.permute.xlu0 %1057
        %1059 = vrot.lane.b32.xlu0 %v972, 74
        %v1060 = vpop.permute.xlu0 %1059
        %1061 = vrot.lane.b32.xlu0 %v976, 74
        %v1062 = vpop.permute.xlu0 %1061
        %1063 = vrot.lane.b32.xlu0 %v980, 74
        %v1064 = vpop.permute.xlu0 %1063
        %1065 = vrot.lane.b32.xlu0 %v984, 74
        %v1066 = vpop.permute.xlu0 %1065
        %1067 = vrot.lane.b32.xlu0 %v988, 74
        %v1068 = vpop.permute.xlu0 %1067
        %1077 = vst.msk [vmem:[%s190 + $0x3] sm:$0x1] %vm948, %v1054
        %1078 = vst.msk [vmem:[%s190 + $0x13] sm:$0x1] %vm948, %v1056
        %1079 = vst.msk [vmem:[%s190 + $0x23] sm:$0x1] %vm948, %v1058
        %1080 = vst.msk [vmem:[%s190 + $0x33] sm:$0x1] %vm948, %v1060
        %1081 = vst.msk [vmem:[%s190 + $0x43] sm:$0x1] %vm948, %v1062
        %1082 = vst.msk [vmem:[%s190 + $0x53] sm:$0x1] %vm948, %v1064
        %1083 = vst.msk [vmem:[%s190 + $0x63] sm:$0x1] %vm948, %v1066
        %1084 = vst.msk [vmem:[%s190 + $0x73] sm:$0x1] %vm948, %v1068
        %1085 = vrot.lane.b32.xlu0 %v960, 56
        %v1086 = vpop.permute.xlu0 %1085
        %1087 = vrot.lane.b32.xlu0 %v964, 56
        %v1088 = vpop.permute.xlu0 %1087
        %1089 = vrot.lane.b32.xlu0 %v968, 56
        %v1090 = vpop.permute.xlu0 %1089
        %1091 = vrot.lane.b32.xlu0 %v972, 56
        %v1092 = vpop.permute.xlu0 %1091
        %1093 = vrot.lane.b32.xlu0 %v976, 56
        %v1094 = vpop.permute.xlu0 %1093
        %1095 = vrot.lane.b32.xlu0 %v980, 56
        %v1096 = vpop.permute.xlu0 %1095
        %1097 = vrot.lane.b32.xlu0 %v984, 56
        %v1098 = vpop.permute.xlu0 %1097
        %1099 = vrot.lane.b32.xlu0 %v988, 56
        %v1100 = vpop.permute.xlu0 %1099
        %1109 = vst.msk [vmem:[%s190 + $0x4] sm:$0x1] %vm948, %v1086
        %1110 = vst.msk [vmem:[%s190 + $0x14] sm:$0x1] %vm948, %v1088
        %1111 = vst.msk [vmem:[%s190 + $0x24] sm:$0x1] %vm948, %v1090
        %1112 = vst.msk [vmem:[%s190 + $0x34] sm:$0x1] %vm948, %v1092
        %1113 = vst.msk [vmem:[%s190 + $0x44] sm:$0x1] %vm948, %v1094
        %1114 = vst.msk [vmem:[%s190 + $0x54] sm:$0x1] %vm948, %v1096
        %1115 = vst.msk [vmem:[%s190 + $0x64] sm:$0x1] %vm948, %v1098
        %1116 = vst.msk [vmem:[%s190 + $0x74] sm:$0x1] %vm948, %v1100
        %1117 = vrot.lane.b32.xlu0 %v960, 38
        %v1118 = vpop.permute.xlu0 %1117
        %1119 = vrot.lane.b32.xlu0 %v964, 38
        %v1120 = vpop.permute.xlu0 %1119
        %1121 = vrot.lane.b32.xlu0 %v968, 38
        %v1122 = vpop.permute.xlu0 %1121
        %1123 = vrot.lane.b32.xlu0 %v972, 38
        %v1124 = vpop.permute.xlu0 %1123
        %1125 = vrot.lane.b32.xlu0 %v976, 38
        %v1126 = vpop.permute.xlu0 %1125
        %1127 = vrot.lane.b32.xlu0 %v980, 38
        %v1128 = vpop.permute.xlu0 %1127
        %1129 = vrot.lane.b32.xlu0 %v984, 38
        %v1130 = vpop.permute.xlu0 %1129
        %1131 = vrot.lane.b32.xlu0 %v988, 38
        %v1132 = vpop.permute.xlu0 %1131
        %1141 = vst.msk [vmem:[%s190 + $0x5] sm:$0x1] %vm948, %v1118
        %1142 = vst.msk [vmem:[%s190 + $0x15] sm:$0x1] %vm948, %v1120
        %1143 = vst.msk [vmem:[%s190 + $0x25] sm:$0x1] %vm948, %v1122
        %1144 = vst.msk [vmem:[%s190 + $0x35] sm:$0x1] %vm948, %v1124
        %1145 = vst.msk [vmem:[%s190 + $0x45] sm:$0x1] %vm948, %v1126
        %1146 = vst.msk [vmem:[%s190 + $0x55] sm:$0x1] %vm948, %v1128
        %1147 = vst.msk [vmem:[%s190 + $0x65] sm:$0x1] %vm948, %v1130
        %1148 = vst.msk [vmem:[%s190 + $0x75] sm:$0x1] %vm948, %v1132
        %1149 = vrot.lane.b32.xlu0 %v960, 20
        %v1150 = vpop.permute.xlu0 %1149
        %1151 = vrot.lane.b32.xlu0 %v964, 20
        %v1152 = vpop.permute.xlu0 %1151
        %1153 = vrot.lane.b32.xlu0 %v968, 20
        %v1154 = vpop.permute.xlu0 %1153
        %1155 = vrot.lane.b32.xlu0 %v972, 20
        %v1156 = vpop.permute.xlu0 %1155
        %1157 = vrot.lane.b32.xlu0 %v976, 20
        %v1158 = vpop.permute.xlu0 %1157
        %1159 = vrot.lane.b32.xlu0 %v980, 20
        %v1160 = vpop.permute.xlu0 %1159
        %1161 = vrot.lane.b32.xlu0 %v984, 20
        %v1162 = vpop.permute.xlu0 %1161
        %1163 = vrot.lane.b32.xlu0 %v988, 20
        %v1164 = vpop.permute.xlu0 %1163
        %1173 = vst.msk [vmem:[%s190 + $0x6] sm:$0x1] %vm948, %v1150
        %1174 = vst.msk [vmem:[%s190 + $0x16] sm:$0x1] %vm948, %v1152
        %1175 = vst.msk [vmem:[%s190 + $0x26] sm:$0x1] %vm948, %v1154
        %1176 = vst.msk [vmem:[%s190 + $0x36] sm:$0x1] %vm948, %v1156
        %1177 = vst.msk [vmem:[%s190 + $0x46] sm:$0x1] %vm948, %v1158
        %1178 = vst.msk [vmem:[%s190 + $0x56] sm:$0x1] %vm948, %v1160
        %1179 = vst.msk [vmem:[%s190 + $0x66] sm:$0x1] %vm948, %v1162
        %1180 = vst.msk [vmem:[%s190 + $0x76] sm:$0x1] %vm948, %v1164
        %v1182 = vcombine.low %v888, %v889
        %v1183 = vcombine.high %v888, %v889
        %v1185 = vunpack.c.l.s4 1966171168
        %v1186 = vunpack.c.0.s8 %v1185
        %v1187 = vlaneseq
        %v1188 = vshrl.u32 %v1187, 7
        %v1189 = vsub.s32 %v1186, %v1188
        %v1190 = vrot.slane %v1182, %v1189
        %v1192 = vunpack.c.l.s4 1966171168
        %v1193 = vunpack.c.0.s8 %v1192
        %v1194 = vlaneseq
        %v1195 = vshrl.u32 %v1194, 7
        %v1196 = vsub.s32 %v1193, %v1195
        %v1197 = vrot.slane %v1183, %v1196
        %v1198 = vcombine.high %v1190, %v1190
        %v1199 = vcombine.high %v1197, %v1197
        %v1201 = vunpack.c.l.s4 1966171168
        %v1202 = vunpack.c.0.s8 %v1201
        %v1203 = vlaneseq
        %v1204 = vshrl.u32 %v1203, 7
        %v1205 = vsub.s32 %v1202, %v1204
        %v1206 = vrot.slane %v1190, %v1205
        %v1208 = vunpack.c.l.s4 1966171168
        %v1209 = vunpack.c.0.s8 %v1208
        %v1210 = vlaneseq
        %v1211 = vshrl.u32 %v1210, 7
        %v1212 = vsub.s32 %v1209, %v1211
        %v1213 = vrot.slane %v1197, %v1212
        %v1215 = vunpack.c.l.s4 1966171168
        %v1216 = vunpack.c.0.s8 %v1215
        %v1217 = vlaneseq
        %v1218 = vshrl.u32 %v1217, 7
        %v1219 = vsub.s32 %v1216, %v1218
        %v1220 = vrot.slane %v1198, %v1219
        %v1222 = vunpack.c.l.s4 1966171168
        %v1223 = vunpack.c.0.s8 %v1222
        %v1224 = vlaneseq
        %v1225 = vshrl.u32 %v1224, 7
        %v1226 = vsub.s32 %v1223, %v1225
        %v1227 = vrot.slane %v1199, %v1226
        %v1228 = vcombine.high %v1206, %v1206
        %v1229 = vcombine.high %v1213, %v1213
        %v1230 = vcombine.high %v1220, %v1220
        %v1231 = vcombine.high %v1227, %v1227
        %v1232 = vlaneseq
        %v1233 = vshrl.u32 %v1232, 7
        %v1234 = vsub.s32 0, %v1233
        %v1235 = vrot.slane %v1206, %v1234
        %v1236 = vlaneseq
        %v1237 = vshrl.u32 %v1236, 7
        %v1238 = vsub.s32 1, %v1237
        %v1239 = vrot.slane %v1206, %v1238
        %v1240 = vlaneseq
        %v1241 = vshrl.u32 %v1240, 7
        %v1242 = vsub.s32 0, %v1241
        %v1243 = vrot.slane %v1220, %v1242
        %v1244 = vlaneseq
        %v1245 = vshrl.u32 %v1244, 7
        %v1246 = vsub.s32 1, %v1245
        %v1247 = vrot.slane %v1220, %v1246
        %v1248 = vlaneseq
        %v1249 = vshrl.u32 %v1248, 7
        %v1250 = vsub.s32 0, %v1249
        %v1251 = vrot.slane %v1228, %v1250
        %v1252 = vlaneseq
        %v1253 = vshrl.u32 %v1252, 7
        %v1254 = vsub.s32 1, %v1253
        %v1255 = vrot.slane %v1228, %v1254
        %v1256 = vlaneseq
        %v1257 = vshrl.u32 %v1256, 7
        %v1258 = vsub.s32 0, %v1257
        %v1259 = vrot.slane %v1230, %v1258
        %v1260 = vlaneseq
        %v1261 = vshrl.u32 %v1260, 7
        %v1262 = vsub.s32 1, %v1261
        %v1263 = vrot.slane %v1230, %v1262
        %v1264 = vlaneseq
        %v1265 = vshrl.u32 %v1264, 7
        %v1266 = vsub.s32 0, %v1265
        %v1267 = vrot.slane %v1213, %v1266
        %v1268 = vlaneseq
        %v1269 = vshrl.u32 %v1268, 7
        %v1270 = vsub.s32 1, %v1269
        %v1271 = vrot.slane %v1213, %v1270
        %v1272 = vlaneseq
        %v1273 = vshrl.u32 %v1272, 7
        %v1274 = vsub.s32 0, %v1273
        %v1275 = vrot.slane %v1227, %v1274
        %v1276 = vlaneseq
        %v1277 = vshrl.u32 %v1276, 7
        %v1278 = vsub.s32 1, %v1277
        %v1279 = vrot.slane %v1227, %v1278
        %v1280 = vlaneseq
        %v1281 = vshrl.u32 %v1280, 7
        %v1282 = vsub.s32 0, %v1281
        %v1283 = vrot.slane %v1229, %v1282
        %v1284 = vlaneseq
        %v1285 = vshrl.u32 %v1284, 7
        %v1286 = vsub.s32 1, %v1285
        %v1287 = vrot.slane %v1229, %v1286
        %v1288 = vlaneseq
        %v1289 = vshrl.u32 %v1288, 7
        %v1290 = vsub.s32 0, %v1289
        %v1291 = vrot.slane %v1231, %v1290
        %v1292 = vlaneseq
        %v1293 = vshrl.u32 %v1292, 7
        %v1294 = vsub.s32 1, %v1293
        %v1295 = vrot.slane %v1231, %v1294
        %1296 = vrot.lane.b32.xlu0 %v1235, 2
        %v1297 = vpop.permute.xlu0 %1296
        %1298 = vrot.lane.b32.xlu0 %v1239, 2
        %v1299 = vpop.permute.xlu0 %1298
        %1300 = vrot.lane.b32.xlu0 %v1243, 2
        %v1301 = vpop.permute.xlu0 %1300
        %1302 = vrot.lane.b32.xlu0 %v1247, 2
        %v1303 = vpop.permute.xlu0 %1302
        %1304 = vrot.lane.b32.xlu0 %v1251, 2
        %v1305 = vpop.permute.xlu0 %1304
        %1306 = vrot.lane.b32.xlu0 %v1255, 2
        %v1307 = vpop.permute.xlu0 %1306
        %1308 = vrot.lane.b32.xlu0 %v1259, 2
        %v1309 = vpop.permute.xlu0 %1308
        %1310 = vrot.lane.b32.xlu0 %v1263, 2
        %v1311 = vpop.permute.xlu0 %1310
        %1312 = vrot.lane.b32.xlu0 %v1267, 2
        %v1313 = vpop.permute.xlu0 %1312
        %1314 = vrot.lane.b32.xlu0 %v1271, 2
        %v1315 = vpop.permute.xlu0 %1314
        %1316 = vrot.lane.b32.xlu0 %v1275, 2
        %v1317 = vpop.permute.xlu0 %1316
        %1318 = vrot.lane.b32.xlu0 %v1279, 2
        %v1319 = vpop.permute.xlu0 %1318
        %1320 = vrot.lane.b32.xlu0 %v1283, 2
        %v1321 = vpop.permute.xlu0 %1320
        %1322 = vrot.lane.b32.xlu0 %v1287, 2
        %v1323 = vpop.permute.xlu0 %1322
        %1324 = vrot.lane.b32.xlu0 %v1291, 2
        %v1325 = vpop.permute.xlu0 %1324
        %1326 = vrot.lane.b32.xlu0 %v1295, 2
        %v1327 = vpop.permute.xlu0 %1326
        %vm1328 = vcmask 15360
        %v1329 = vsel %vm1328, %v1297, %v1299
        %v1330 = vsel %vm1328, %v1301, %v1303
        %v1331 = vsel %vm1328, %v1305, %v1307
        %v1332 = vsel %vm1328, %v1309, %v1311
        %v1333 = vsel %vm1328, %v1313, %v1315
        %v1334 = vsel %vm1328, %v1317, %v1319
        %v1335 = vsel %vm1328, %v1321, %v1323
        %v1336 = vsel %vm1328, %v1325, %v1327
        %1345 = vst.msk [vmem:[%s190 + $0x7] sm:$0x1] %vm948, %v1329
        %1346 = vst.msk [vmem:[%s190 + $0x17] sm:$0x1] %vm948, %v1330
        %1347 = vst.msk [vmem:[%s190 + $0x27] sm:$0x1] %vm948, %v1331
        %1348 = vst.msk [vmem:[%s190 + $0x37] sm:$0x1] %vm948, %v1332
        %1349 = vst.msk [vmem:[%s190 + $0x47] sm:$0x1] %vm948, %v1333
        %1350 = vst.msk [vmem:[%s190 + $0x57] sm:$0x1] %vm948, %v1334
        %1351 = vst.msk [vmem:[%s190 + $0x67] sm:$0x1] %vm948, %v1335
        %1352 = vst.msk [vmem:[%s190 + $0x77] sm:$0x1] %vm948, %v1336
        %v1353 = vcombine.high %v889, %v889
        %v1355 = vunpack.c.l.s4 1966171168
        %v1356 = vunpack.c.0.s8 %v1355
        %v1357 = vlaneseq
        %v1358 = vshrl.u32 %v1357, 7
        %v1359 = vsub.s32 %v1356, %v1358
        %v1360 = vrot.slane %v889, %v1359
        %v1362 = vunpack.c.l.s4 1966171168
        %v1363 = vunpack.c.0.s8 %v1362
        %v1364 = vlaneseq
        %v1365 = vshrl.u32 %v1364, 7
        %v1366 = vsub.s32 %v1363, %v1365
        %v1367 = vrot.slane %v1353, %v1366
        %v1368 = vcombine.high %v1360, %v1360
        %v1369 = vcombine.high %v1367, %v1367
        %v1371 = vunpack.c.l.s4 1966171168
        %v1372 = vunpack.c.0.s8 %v1371
        %v1373 = vlaneseq
        %v1374 = vshrl.u32 %v1373, 7
        %v1375 = vsub.s32 %v1372, %v1374
        %v1376 = vrot.slane %v1360, %v1375
        %v1378 = vunpack.c.l.s4 1966171168
        %v1379 = vunpack.c.0.s8 %v1378
        %v1380 = vlaneseq
        %v1381 = vshrl.u32 %v1380, 7
        %v1382 = vsub.s32 %v1379, %v1381
        %v1383 = vrot.slane %v1367, %v1382
        %v1385 = vunpack.c.l.s4 1966171168
        %v1386 = vunpack.c.0.s8 %v1385
        %v1387 = vlaneseq
        %v1388 = vshrl.u32 %v1387, 7
        %v1389 = vsub.s32 %v1386, %v1388
        %v1390 = vrot.slane %v1368, %v1389
        %v1392 = vunpack.c.l.s4 1966171168
        %v1393 = vunpack.c.0.s8 %v1392
        %v1394 = vlaneseq
        %v1395 = vshrl.u32 %v1394, 7
        %v1396 = vsub.s32 %v1393, %v1395
        %v1397 = vrot.slane %v1369, %v1396
        %v1398 = vcombine.high %v1376, %v1376
        %v1399 = vcombine.high %v1383, %v1383
        %v1400 = vcombine.high %v1390, %v1390
        %v1401 = vcombine.high %v1397, %v1397
        %v1402 = vlaneseq
        %v1403 = vshrl.u32 %v1402, 7
        %v1404 = vsub.s32 0, %v1403
        %v1405 = vrot.slane %v1376, %v1404
        %v1406 = vlaneseq
        %v1407 = vshrl.u32 %v1406, 7
        %v1408 = vsub.s32 0, %v1407
        %v1409 = vrot.slane %v1390, %v1408
        %v1410 = vlaneseq
        %v1411 = vshrl.u32 %v1410, 7
        %v1412 = vsub.s32 0, %v1411
        %v1413 = vrot.slane %v1398, %v1412
        %v1414 = vlaneseq
        %v1415 = vshrl.u32 %v1414, 7
        %v1416 = vsub.s32 0, %v1415
        %v1417 = vrot.slane %v1400, %v1416
        %v1418 = vlaneseq
        %v1419 = vshrl.u32 %v1418, 7
        %v1420 = vsub.s32 0, %v1419
        %v1421 = vrot.slane %v1383, %v1420
        %v1422 = vlaneseq
        %v1423 = vshrl.u32 %v1422, 7
        %v1424 = vsub.s32 0, %v1423
        %v1425 = vrot.slane %v1397, %v1424
        %v1426 = vlaneseq
        %v1427 = vshrl.u32 %v1426, 7
        %v1428 = vsub.s32 0, %v1427
        %v1429 = vrot.slane %v1399, %v1428
        %v1430 = vlaneseq
        %v1431 = vshrl.u32 %v1430, 7
        %v1432 = vsub.s32 0, %v1431
        %v1433 = vrot.slane %v1401, %v1432
        %1434 = vrot.lane.b32.xlu0 %v1405, 112
        %v1435 = vpop.permute.xlu0 %1434
        %1436 = vrot.lane.b32.xlu0 %v1409, 112
        %v1437 = vpop.permute.xlu0 %1436
        %1438 = vrot.lane.b32.xlu0 %v1413, 112
        %v1439 = vpop.permute.xlu0 %1438
        %1440 = vrot.lane.b32.xlu0 %v1417, 112
        %v1441 = vpop.permute.xlu0 %1440
        %1442 = vrot.lane.b32.xlu0 %v1421, 112
        %v1443 = vpop.permute.xlu0 %1442
        %1444 = vrot.lane.b32.xlu0 %v1425, 112
        %v1445 = vpop.permute.xlu0 %1444
        %1446 = vrot.lane.b32.xlu0 %v1429, 112
        %v1447 = vpop.permute.xlu0 %1446
        %1448 = vrot.lane.b32.xlu0 %v1433, 112
        %v1449 = vpop.permute.xlu0 %1448
        %1458 = vst.msk [vmem:[%s190 + $0x8] sm:$0x1] %vm948, %v1435
        %1459 = vst.msk [vmem:[%s190 + $0x18] sm:$0x1] %vm948, %v1437
        %1460 = vst.msk [vmem:[%s190 + $0x28] sm:$0x1] %vm948, %v1439
        %1461 = vst.msk [vmem:[%s190 + $0x38] sm:$0x1] %vm948, %v1441
        %1462 = vst.msk [vmem:[%s190 + $0x48] sm:$0x1] %vm948, %v1443
        %1463 = vst.msk [vmem:[%s190 + $0x58] sm:$0x1] %vm948, %v1445
        %1464 = vst.msk [vmem:[%s190 + $0x68] sm:$0x1] %vm948, %v1447
        %1465 = vst.msk [vmem:[%s190 + $0x78] sm:$0x1] %vm948, %v1449
        %1466 = vrot.lane.b32.xlu0 %v1405, 94
        %v1467 = vpop.permute.xlu0 %1466
        %1468 = vrot.lane.b32.xlu0 %v1409, 94
        %v1469 = vpop.permute.xlu0 %1468
        %1470 = vrot.lane.b32.xlu0 %v1413, 94
        %v1471 = vpop.permute.xlu0 %1470
        %1472 = vrot.lane.b32.xlu0 %v1417, 94
        %v1473 = vpop.permute.xlu0 %1472
        %1474 = vrot.lane.b32.xlu0 %v1421, 94
        %v1475 = vpop.permute.xlu0 %1474
        %1476 = vrot.lane.b32.xlu0 %v1425, 94
        %v1477 = vpop.permute.xlu0 %1476
        %1478 = vrot.lane.b32.xlu0 %v1429, 94
        %v1479 = vpop.permute.xlu0 %1478
        %1480 = vrot.lane.b32.xlu0 %v1433, 94
        %v1481 = vpop.permute.xlu0 %1480
        %1490 = vst.msk [vmem:[%s190 + $0x9] sm:$0x1] %vm948, %v1467
        %1491 = vst.msk [vmem:[%s190 + $0x19] sm:$0x1] %vm948, %v1469
        %1492 = vst.msk [vmem:[%s190 + $0x29] sm:$0x1] %vm948, %v1471
        %1493 = vst.msk [vmem:[%s190 + $0x39] sm:$0x1] %vm948, %v1473
        %1494 = vst.msk [vmem:[%s190 + $0x49] sm:$0x1] %vm948, %v1475
        %1495 = vst.msk [vmem:[%s190 + $0x59] sm:$0x1] %vm948, %v1477
        %1496 = vst.msk [vmem:[%s190 + $0x69] sm:$0x1] %vm948, %v1479
        %1497 = vst.msk [vmem:[%s190 + $0x79] sm:$0x1] %vm948, %v1481
        %1498 = vrot.lane.b32.xlu0 %v1405, 76
        %v1499 = vpop.permute.xlu0 %1498
        %1500 = vrot.lane.b32.xlu0 %v1409, 76
        %v1501 = vpop.permute.xlu0 %1500
        %1502 = vrot.lane.b32.xlu0 %v1413, 76
        %v1503 = vpop.permute.xlu0 %1502
        %1504 = vrot.lane.b32.xlu0 %v1417, 76
        %v1505 = vpop.permute.xlu0 %1504
        %1506 = vrot.lane.b32.xlu0 %v1421, 76
        %v1507 = vpop.permute.xlu0 %1506
        %1508 = vrot.lane.b32.xlu0 %v1425, 76
        %v1509 = vpop.permute.xlu0 %1508
        %1510 = vrot.lane.b32.xlu0 %v1429, 76
        %v1511 = vpop.permute.xlu0 %1510
        %1512 = vrot.lane.b32.xlu0 %v1433, 76
        %v1513 = vpop.permute.xlu0 %1512
        %1522 = vst.msk [vmem:[%s190 + $0xa] sm:$0x1] %vm948, %v1499
        %1523 = vst.msk [vmem:[%s190 + $0x1a] sm:$0x1] %vm948, %v1501
        %1524 = vst.msk [vmem:[%s190 + $0x2a] sm:$0x1] %vm948, %v1503
        %1525 = vst.msk [vmem:[%s190 + $0x3a] sm:$0x1] %vm948, %v1505
        %1526 = vst.msk [vmem:[%s190 + $0x4a] sm:$0x1] %vm948, %v1507
        %1527 = vst.msk [vmem:[%s190 + $0x5a] sm:$0x1] %vm948, %v1509
        %1528 = vst.msk [vmem:[%s190 + $0x6a] sm:$0x1] %vm948, %v1511
        %1529 = vst.msk [vmem:[%s190 + $0x7a] sm:$0x1] %vm948, %v1513
        %1530 = vrot.lane.b32.xlu0 %v1405, 58
        %v1531 = vpop.permute.xlu0 %1530
        %1532 = vrot.lane.b32.xlu0 %v1409, 58
        %v1533 = vpop.permute.xlu0 %1532
        %1534 = vrot.lane.b32.xlu0 %v1413, 58
        %v1535 = vpop.permute.xlu0 %1534
        %1536 = vrot.lane.b32.xlu0 %v1417, 58
        %v1537 = vpop.permute.xlu0 %1536
        %1538 = vrot.lane.b32.xlu0 %v1421, 58
        %v1539 = vpop.permute.xlu0 %1538
        %1540 = vrot.lane.b32.xlu0 %v1425, 58
        %v1541 = vpop.permute.xlu0 %1540
        %1542 = vrot.lane.b32.xlu0 %v1429, 58
        %v1543 = vpop.permute.xlu0 %1542
        %1544 = vrot.lane.b32.xlu0 %v1433, 58
        %v1545 = vpop.permute.xlu0 %1544
        %1554 = vst.msk [vmem:[%s190 + $0xb] sm:$0x1] %vm948, %v1531
        %1555 = vst.msk [vmem:[%s190 + $0x1b] sm:$0x1] %vm948, %v1533
        %1556 = vst.msk [vmem:[%s190 + $0x2b] sm:$0x1] %vm948, %v1535
        %1557 = vst.msk [vmem:[%s190 + $0x3b] sm:$0x1] %vm948, %v1537
        %1558 = vst.msk [vmem:[%s190 + $0x4b] sm:$0x1] %vm948, %v1539
        %1559 = vst.msk [vmem:[%s190 + $0x5b] sm:$0x1] %vm948, %v1541
        %1560 = vst.msk [vmem:[%s190 + $0x6b] sm:$0x1] %vm948, %v1543
        %1561 = vst.msk [vmem:[%s190 + $0x7b] sm:$0x1] %vm948, %v1545
        %1562 = vrot.lane.b32.xlu0 %v1405, 40
        %v1563 = vpop.permute.xlu0 %1562
        %1564 = vrot.lane.b32.xlu0 %v1409, 40
        %v1565 = vpop.permute.xlu0 %1564
        %1566 = vrot.lane.b32.xlu0 %v1413, 40
        %v1567 = vpop.permute.xlu0 %1566
        %1568 = vrot.lane.b32.xlu0 %v1417, 40
        %v1569 = vpop.permute.xlu0 %1568
        %1570 = vrot.lane.b32.xlu0 %v1421, 40
        %v1571 = vpop.permute.xlu0 %1570
        %1572 = vrot.lane.b32.xlu0 %v1425, 40
        %v1573 = vpop.permute.xlu0 %1572
        %1574 = vrot.lane.b32.xlu0 %v1429, 40
        %v1575 = vpop.permute.xlu0 %1574
        %1576 = vrot.lane.b32.xlu0 %v1433, 40
        %v1577 = vpop.permute.xlu0 %1576
        %1586 = vst.msk [vmem:[%s190 + $0xc] sm:$0x1] %vm948, %v1563
        %1587 = vst.msk [vmem:[%s190 + $0x1c] sm:$0x1] %vm948, %v1565
        %1588 = vst.msk [vmem:[%s190 + $0x2c] sm:$0x1] %vm948, %v1567
        %1589 = vst.msk [vmem:[%s190 + $0x3c] sm:$0x1] %vm948, %v1569
        %1590 = vst.msk [vmem:[%s190 + $0x4c] sm:$0x1] %vm948, %v1571
        %1591 = vst.msk [vmem:[%s190 + $0x5c] sm:$0x1] %vm948, %v1573
        %1592 = vst.msk [vmem:[%s190 + $0x6c] sm:$0x1] %vm948, %v1575
        %1593 = vst.msk [vmem:[%s190 + $0x7c] sm:$0x1] %vm948, %v1577
        %1594 = vrot.lane.b32.xlu0 %v1405, 22
        %v1595 = vpop.permute.xlu0 %1594
        %1596 = vrot.lane.b32.xlu0 %v1409, 22
        %v1597 = vpop.permute.xlu0 %1596
        %1598 = vrot.lane.b32.xlu0 %v1413, 22
        %v1599 = vpop.permute.xlu0 %1598
        %1600 = vrot.lane.b32.xlu0 %v1417, 22
        %v1601 = vpop.permute.xlu0 %1600
        %1602 = vrot.lane.b32.xlu0 %v1421, 22
        %v1603 = vpop.permute.xlu0 %1602
        %1604 = vrot.lane.b32.xlu0 %v1425, 22
        %v1605 = vpop.permute.xlu0 %1604
        %1606 = vrot.lane.b32.xlu0 %v1429, 22
        %v1607 = vpop.permute.xlu0 %1606
        %1608 = vrot.lane.b32.xlu0 %v1433, 22
        %v1609 = vpop.permute.xlu0 %1608
        %1618 = vst.msk [vmem:[%s190 + $0xd] sm:$0x1] %vm948, %v1595
        %1619 = vst.msk [vmem:[%s190 + $0x1d] sm:$0x1] %vm948, %v1597
        %1620 = vst.msk [vmem:[%s190 + $0x2d] sm:$0x1] %vm948, %v1599
        %1621 = vst.msk [vmem:[%s190 + $0x3d] sm:$0x1] %vm948, %v1601
        %1622 = vst.msk [vmem:[%s190 + $0x4d] sm:$0x1] %vm948, %v1603
        %1623 = vst.msk [vmem:[%s190 + $0x5d] sm:$0x1] %vm948, %v1605
        %1624 = vst.msk [vmem:[%s190 + $0x6d] sm:$0x1] %vm948, %v1607
        %1625 = vst.msk [vmem:[%s190 + $0x7d] sm:$0x1] %vm948, %v1609
        %v1626 = vld [vmem:[%s195 + $0x2] sm:$0xf]
        %v1627 = vld [vmem:[%s1] sm:$0xf]
        %v1628 = vld [vmem:[%s201] sm:$0xf]
        %v1631 = vunpack.c.l.s4 1983009808
        %v1632 = vunpack.c.0.s8 %v1631
        %v1633 = vlaneseq
        %v1634 = vshrl.u32 %v1633, 7
        %v1635 = vsub.s32 %v1632, %v1634
        %v1636 = vrot.slane %v1626, %v1635
        %v1637 = vcombine.high %v1636, %v1636
        %1638 = vrot.lane.b32.xlu0 %v1636, 3
        %v1639 = vpop.permute.xlu0 %1638
        %1640 = vrot.lane.b32.xlu0 %v1637, 3
        %v1641 = vpop.permute.xlu0 %1640
        %vm1642 = vcmask 23552
        %v1643 = vsel %vm1642, %v1639, %v1641
        %v1645 = vsel %vm218, %v1628, 0
        %v1648 = vsel %vm222, %v1643, 0
        %1650 = vmatprep.subr.bf16.mxu0 0
        %1651 = vmatpush1.bf16.msra.mxu0 %v1648
        %1652 = vmatprep.subr.bf16.mxu0 0
        %1653 = vmatpush1.bf16.msra.mxu0 0
        %1654 = vmatprep.subr.bf16.mxu0 0
        %1655 = vmatpush1.bf16.msra.mxu0 0
        %1656 = vmatprep.subr.bf16.mxu0 0
        %1657 = vmatpush1.bf16.msra.mxu0 0
        %1658 = vmatprep.subr.bf16.mxu0 0
        %1659 = vmatpush1.bf16.msra.mxu0 0
        %1660 = vmatprep.subr.bf16.mxu0 0
        %1661 = vmatpush1.bf16.msra.mxu0 0
        %1662 = vmatprep.subr.bf16.mxu0 0
        %1663 = vmatpush1.bf16.msra.mxu0 0
        %1664 = vmatprep.subr.bf16.mxu0 0
        %1665 = vmatpush1.bf16.msra.mxu0 0
        %1666 = vmatprep.subr.bf16.mxu0 0
        %1667 = vmatpush1.bf16.msra.mxu0 0
        %1668 = vmatprep.subr.bf16.mxu0 0
        %1669 = vmatpush1.bf16.msra.mxu0 0
        %1670 = vmatprep.subr.bf16.mxu0 0
        %1671 = vmatpush1.bf16.msra.mxu0 0
        %1672 = vmatprep.subr.bf16.mxu0 0
        %1673 = vmatpush1.bf16.msra.mxu0 0
        %1674 = vmatprep.subr.bf16.mxu0 0
        %1675 = vmatpush1.bf16.msra.mxu0 0
        %1676 = vmatprep.subr.bf16.mxu0 0
        %1677 = vmatpush1.bf16.msra.mxu0 0
        %1678 = vmatprep.subr.bf16.mxu0 0
        %1679 = vmatpush1.bf16.msra.mxu0 0
        %1680 = vmatprep.subr.bf16.mxu0 0
        %1681 = vmatpush1.bf16.msra.mxu0 0
        %1682 = vmatprep.mubr.bf16.mxu0 0
        %1683 = vmatmul.mubr.bf16.gmra.mrb[0].mxu0 %v1645
        %v1684 = vpop.f32.mrb[0].mxu0
        %v1685 = vadd.f32 0.0, %v1684
        %v1686 = vpop.f32.mrb[0].mxu0
        %v1687 = vpop.f32.mrb[0].mxu0
        %v1688 = vpop.f32.mrb[0].mxu0
        %1689 = vdwg.mxu0
        %1690 = vrot.lane.b32.xlu0 %v1636, 4
        %v1691 = vpop.permute.xlu0 %1690
        %1692 = vrot.lane.b32.xlu0 %v1637, 4
        %v1693 = vpop.permute.xlu0 %1692
        %vm1694 = vcmask 31744
        %v1695 = vsel %vm1694, %v1691, %v1693
        %v1697 = vsel %vm218, %v1627, 0
        %v1700 = vsel %vm222, %v1695, 0
        %1702 = vmatprep.subr.bf16.mxu0 0
        %1703 = vmatpush1.bf16.msra.mxu0 %v1700
        %1704 = vmatprep.subr.bf16.mxu0 0
        %1705 = vmatpush1.bf16.msra.mxu0 0
        %1706 = vmatprep.subr.bf16.mxu0 0
        %1707 = vmatpush1.bf16.msra.mxu0 0
        %1708 = vmatprep.subr.bf16.mxu0 0
        %1709 = vmatpush1.bf16.msra.mxu0 0
        %1710 = vmatprep.subr.bf16.mxu0 0
        %1711 = vmatpush1.bf16.msra.mxu0 0
        %1712 = vmatprep.subr.bf16.mxu0 0
        %1713 = vmatpush1.bf16.msra.mxu0 0
        %1714 = vmatprep.subr.bf16.mxu0 0
        %1715 = vmatpush1.bf16.msra.mxu0 0
        %1716 = vmatprep.subr.bf16.mxu0 0
        %1717 = vmatpush1.bf16.msra.mxu0 0
        %1718 = vmatprep.subr.bf16.mxu0 0
        %1719 = vmatpush1.bf16.msra.mxu0 0
        %1720 = vmatprep.subr.bf16.mxu0 0
        %1721 = vmatpush1.bf16.msra.mxu0 0
        %1722 = vmatprep.subr.bf16.mxu0 0
        %1723 = vmatpush1.bf16.msra.mxu0 0
        %1724 = vmatprep.subr.bf16.mxu0 0
        %1725 = vmatpush1.bf16.msra.mxu0 0
        %1726 = vmatprep.subr.bf16.mxu0 0
        %1727 = vmatpush1.bf16.msra.mxu0 0
        %1728 = vmatprep.subr.bf16.mxu0 0
        %1729 = vmatpush1.bf16.msra.mxu0 0
        %1730 = vmatprep.subr.bf16.mxu0 0
        %1731 = vmatpush1.bf16.msra.mxu0 0
        %1732 = vmatprep.subr.bf16.mxu0 0
        %1733 = vmatpush1.bf16.msra.mxu0 0
        %1734 = vmatprep.mubr.bf16.mxu0 0
        %1735 = vmatmul.mubr.bf16.gmra.mrb[0].mxu0 %v1697
        %v1736 = vpop.f32.mrb[0].mxu0
        %v1737 = vadd.f32 %v1685, %v1736
        %v1738 = vpop.f32.mrb[0].mxu0
        %v1739 = vpop.f32.mrb[0].mxu0
        %v1740 = vpop.f32.mrb[0].mxu0
        %1741 = vdwg.mxu0
        %v1742 = vld [vmem:[%s195 + $0x2] sm:$0xf]
        %v1743 = vld [vmem:[%s321] sm:$0xf]
        %v1746 = vunpack.c.l.s4 1983009808
        %v1747 = vunpack.c.0.s8 %v1746
        %v1748 = vlaneseq
        %v1749 = vshrl.u32 %v1748, 7
        %v1750 = vsub.s32 %v1747, %v1749
        %v1751 = vrot.slane %v1742, %v1750
        %v1752 = vcombine.high %v1751, %v1751
        %1753 = vrot.lane.b32.xlu0 %v1751, 2
        %v1754 = vpop.permute.xlu0 %1753
        %1755 = vrot.lane.b32.xlu0 %v1752, 2
        %v1756 = vpop.permute.xlu0 %1755
        %vm1757 = vcmask 15360
        %v1758 = vsel %vm1757, %v1754, %v1756
        %v1760 = vsel %vm218, %v1743, 0
        %v1763 = vsel %vm222, %v1758, 0
        %1765 = vmatprep.subr.bf16.mxu0 0
        %1766 = vmatpush1.bf16.msra.mxu0 %v1763
        %1767 = vmatprep.subr.bf16.mxu0 0
        %1768 = vmatpush1.bf16.msra.mxu0 0
        %1769 = vmatprep.subr.bf16.mxu0 0
        %1770 = vmatpush1.bf16.msra.mxu0 0
        %1771 = vmatprep.subr.bf16.mxu0 0
        %1772 = vmatpush1.bf16.msra.mxu0 0
        %1773 = vmatprep.subr.bf16.mxu0 0
        %1774 = vmatpush1.bf16.msra.mxu0 0
        %1775 = vmatprep.subr.bf16.mxu0 0
        %1776 = vmatpush1.bf16.msra.mxu0 0
        %1777 = vmatprep.subr.bf16.mxu0 0
        %1778 = vmatpush1.bf16.msra.mxu0 0
        %1779 = vmatprep.subr.bf16.mxu0 0
        %1780 = vmatpush1.bf16.msra.mxu0 0
        %1781 = vmatprep.subr.bf16.mxu0 0
        %1782 = vmatpush1.bf16.msra.mxu0 0
        %1783 = vmatprep.subr.bf16.mxu0 0
        %1784 = vmatpush1.bf16.msra.mxu0 0
        %1785 = vmatprep.subr.bf16.mxu0 0
        %1786 = vmatpush1.bf16.msra.mxu0 0
        %1787 = vmatprep.subr.bf16.mxu0 0
        %1788 = vmatpush1.bf16.msra.mxu0 0
        %1789 = vmatprep.subr.bf16.mxu0 0
        %1790 = vmatpush1.bf16.msra.mxu0 0
        %1791 = vmatprep.subr.bf16.mxu0 0
        %1792 = vmatpush1.bf16.msra.mxu0 0
        %1793 = vmatprep.subr.bf16.mxu0 0
        %1794 = vmatpush1.bf16.msra.mxu0 0
        %1795 = vmatprep.subr.bf16.mxu0 0
        %1796 = vmatpush1.bf16.msra.mxu0 0
        %1797 = vmatprep.mubr.bf16.mxu0 0
        %1798 = vmatmul.mubr.bf16.gmra.mrb[0].mxu0 %v1760
        %v1799 = vpop.f32.mrb[0].mxu0
        %v1800 = vadd.f32 0.0, %v1799
        %v1801 = vpop.f32.mrb[0].mxu0
        %v1802 = vpop.f32.mrb[0].mxu0
        %v1803 = vpop.f32.mrb[0].mxu0
        %1804 = vdwg.mxu0
        %v1805 = vadd.f32 %v1737, %v1800
        %v1806 = vld [vmem:[%s195 + $0x4] sm:$0x3]
        %v1807 = vld [vmem:[%s391] sm:$0xf]
        %v1810 = vunpack.c.l.s4 1983009808
        %v1811 = vunpack.c.0.s8 %v1810
        %v1812 = vlaneseq
        %v1813 = vshrl.u32 %v1812, 7
        %v1814 = vsub.s32 %v1811, %v1813
        %v1815 = vrot.slane %v1806, %v1814
        %1816 = vrot.lane.b32.xlu0 %v1815, 114
        %v1817 = vpop.permute.xlu0 %1816
        %v1819 = vsel %vm218, %v1807, 0
        %v1822 = vsel %vm222, %v1817, 0
        %1824 = vmatprep.subr.bf16.mxu0 0
        %1825 = vmatpush1.bf16.msra.mxu0 %v1822
        %1826 = vmatprep.subr.bf16.mxu0 0
        %1827 = vmatpush1.bf16.msra.mxu0 0
        %1828 = vmatprep.subr.bf16.mxu0 0
        %1829 = vmatpush1.bf16.msra.mxu0 0
        %1830 = vmatprep.subr.bf16.mxu0 0
        %1831 = vmatpush1.bf16.msra.mxu0 0
        %1832 = vmatprep.subr.bf16.mxu0 0
        %1833 = vmatpush1.bf16.msra.mxu0 0
        %1834 = vmatprep.subr.bf16.mxu0 0
        %1835 = vmatpush1.bf16.msra.mxu0 0
        %1836 = vmatprep.subr.bf16.mxu0 0
        %1837 = vmatpush1.bf16.msra.mxu0 0
        %1838 = vmatprep.subr.bf16.mxu0 0
        %1839 = vmatpush1.bf16.msra.mxu0 0
        %1840 = vmatprep.subr.bf16.mxu0 0
        %1841 = vmatpush1.bf16.msra.mxu0 0
        %1842 = vmatprep.subr.bf16.mxu0 0
        %1843 = vmatpush1.bf16.msra.mxu0 0
        %1844 = vmatprep.subr.bf16.mxu0 0
        %1845 = vmatpush1.bf16.msra.mxu0 0
        %1846 = vmatprep.subr.bf16.mxu0 0
        %1847 = vmatpush1.bf16.msra.mxu0 0
        %1848 = vmatprep.subr.bf16.mxu0 0
        %1849 = vmatpush1.bf16.msra.mxu0 0
        %1850 = vmatprep.subr.bf16.mxu0 0
        %1851 = vmatpush1.bf16.msra.mxu0 0
        %1852 = vmatprep.subr.bf16.mxu0 0
        %1853 = vmatpush1.bf16.msra.mxu0 0
        %1854 = vmatprep.subr.bf16.mxu0 0
        %1855 = vmatpush1.bf16.msra.mxu0 0
        %1856 = vmatprep.mubr.bf16.mxu0 0
        %1857 = vmatmul.mubr.bf16.gmra.mrb[0].mxu0 %v1819
        %v1858 = vpop.f32.mrb[0].mxu0
        %v1859 = vadd.f32 0.0, %v1858
        %v1860 = vpop.f32.mrb[0].mxu0
        %v1861 = vpop.f32.mrb[0].mxu0
        %v1862 = vpop.f32.mrb[0].mxu0
        %1863 = vdwg.mxu0
        %v1864 = vadd.f32 %v1805, %v1859
        %v1865 = vld [vmem:[%s195 + $0x4] sm:$0x3]
        %v1866 = vld [vmem:[%s472] sm:$0xf]
        %v1869 = vunpack.c.l.s4 1983009808
        %v1870 = vunpack.c.0.s8 %v1869
        %v1871 = vlaneseq
        %v1872 = vshrl.u32 %v1871, 7
        %v1873 = vsub.s32 %v1870, %v1872
        %v1874 = vrot.slane %v1865, %v1873
        %1875 = vrot.lane.b32.xlu0 %v1874, 113
        %v1876 = vpop.permute.xlu0 %1875
        %v1878 = vsel %vm218, %v1866, 0
        %v1881 = vsel %vm222, %v1876, 0
        %1883 = vmatprep.subr.bf16.mxu0 0
        %1884 = vmatpush1.bf16.msra.mxu0 %v1881
        %1885 = vmatprep.subr.bf16.mxu0 0
        %1886 = vmatpush1.bf16.msra.mxu0 0
        %1887 = vmatprep.subr.bf16.mxu0 0
        %1888 = vmatpush1.bf16.msra.mxu0 0
        %1889 = vmatprep.subr.bf16.mxu0 0
        %1890 = vmatpush1.bf16.msra.mxu0 0
        %1891 = vmatprep.subr.bf16.mxu0 0
        %1892 = vmatpush1.bf16.msra.mxu0 0
        %1893 = vmatprep.subr.bf16.mxu0 0
        %1894 = vmatpush1.bf16.msra.mxu0 0
        %1895 = vmatprep.subr.bf16.mxu0 0
        %1896 = vmatpush1.bf16.msra.mxu0 0
        %1897 = vmatprep.subr.bf16.mxu0 0
        %1898 = vmatpush1.bf16.msra.mxu0 0
        %1899 = vmatprep.subr.bf16.mxu0 0
        %1900 = vmatpush1.bf16.msra.mxu0 0
        %1901 = vmatprep.subr.bf16.mxu0 0
        %1902 = vmatpush1.bf16.msra.mxu0 0
        %1903 = vmatprep.subr.bf16.mxu0 0
        %1904 = vmatpush1.bf16.msra.mxu0 0
        %1905 = vmatprep.subr.bf16.mxu0 0
        %1906 = vmatpush1.bf16.msra.mxu0 0
        %1907 = vmatprep.subr.bf16.mxu0 0
        %1908 = vmatpush1.bf16.msra.mxu0 0
        %1909 = vmatprep.subr.bf16.mxu0 0
        %1910 = vmatpush1.bf16.msra.mxu0 0
        %1911 = vmatprep.subr.bf16.mxu0 0
        %1912 = vmatpush1.bf16.msra.mxu0 0
        %1913 = vmatprep.subr.bf16.mxu0 0
        %1914 = vmatpush1.bf16.msra.mxu0 0
        %1915 = vmatprep.mubr.bf16.mxu0 0
        %1916 = vmatmul.mubr.bf16.gmra.mrb[0].mxu0 %v1878
        %v1917 = vpop.f32.mrb[0].mxu0
        %v1918 = vadd.f32 0.0, %v1917
        %v1919 = vpop.f32.mrb[0].mxu0
        %v1920 = vpop.f32.mrb[0].mxu0
        %v1921 = vpop.f32.mrb[0].mxu0
        %1922 = vdwg.mxu0
        %v1923 = vadd.f32 %v1864, %v1918
        %v1924 = vld [vmem:[%s195 + $0x4] sm:$0x3]
        %v1925 = vld [vmem:[%s553] sm:$0xf]
        %v1928 = vunpack.c.l.s4 1983009808
        %v1929 = vunpack.c.0.s8 %v1928
        %v1930 = vlaneseq
        %v1931 = vshrl.u32 %v1930, 7
        %v1932 = vsub.s32 %v1929, %v1931
        %v1933 = vrot.slane %v1924, %v1932
        %1934 = vrot.lane.b32.xlu0 %v1933, 112
        %v1935 = vpop.permute.xlu0 %1934
        %v1937 = vsel %vm218, %v1925, 0
        %v1940 = vsel %vm222, %v1935, 0
        %1942 = vmatprep.subr.bf16.mxu0 0
        %1943 = vmatpush1.bf16.msra.mxu0 %v1940
        %1944 = vmatprep.subr.bf16.mxu0 0
        %1945 = vmatpush1.bf16.msra.mxu0 0
        %1946 = vmatprep.subr.bf16.mxu0 0
        %1947 = vmatpush1.bf16.msra.mxu0 0
        %1948 = vmatprep.subr.bf16.mxu0 0
        %1949 = vmatpush1.bf16.msra.mxu0 0
        %1950 = vmatprep.subr.bf16.mxu0 0
        %1951 = vmatpush1.bf16.msra.mxu0 0
        %1952 = vmatprep.subr.bf16.mxu0 0
        %1953 = vmatpush1.bf16.msra.mxu0 0
        %1954 = vmatprep.subr.bf16.mxu0 0
        %1955 = vmatpush1.bf16.msra.mxu0 0
        %1956 = vmatprep.subr.bf16.mxu0 0
        %1957 = vmatpush1.bf16.msra.mxu0 0
        %1958 = vmatprep.subr.bf16.mxu0 0
        %1959 = vmatpush1.bf16.msra.mxu0 0
        %1960 = vmatprep.subr.bf16.mxu0 0
        %1961 = vmatpush1.bf16.msra.mxu0 0
        %1962 = vmatprep.subr.bf16.mxu0 0
        %1963 = vmatpush1.bf16.msra.mxu0 0
        %1964 = vmatprep.subr.bf16.mxu0 0
        %1965 = vmatpush1.bf16.msra.mxu0 0
        %1966 = vmatprep.subr.bf16.mxu0 0
        %1967 = vmatpush1.bf16.msra.mxu0 0
        %1968 = vmatprep.subr.bf16.mxu0 0
        %1969 = vmatpush1.bf16.msra.mxu0 0
        %1970 = vmatprep.subr.bf16.mxu0 0
        %1971 = vmatpush1.bf16.msra.mxu0 0
        %1972 = vmatprep.subr.bf16.mxu0 0
        %1973 = vmatpush1.bf16.msra.mxu0 0
        %1974 = vmatprep.mubr.bf16.mxu0 0
        %1975 = vmatmul.mubr.bf16.gmra.mrb[0].mxu0 %v1937
        %v1976 = vpop.f32.mrb[0].mxu0
        %v1977 = vadd.f32 0.0, %v1976
        %v1978 = vpop.f32.mrb[0].mxu0
        %v1979 = vpop.f32.mrb[0].mxu0
        %v1980 = vpop.f32.mrb[0].mxu0
        %1981 = vdwg.mxu0
        %v1982 = vadd.f32 %v1923, %v1977
        %v1983 = vld [vmem:[%s195 + $0x4] sm:$0x3]
        %v1984 = vld [vmem:[%s634] sm:$0xf]
        %v1987 = vunpack.c.l.s4 1983009808
        %v1988 = vunpack.c.0.s8 %v1987
        %v1989 = vlaneseq
        %v1990 = vshrl.u32 %v1989, 7
        %v1991 = vsub.s32 %v1988, %v1990
        %v1992 = vrot.slane %v1983, %v1991
        %1993 = vrot.lane.b32.xlu0 %v1992, 96
        %v1994 = vpop.permute.xlu0 %1993
        %v1996 = vsel %vm218, %v1984, 0
        %v1999 = vsel %vm222, %v1994, 0
        %2001 = vmatprep.subr.bf16.mxu0 0
        %2002 = vmatpush1.bf16.msra.mxu0 %v1999
        %2003 = vmatprep.subr.bf16.mxu0 0
        %2004 = vmatpush1.bf16.msra.mxu0 0
        %2005 = vmatprep.subr.bf16.mxu0 0
        %2006 = vmatpush1.bf16.msra.mxu0 0
        %2007 = vmatprep.subr.bf16.mxu0 0
        %2008 = vmatpush1.bf16.msra.mxu0 0
        %2009 = vmatprep.subr.bf16.mxu0 0
        %2010 = vmatpush1.bf16.msra.mxu0 0
        %2011 = vmatprep.subr.bf16.mxu0 0
        %2012 = vmatpush1.bf16.msra.mxu0 0
        %2013 = vmatprep.subr.bf16.mxu0 0
        %2014 = vmatpush1.bf16.msra.mxu0 0
        %2015 = vmatprep.subr.bf16.mxu0 0
        %2016 = vmatpush1.bf16.msra.mxu0 0
        %2017 = vmatprep.subr.bf16.mxu0 0
        %2018 = vmatpush1.bf16.msra.mxu0 0
        %2019 = vmatprep.subr.bf16.mxu0 0
        %2020 = vmatpush1.bf16.msra.mxu0 0
        %2021 = vmatprep.subr.bf16.mxu0 0
        %2022 = vmatpush1.bf16.msra.mxu0 0
        %2023 = vmatprep.subr.bf16.mxu0 0
        %2024 = vmatpush1.bf16.msra.mxu0 0
        %2025 = vmatprep.subr.bf16.mxu0 0
        %2026 = vmatpush1.bf16.msra.mxu0 0
        %2027 = vmatprep.subr.bf16.mxu0 0
        %2028 = vmatpush1.bf16.msra.mxu0 0
        %2029 = vmatprep.subr.bf16.mxu0 0
        %2030 = vmatpush1.bf16.msra.mxu0 0
        %2031 = vmatprep.subr.bf16.mxu0 0
        %2032 = vmatpush1.bf16.msra.mxu0 0
        %2033 = vmatprep.mubr.bf16.mxu0 0
        %2034 = vmatmul.mubr.bf16.gmra.mrb[0].mxu0 %v1996
        %v2035 = vpop.f32.mrb[0].mxu0
        %v2036 = vadd.f32 0.0, %v2035
        %v2037 = vpop.f32.mrb[0].mxu0
        %v2038 = vpop.f32.mrb[0].mxu0
        %v2039 = vpop.f32.mrb[0].mxu0
        %2040 = vdwg.mxu0
        %v2041 = vadd.f32 %v1982, %v2036
        %v2042 = vld [vmem:[%s195 + $0x4] sm:$0x3]
        %v2043 = vld [vmem:[%s715] sm:$0xf]
        %v2046 = vunpack.c.l.s4 1983009808
        %v2047 = vunpack.c.0.s8 %v2046
        %v2048 = vlaneseq
        %v2049 = vshrl.u32 %v2048, 7
        %v2050 = vsub.s32 %v2047, %v2049
        %v2051 = vrot.slane %v2042, %v2050
        %2052 = vrot.lane.b32.xlu0 %v2051, 95
        %v2053 = vpop.permute.xlu0 %2052
        %v2055 = vsel %vm218, %v2043, 0
        %v2058 = vsel %vm222, %v2053, 0
        %2060 = vmatprep.subr.bf16.mxu0 0
        %2061 = vmatpush1.bf16.msra.mxu0 %v2058
        %2062 = vmatprep.subr.bf16.mxu0 0
        %2063 = vmatpush1.bf16.msra.mxu0 0
        %2064 = vmatprep.subr.bf16.mxu0 0
        %2065 = vmatpush1.bf16.msra.mxu0 0
        %2066 = vmatprep.subr.bf16.mxu0 0
        %2067 = vmatpush1.bf16.msra.mxu0 0
        %2068 = vmatprep.subr.bf16.mxu0 0
        %2069 = vmatpush1.bf16.msra.mxu0 0
        %2070 = vmatprep.subr.bf16.mxu0 0
        %2071 = vmatpush1.bf16.msra.mxu0 0
        %2072 = vmatprep.subr.bf16.mxu0 0
        %2073 = vmatpush1.bf16.msra.mxu0 0
        %2074 = vmatprep.subr.bf16.mxu0 0
        %2075 = vmatpush1.bf16.msra.mxu0 0
        %2076 = vmatprep.subr.bf16.mxu0 0
        %2077 = vmatpush1.bf16.msra.mxu0 0
        %2078 = vmatprep.subr.bf16.mxu0 0
        %2079 = vmatpush1.bf16.msra.mxu0 0
        %2080 = vmatprep.subr.bf16.mxu0 0
        %2081 = vmatpush1.bf16.msra.mxu0 0
        %2082 = vmatprep.subr.bf16.mxu0 0
        %2083 = vmatpush1.bf16.msra.mxu0 0
        %2084 = vmatprep.subr.bf16.mxu0 0
        %2085 = vmatpush1.bf16.msra.mxu0 0
        %2086 = vmatprep.subr.bf16.mxu0 0
        %2087 = vmatpush1.bf16.msra.mxu0 0
        %2088 = vmatprep.subr.bf16.mxu0 0
        %2089 = vmatpush1.bf16.msra.mxu0 0
        %2090 = vmatprep.subr.bf16.mxu0 0
        %2091 = vmatpush1.bf16.msra.mxu0 0
        %2092 = vmatprep.mubr.bf16.mxu0 0
        %2093 = vmatmul.mubr.bf16.gmra.mrb[0].mxu0 %v2055
        %v2094 = vpop.f32.mrb[0].mxu0
        %v2095 = vadd.f32 0.0, %v2094
        %v2096 = vpop.f32.mrb[0].mxu0
        %v2097 = vpop.f32.mrb[0].mxu0
        %v2098 = vpop.f32.mrb[0].mxu0
        %2099 = vdwg.mxu0
        %v2100 = vadd.f32 %v2041, %v2095
        %v2101 = vld [vmem:[%s195 + $0x4] sm:$0x3]
        %v2102 = vld [vmem:[%s796] sm:$0xf]
        %v2105 = vunpack.c.l.s4 1983009808
        %v2106 = vunpack.c.0.s8 %v2105
        %v2107 = vlaneseq
        %v2108 = vshrl.u32 %v2107, 7
        %v2109 = vsub.s32 %v2106, %v2108
        %v2110 = vrot.slane %v2101, %v2109
        %2111 = vrot.lane.b32.xlu0 %v2110, 94
        %v2112 = vpop.permute.xlu0 %2111
        %v2114 = vsel %vm218, %v2102, 0
        %v2117 = vsel %vm222, %v2112, 0
        %2119 = vmatprep.subr.bf16.mxu0 0
        %2120 = vmatpush1.bf16.msra.mxu0 %v2117
        %2121 = vmatprep.subr.bf16.mxu0 0
        %2122 = vmatpush1.bf16.msra.mxu0 0
        %2123 = vmatprep.subr.bf16.mxu0 0
        %2124 = vmatpush1.bf16.msra.mxu0 0
        %2125 = vmatprep.subr.bf16.mxu0 0
        %2126 = vmatpush1.bf16.msra.mxu0 0
        %2127 = vmatprep.subr.bf16.mxu0 0
        %2128 = vmatpush1.bf16.msra.mxu0 0
        %2129 = vmatprep.subr.bf16.mxu0 0
        %2130 = vmatpush1.bf16.msra.mxu0 0
        %2131 = vmatprep.subr.bf16.mxu0 0
        %2132 = vmatpush1.bf16.msra.mxu0 0
        %2133 = vmatprep.subr.bf16.mxu0 0
        %2134 = vmatpush1.bf16.msra.mxu0 0
        %2135 = vmatprep.subr.bf16.mxu0 0
        %2136 = vmatpush1.bf16.msra.mxu0 0
        %2137 = vmatprep.subr.bf16.mxu0 0
        %2138 = vmatpush1.bf16.msra.mxu0 0
        %2139 = vmatprep.subr.bf16.mxu0 0
        %2140 = vmatpush1.bf16.msra.mxu0 0
        %2141 = vmatprep.subr.bf16.mxu0 0
        %2142 = vmatpush1.bf16.msra.mxu0 0
        %2143 = vmatprep.subr.bf16.mxu0 0
        %2144 = vmatpush1.bf16.msra.mxu0 0
        %2145 = vmatprep.subr.bf16.mxu0 0
        %2146 = vmatpush1.bf16.msra.mxu0 0
        %2147 = vmatprep.subr.bf16.mxu0 0
        %2148 = vmatpush1.bf16.msra.mxu0 0
        %2149 = vmatprep.subr.bf16.mxu0 0
        %2150 = vmatpush1.bf16.msra.mxu0 0
        %2151 = vmatprep.mubr.bf16.mxu0 0
        %2152 = vmatmul.mubr.bf16.gmra.mrb[0].mxu0 %v2114
        %v2153 = vpop.f32.mrb[0].mxu0
        %v2154 = vadd.f32 0.0, %v2153
        %v2155 = vpop.f32.mrb[0].mxu0
        %v2156 = vpop.f32.mrb[0].mxu0
        %v2157 = vpop.f32.mrb[0].mxu0
        %2158 = vdwg.mxu0
        %v2159 = vadd.f32 %v2100, %v2154
        %v2160 = vmul.f32 %v2159, %v879
        %v2161 = vadd.f32 %v2160, %v886
        %v2163 = vcombine.high %v2161, %v2161
        %v2165 = vunpack.c.l.s4 1966171168
        %v2166 = vunpack.c.0.s8 %v2165
        %v2167 = vlaneseq
        %v2168 = vshrl.u32 %v2167, 7
        %v2169 = vsub.s32 %v2166, %v2168
        %v2170 = vrot.slane %v2161, %v2169
        %v2172 = vunpack.c.l.s4 1966171168
        %v2173 = vunpack.c.0.s8 %v2172
        %v2174 = vlaneseq
        %v2175 = vshrl.u32 %v2174, 7
        %v2176 = vsub.s32 %v2173, %v2175
        %v2177 = vrot.slane %v2163, %v2176
        %v2178 = vcombine.high %v2170, %v2170
        %v2179 = vcombine.high %v2177, %v2177
        %v2181 = vunpack.c.l.s4 1966171168
        %v2182 = vunpack.c.0.s8 %v2181
        %v2183 = vlaneseq
        %v2184 = vshrl.u32 %v2183, 7
        %v2185 = vsub.s32 %v2182, %v2184
        %v2186 = vrot.slane %v2170, %v2185
        %v2188 = vunpack.c.l.s4 1966171168
        %v2189 = vunpack.c.0.s8 %v2188
        %v2190 = vlaneseq
        %v2191 = vshrl.u32 %v2190, 7
        %v2192 = vsub.s32 %v2189, %v2191
        %v2193 = vrot.slane %v2177, %v2192
        %v2195 = vunpack.c.l.s4 1966171168
        %v2196 = vunpack.c.0.s8 %v2195
        %v2197 = vlaneseq
        %v2198 = vshrl.u32 %v2197, 7
        %v2199 = vsub.s32 %v2196, %v2198
        %v2200 = vrot.slane %v2178, %v2199
        %v2202 = vunpack.c.l.s4 1966171168
        %v2203 = vunpack.c.0.s8 %v2202
        %v2204 = vlaneseq
        %v2205 = vshrl.u32 %v2204, 7
        %v2206 = vsub.s32 %v2203, %v2205
        %v2207 = vrot.slane %v2179, %v2206
        %v2208 = vcombine.high %v2186, %v2186
        %v2209 = vcombine.high %v2193, %v2193
        %v2210 = vcombine.high %v2200, %v2200
        %v2211 = vcombine.high %v2207, %v2207
        %2220 = vst.msk [vmem:[%s190 + $0xe] sm:$0x1] %vm948, %v2186
        %2221 = vst.msk [vmem:[%s190 + $0x1e] sm:$0x1] %vm948, %v2200
        %2222 = vst.msk [vmem:[%s190 + $0x2e] sm:$0x1] %vm948, %v2208
        %2223 = vst.msk [vmem:[%s190 + $0x3e] sm:$0x1] %vm948, %v2210
        %2224 = vst.msk [vmem:[%s190 + $0x4e] sm:$0x1] %vm948, %v2193
        %2225 = vst.msk [vmem:[%s190 + $0x5e] sm:$0x1] %vm948, %v2207
        %2226 = vst.msk [vmem:[%s190 + $0x6e] sm:$0x1] %vm948, %v2209
        %2227 = vst.msk [vmem:[%s190 + $0x7e] sm:$0x1] %vm948, %v2211
        %v2228 = vlaneseq
        %v2229 = vshrl.u32 %v2228, 7
        %v2230 = vsub.s32 0, %v2229
        %v2231 = vrot.slane %v2186, %v2230
        %v2232 = vlaneseq
        %v2233 = vshrl.u32 %v2232, 7
        %v2234 = vsub.s32 0, %v2233
        %v2235 = vrot.slane %v2200, %v2234
        %v2236 = vlaneseq
        %v2237 = vshrl.u32 %v2236, 7
        %v2238 = vsub.s32 0, %v2237
        %v2239 = vrot.slane %v2208, %v2238
        %v2240 = vlaneseq
        %v2241 = vshrl.u32 %v2240, 7
        %v2242 = vsub.s32 0, %v2241
        %v2243 = vrot.slane %v2210, %v2242
        %v2244 = vlaneseq
        %v2245 = vshrl.u32 %v2244, 7
        %v2246 = vsub.s32 0, %v2245
        %v2247 = vrot.slane %v2193, %v2246
        %v2248 = vlaneseq
        %v2249 = vshrl.u32 %v2248, 7
        %v2250 = vsub.s32 0, %v2249
        %v2251 = vrot.slane %v2207, %v2250
        %v2252 = vlaneseq
        %v2253 = vshrl.u32 %v2252, 7
        %v2254 = vsub.s32 0, %v2253
        %v2255 = vrot.slane %v2209, %v2254
        %v2256 = vlaneseq
        %v2257 = vshrl.u32 %v2256, 7
        %v2258 = vsub.s32 0, %v2257
        %v2259 = vrot.slane %v2211, %v2258
        %2260 = vrot.lane.b32.xlu0 %v2231, 110
        %v2261 = vpop.permute.xlu0 %2260
        %2262 = vrot.lane.b32.xlu0 %v2235, 110
        %v2263 = vpop.permute.xlu0 %2262
        %2264 = vrot.lane.b32.xlu0 %v2239, 110
        %v2265 = vpop.permute.xlu0 %2264
        %2266 = vrot.lane.b32.xlu0 %v2243, 110
        %v2267 = vpop.permute.xlu0 %2266
        %2268 = vrot.lane.b32.xlu0 %v2247, 110
        %v2269 = vpop.permute.xlu0 %2268
        %2270 = vrot.lane.b32.xlu0 %v2251, 110
        %v2271 = vpop.permute.xlu0 %2270
        %2272 = vrot.lane.b32.xlu0 %v2255, 110
        %v2273 = vpop.permute.xlu0 %2272
        %2274 = vrot.lane.b32.xlu0 %v2259, 110
        %v2275 = vpop.permute.xlu0 %2274
        %2284 = vst.msk [vmem:[%s190 + $0xf] sm:$0x1] %vm948, %v2261
        %2285 = vst.msk [vmem:[%s190 + $0x1f] sm:$0x1] %vm948, %v2263
        %2286 = vst.msk [vmem:[%s190 + $0x2f] sm:$0x1] %vm948, %v2265
        %2287 = vst.msk [vmem:[%s190 + $0x3f] sm:$0x1] %vm948, %v2267
        %2288 = vst.msk [vmem:[%s190 + $0x4f] sm:$0x1] %vm948, %v2269
        %2289 = vst.msk [vmem:[%s190 + $0x5f] sm:$0x1] %vm948, %v2271
        %2290 = vst.msk [vmem:[%s190 + $0x6f] sm:$0x1] %vm948, %v2273
        %2291 = vst.msk [vmem:[%s190 + $0x7f] sm:$0x1] %vm948, %v2275
        %s2292 = sand.u32 %s115, 1
        %s2293 = scalar_lea.sflag [#allocation3], %s2292
        %s2294 = sand.u32 %s115, 1
        %s2295 = smul.addr %s2294, 128
        %s2296 = scalar_lea.vmem [#allocation2], %s2295
        // Predicated region
        $region37: #{conv2d_batchnorm.3} parent=35 // pred_check
          %p2297 = pneg %p125
        $region38: #{conv2d_batchnorm.3} parent=35 // pred_check_branch
          %2299 = sbr.rel (%p2297) target = $region40
        $region39: #{conv2d_batchnorm.3} parent=35 // pred_region
          %s2301 = ssub.s32 2048, 2048
          %2302 = vsyncadd %s2293, %s2301
          %s2303 = smul.addr %s18, 16
          %s2304 = smul.addr %s2303, 128
          %s2305 = scalar_lea.hbm %s4, %s2304
          %s2306 = sshll.u32 %s2296, 4
          %s2307 = int_to_ptr.vmem [resolvable:$true] %s2306
          %2312 = dma.vmem_to_hbm [thread:$0]  %s2307, 2048, %s2305, %s2293, 128, 128, 8
        $region40: #{conv2d_batchnorm.3} parent=35 // pred_fallthru
          _
      $region36: #{conv2d_batchnorm.3} parent=5 // pred_fallthru
        _
      %p2313 = scmp.le.s32.totalorder 2, %s13
      // Predicated region
      $region41: #{conv2d_batchnorm.3} parent=5 // pred_check
        %p2314 = pneg %p2313
      $region42: #{conv2d_batchnorm.3} parent=5 // pred_check_branch
        %2316 = sbr.rel (%p2314) target = $region44
      $region43: #{conv2d_batchnorm.3} parent=5 // pred_region
        %s2317 = ssub.s32 %s13, 2
        // Predicated region
        $region45: #{conv2d_batchnorm.3} parent=43 // pred_check
          %p2318 = pneg %p131
        $region46: #{conv2d_batchnorm.3} parent=43 // pred_check_branch
          %2320 = sbr.rel (%p2318) target = $region48
        $region47: #{conv2d_batchnorm.3} parent=43 // pred_region
          %s2321 = sand.u32 %s116, 1
          %s2322 = scalar_lea.sflag [#allocation3], %s2321
          %s2323 = sand.u32 %s116, 1
          %s2324 = smul.addr %s2323, 128
          %s2325 = scalar_lea.vmem [#allocation2], %s2324
          %2326 = dma.done %s2322, 2048
        $region48: #{conv2d_batchnorm.3} parent=43 // pred_fallthru
          _
      $region44: #{conv2d_batchnorm.3} parent=5 // pred_fallthru
        _
    $region6: #{conv2d_batchnorm.3} parent=1 // loop_footer
      %s17 = sadd.s32 1, %s13
    $region7: #{conv2d_batchnorm.3} parent=1 // loop_footer_branch
      %12 = sbr.rel target = $region3
    $region8: #{conv2d_batchnorm.3} parent=1 // loop_exit
      _
    %2327 = vsyncpa [#allocation3], 1
    %s2328 = scalar_lea.sflag [#allocation3], 1
    %2329 = vsyncpa %s2328, 1

</llo_original>
